<compile_context>
chip_gen: v7x
topology: tpu7x:2x2x1
jax: 0.10.0
libtpu: 0.0.40
codegen_flags: <defaults>
</compile_context>

<pallas_src>
import math
import functools

import jax
import jax.numpy as jnp
from jax import lax
from jax.experimental import pallas as pl
from jax.experimental.pallas import tpu as pltpu

F32 = jnp.float32
BF16 = jnp.bfloat16
_NEG = -1e30  # large finite negative (safer than -inf if masking is extended)


# ----------------------------- in-kernel helpers -----------------------------

def _erf(x):
    # Abramowitz & Stegun 7.1.26 polynomial erf, |err| <= 1.5e-7 (exp is on the EUP).
    a1, a2, a3, a4, a5 = 0.254829592, -0.284496736, 1.421413741, -1.453152027, 1.061405429
    p = 0.3275911
    sgn = jnp.where(x >= 0.0, 1.0, -1.0)
    ax = jnp.abs(x)
    t = 1.0 / (1.0 + p * ax)
    poly = ((((a5 * t + a4) * t + a3) * t + a2) * t + a1) * t
    return sgn * (1.0 - poly * jnp.exp(-ax * ax))


def _gelu(x):
    # exact (erf-based) GeLU, matching F.gelu default
    return 0.5 * x * (1.0 + _erf(x * 0.7071067811865476))


def _layernorm(z, g, b):
    mu = jnp.mean(z, axis=-1, keepdims=True)
    var = jnp.mean((z - mu) ** 2, axis=-1, keepdims=True)
    return (z - mu) * lax.rsqrt(var + 1e-5) * g + b


# ----------------------------- Pallas kernels -----------------------------

def _embed_kernel(x_ref, wm_ref, wc_ref, wp_ref, pe_ref, o_ref):
    # TokenEmbedding Conv1d(k=3, circular, no bias) as 3 tap-matmuls + PE epilogue.
    xf = x_ref[0]                                        # (L, C) f32
    L = xf.shape[0]
    xm1 = jnp.concatenate([xf[L - 1:], xf[:L - 1]], axis=0)   # x[t-1] (circular)
    xp1 = jnp.concatenate([xf[1:], xf[:1]], axis=0)           # x[t+1] (circular)
    out = (jnp.dot(xm1.astype(BF16), wm_ref[...], preferred_element_type=F32)
           + jnp.dot(xf.astype(BF16), wc_ref[...], preferred_element_type=F32)
           + jnp.dot(xp1.astype(BF16), wp_ref[...], preferred_element_type=F32)
           + pe_ref[...])
    o_ref[0] = out.astype(o_ref.dtype)


def _attn_block_kernel(xq_ref, xkv_ref, wq_ref, bq_ref, wkv_ref, bkv_ref,
                       wo_ref, bo_ref, g_ref, b_ref, o_ref,
                       *, n_heads, causal, scale):
    # LayerNorm(x_q + OutProj(MHA(Q(x_q), K(x_kv), V(x_kv))))   — one kernel per batch.
    D = wq_ref.shape[0]
    Dh = D // n_heads
    xq = xq_ref[0]                                       # (Lq, D) bf16
    xkv = xkv_ref[0]                                     # (Lk, D) bf16
    lq, lk = xq.shape[0], xkv.shape[0]

    q = (jnp.dot(xq, wq_ref[...], preferred_element_type=F32) + bq_ref[...]).astype(BF16)
    kv = (jnp.dot(xkv, wkv_ref[...], preferred_element_type=F32) + bkv_ref[...]).astype(BF16)

    if causal:
        row = lax.broadcasted_iota(jnp.int32, (lq, lk), 0)
        col = lax.broadcasted_iota(jnp.int32, (lq, lk), 1)
        cmask = col > row

    heads = []
    for h in range(n_heads):                             # static unroll; H small
        qh = q[:, h * Dh:(h + 1) * Dh]
        kh = kv[:, h * Dh:(h + 1) * Dh]
        vh = kv[:, D + h * Dh:D + (h + 1) * Dh]
        s = lax.dot_general(qh, kh, (((1,), (1,)), ((), ())),
                            preferred_element_type=F32) * scale     # (Lq, Lk)
        if causal:
            s = jnp.where(cmask, _NEG, s)
        m = jnp.max(s, axis=-1, keepdims=True)
        p = jnp.exp(s - m)
        inv = pl.reciprocal(jnp.sum(p, axis=-1, keepdims=True), approx=True)
        heads.append(jnp.dot(p.astype(BF16), vh, preferred_element_type=F32) * inv)

    attn = jnp.concatenate(heads, axis=-1).astype(BF16)  # (Lq, D) lane-dense
    proj = jnp.dot(attn, wo_ref[...], preferred_element_type=F32) + bo_ref[...]
    z = xq.astype(F32) + proj                            # residual in f32
    o_ref[0] = _layernorm(z, g_ref[...], b_ref[...]).astype(o_ref.dtype)


def _ffn_ln_kernel(x_ref, w1_ref, w2_ref, g_ref, b_ref, o_ref):
    # LayerNorm(x + conv2(GeLU(conv1(x))))    (k=1 convs == matmuls, no bias)
    x = x_ref[...]                                       # (TM, D) bf16
    h = jnp.dot(x, w1_ref[...], preferred_element_type=F32)
    h = _gelu(h).astype(BF16)
    y = jnp.dot(h, w2_ref[...], preferred_element_type=F32)
    z = x.astype(F32) + y
    o_ref[...] = _layernorm(z, g_ref[...], b_ref[...]).astype(o_ref.dtype)


def _layernorm_kernel(x_ref, g_ref, b_ref, o_ref):
    z = x_ref[...].astype(F32)
    o_ref[...] = _layernorm(z, g_ref[...], b_ref[...]).astype(o_ref.dtype)


# ----------------------------- kernel wrappers -----------------------------

def _row_tile(m):
    return m if m <= 256 else 256


def embed(x, wm, wc, wp, pe):
    B, L, C = x.shape
    D = wm.shape[1]
    return pl.pallas_call(
        _embed_kernel,
        out_shape=jax.ShapeDtypeStruct((B, L, D), BF16),
        grid=(B,),
        in_specs=[
            pl.BlockSpec((1, L, C), lambda b: (b, 0, 0)),
            pl.BlockSpec((C, D), lambda b: (0, 0)),
            pl.BlockSpec((C, D), lambda b: (0, 0)),
            pl.BlockSpec((C, D), lambda b: (0, 0)),
            pl.BlockSpec((L, D), lambda b: (0, 0)),
        ],
        out_specs=pl.BlockSpec((1, L, D), lambda b: (b, 0, 0)),
        compiler_params=pltpu.CompilerParams(dimension_semantics=("parallel",)),
    )(x, wm, wc, wp, pe)


def attention_block(x_q, x_kv, ap, ln_g, ln_b, n_heads, causal):
    B, Lq, D = x_q.shape
    Lk = x_kv.shape[1]
    kern = functools.partial(_attn_block_kernel, n_heads=n_heads, causal=causal,
                             scale=1.0 / math.sqrt(D // n_heads))
    return pl.pallas_call(
        kern,
        out_shape=jax.ShapeDtypeStruct((B, Lq, D), BF16),
        grid=(B,),
        in_specs=[
            pl.BlockSpec((1, Lq, D), lambda b: (b, 0, 0)),
            pl.BlockSpec((1, Lk, D), lambda b: (b, 0, 0)),
            pl.BlockSpec((D, D), lambda b: (0, 0)),
            pl.BlockSpec((1, D), lambda b: (0, 0)),
            pl.BlockSpec((D, 2 * D), lambda b: (0, 0)),
            pl.BlockSpec((1, 2 * D), lambda b: (0, 0)),
            pl.BlockSpec((D, D), lambda b: (0, 0)),
            pl.BlockSpec((1, D), lambda b: (0, 0)),
            pl.BlockSpec((1, D), lambda b: (0, 0)),
            pl.BlockSpec((1, D), lambda b: (0, 0)),
        ],
        out_specs=pl.BlockSpec((1, Lq, D), lambda b: (b, 0, 0)),
        compiler_params=pltpu.CompilerParams(dimension_semantics=("parallel",)),
    )(x_q, x_kv, ap["wq"], ap["bq"], ap["wkv"], ap["bkv"], ap["wo"], ap["bo"],
      ln_g, ln_b)


def ffn_block(x, w1, w2, g, b):
    B, L, D = x.shape
    dff = w1.shape[1]
    M = B * L
    TM = _row_tile(M)
    x2 = x.reshape(M, D)
    out = pl.pallas_call(
        _ffn_ln_kernel,
        out_shape=jax.ShapeDtypeStruct((M, D), BF16),
        grid=(pl.cdiv(M, TM),),
        in_specs=[
            pl.BlockSpec((TM, D), lambda i: (i, 0)),
            pl.BlockSpec((D, dff), lambda i: (0, 0)),
            pl.BlockSpec((dff, D), lambda i: (0, 0)),
            pl.BlockSpec((1, D), lambda i: (0, 0)),
            pl.BlockSpec((1, D), lambda i: (0, 0)),
        ],
        out_specs=pl.BlockSpec((TM, D), lambda i: (i, 0)),
        compiler_params=pltpu.CompilerParams(dimension_semantics=("parallel",)),
    )(x2, w1, w2, g, b)
    return out.reshape(B, L, D)


def layernorm(x, g, b):
    B, L, D = x.shape
    M = B * L
    TM = _row_tile(M)
    x2 = x.reshape(M, D)
    out = pl.pallas_call(
        _layernorm_kernel,
        out_shape=jax.ShapeDtypeStruct((M, D), BF16),
        grid=(pl.cdiv(M, TM),),
        in_specs=[
            pl.BlockSpec((TM, D), lambda i: (i, 0)),
            pl.BlockSpec((1, D), lambda i: (0, 0)),
            pl.BlockSpec((1, D), lambda i: (0, 0)),
        ],
        out_specs=pl.BlockSpec((TM, D), lambda i: (i, 0)),
        compiler_params=pltpu.CompilerParams(dimension_semantics=("parallel",)),
    )(x2, g, b)
    return out.reshape(B, L, D)


# ----------------------------- model glue -----------------------------

def positional_embedding(L, d_model):
    pos = jnp.arange(L, dtype=F32)[:, None]
    div = jnp.exp(jnp.arange(0, d_model, 2, dtype=F32) * (-math.log(10000.0) / d_model))
    pe = jnp.zeros((L, d_model), F32)
    pe = pe.at[:, 0::2].set(jnp.sin(pos * div))
    pe = pe.at[:, 1::2].set(jnp.cos(pos * div))
    return pe


def encoder_layer(x, p, n_heads):
    x = attention_block(x, x, p["attn"], p["ln1_g"], p["ln1_b"], n_heads, causal=False)
    return ffn_block(x, p["w1"], p["w2"], p["ln2_g"], p["ln2_b"])


def decoder_layer(x, cross, p, n_heads):
    x = attention_block(x, x, p["self_attn"], p["ln1_g"], p["ln1_b"], n_heads, causal=True)
    x = attention_block(x, cross, p["cross_attn"], p["ln2_g"], p["ln2_b"], n_heads, causal=False)
    return ffn_block(x, p["w1"], p["w2"], p["ln3_g"], p["ln3_b"])


def informer_forward(params, x_enc, x_dec, *, n_heads, pred_len):
    d_model = params["enc_wc"].shape[1]
    pe_enc = positional_embedding(x_enc.shape[1], d_model)
    pe_dec = positional_embedding(x_dec.shape[1], d_model)

    enc = embed(x_enc, params["enc_wm"], params["enc_wc"], params["enc_wp"], pe_enc)
    for p in params["enc_layers"]:
        enc = encoder_layer(enc, p, n_heads)
    enc = layernorm(enc, params["enc_norm_g"], params["enc_norm_b"])

    dec = embed(x_dec, params["dec_wm"], params["dec_wc"], params["dec_wp"], pe_dec)
    for p in params["dec_layers"]:
        dec = decoder_layer(dec, enc, p, n_heads)
    dec = layernorm(dec, params["dec_norm_g"], params["dec_norm_b"])

    # Final nn.Linear(d_model, c_out=4): kept in plain XLA — a 4-lane Pallas store
    # would be almost entirely masked (per perf review); XLA fuses this trivially.
    out = dec.astype(F32) @ params["proj_w"] + params["proj_b"]
    return out[:, -pred_len:, :]


# ----------------------------- deterministic parameter init -----------------------------

def init_params(key, *, enc_in, dec_in, c_out, d_model, d_ff, e_layers, d_layers):
    keys = iter(jax.random.split(key, 1024))

    def w(shape, dtype=BF16, scale=0.02):
        return (scale * jax.random.normal(next(keys), shape, dtype=F32)).astype(dtype)

    ones = lambda: jnp.ones((1, d_model), F32)
    zeros = lambda: jnp.zeros((1, d_model), F32)

    def attn_params():
        return dict(
            wq=w((d_model, d_model)), bq=w((1, d_model), F32),
            wkv=w((d_model, 2 * d_model)), bkv=w((1, 2 * d_model), F32),   # K,V fused
            wo=w((d_model, d_model)), bo=w((1, d_model), F32),
        )

    def enc_layer_params():
        return dict(
            attn=attn_params(),
            ln1_g=ones(), ln1_b=zeros(), ln2_g=ones(), ln2_b=zeros(),
            w1=w((d_model, d_ff)), w2=w((d_ff, d_model)),
        )

    def dec_layer_params():
        return dict(
            self_attn=attn_params(), cross_attn=attn_params(),
            ln1_g=ones(), ln1_b=zeros(), ln2_g=ones(), ln2_b=zeros(),
            ln3_g=ones(), ln3_b=zeros(),
            w1=w((d_model, d_ff)), w2=w((d_ff, d_model)),
        )

    return dict(
        # circular Conv1d(k=3) token embedding, split into its 3 taps [t-1, t, t+1]
        enc_wm=w((enc_in, d_model)), enc_wc=w((enc_in, d_model)), enc_wp=w((enc_in, d_model)),
        dec_wm=w((dec_in, d_model)), dec_wc=w((dec_in, d_model)), dec_wp=w((dec_in, d_model)),
        enc_layers=[enc_layer_params() for _ in range(e_layers)],
        enc_norm_g=ones(), enc_norm_b=zeros(),
        dec_layers=[dec_layer_params() for _ in range(d_layers)],
        dec_norm_g=ones(), dec_norm_b=zeros(),
        proj_w=w((d_model, c_out), F32), proj_b=w((c_out,), F32),
    )


# ----------------------------- main -----------------------------

if __name__ == "__main__":
    B = 2
    enc_in = dec_in = c_out = 4
    seq_len = 16
    label_len = 8
    out_len = 8            # pred_len
    d_model = 32
    n_heads = 4
    e_layers = 2
    d_layers = 1
    d_ff = 64

    key = jax.random.PRNGKey(0)
    k_enc, k_dec, k_param = jax.random.split(key, 3)
    x_enc = jax.random.normal(k_enc, (B, seq_len, enc_in), F32)
    x_dec = jax.random.normal(k_dec, (B, label_len + out_len, dec_in), F32)

    params = init_params(
        k_param, enc_in=enc_in, dec_in=dec_in, c_out=c_out,
        d_model=d_model, d_ff=d_ff, e_layers=e_layers, d_layers=d_layers,
    )

    fwd = jax.jit(functools.partial(informer_forward, n_heads=n_heads, pred_len=out_len))

    out = fwd(params, x_enc, x_dec)
    out = jax.block_until_ready(out)

    assert out.shape == (B, out_len, c_out), out.shape
    assert bool(jnp.all(jnp.isfinite(out)))
    print("KERNEL_OK")
</pallas_src>

<mosaic_0001>
module attributes {stable_mosaic.version = 11 : i64} {
  func.func @_embed_kernel(%arg0: i32, %arg1: memref<1x16x4xf32, #tpu.memory_space<vmem>>, %arg2: memref<4x32xbf16, #tpu.memory_space<vmem>>, %arg3: memref<4x32xbf16, #tpu.memory_space<vmem>>, %arg4: memref<4x32xbf16, #tpu.memory_space<vmem>>, %arg5: memref<16x32xf32, #tpu.memory_space<vmem>>, %arg6: memref<1x16x32xbf16, #tpu.memory_space<vmem>>) attributes {dimension_semantics = [#tpu.dimension_semantics<parallel>], iteration_bounds = array<i64: 2>, scalar_prefetch = 0 : i64, scratch_operands = 0 : i64, tpu.core_type = #tpu.core_type<tc>, window_params = [{transform_indices = @transform_0, window_bounds = array<i64: 1, 16, 4>}, {pipeline_mode = #tpu.pipeline_mode<synchronous>, transform_indices = @transform_1, window_bounds = array<i64: 4, 32>}, {pipeline_mode = #tpu.pipeline_mode<synchronous>, transform_indices = @transform_2, window_bounds = array<i64: 4, 32>}, {pipeline_mode = #tpu.pipeline_mode<synchronous>, transform_indices = @transform_3, window_bounds = array<i64: 4, 32>}, {pipeline_mode = #tpu.pipeline_mode<synchronous>, transform_indices = @transform_4, window_bounds = array<i64: 16, 32>}, {transform_indices = @transform_5, window_bounds = array<i64: 1, 16, 32>}]} {
    %c0 = arith.constant 0 : index
    %c0_0 = arith.constant 0 : index
    %c0_1 = arith.constant 0 : index
    %0 = vector.load %arg1[%c0, %c0_0, %c0_1] : memref<1x16x4xf32, #tpu.memory_space<vmem>>, vector<1x16x4xf32>
    %1 = vector.shape_cast %0 : vector<1x16x4xf32> to vector<16x4xf32>
    %2 = vector.extract_strided_slice %1 {offsets = [15, 0], sizes = [1, 4], strides = [1, 1]} : vector<16x4xf32> to vector<1x4xf32>
    %3 = vector.extract_strided_slice %1 {offsets = [0, 0], sizes = [15, 4], strides = [1, 1]} : vector<16x4xf32> to vector<15x4xf32>
    %4 = tpu.concatenate %2, %3 in 0 : vector<1x4xf32>, vector<15x4xf32> -> vector<16x4xf32>
    %5 = vector.extract_strided_slice %1 {offsets = [1, 0], sizes = [15, 4], strides = [1, 1]} : vector<16x4xf32> to vector<15x4xf32>
    %6 = vector.extract_strided_slice %1 {offsets = [0, 0], sizes = [1, 4], strides = [1, 1]} : vector<16x4xf32> to vector<1x4xf32>
    %7 = tpu.concatenate %5, %6 in 0 : vector<15x4xf32>, vector<1x4xf32> -> vector<16x4xf32>
    %8 = arith.truncf %4 : vector<16x4xf32> to vector<16x4xbf16>
    %c0_2 = arith.constant 0 : index
    %c0_3 = arith.constant 0 : index
    %9 = vector.load %arg2[%c0_2, %c0_3] : memref<4x32xbf16, #tpu.memory_space<vmem>>, vector<4x32xbf16>
    %cst = arith.constant dense<0.000000e+00> : vector<16x32xf32>
    %10 = tpu.matmul %8, %9, %cst {dimension_numbers = #tpu.dot_dimension_numbers<[1], [0], [0], [1], [0, 0, 1, 1], [], []>} : vector<16x4xbf16>, vector<4x32xbf16>, vector<16x32xf32> -> vector<16x32xf32>
    %11 = arith.truncf %1 : vector<16x4xf32> to vector<16x4xbf16>
    %c0_4 = arith.constant 0 : index
    %c0_5 = arith.constant 0 : index
    %12 = vector.load %arg3[%c0_4, %c0_5] : memref<4x32xbf16, #tpu.memory_space<vmem>>, vector<4x32xbf16>
    %cst_6 = arith.constant dense<0.000000e+00> : vector<16x32xf32>
    %13 = tpu.matmul %11, %12, %cst_6 {dimension_numbers = #tpu.dot_dimension_numbers<[1], [0], [0], [1], [0, 0, 1, 1], [], []>} : vector<16x4xbf16>, vector<4x32xbf16>, vector<16x32xf32> -> vector<16x32xf32>
    %14 = arith.addf %10, %13 : vector<16x32xf32>
    %15 = arith.truncf %7 : vector<16x4xf32> to vector<16x4xbf16>
    %c0_7 = arith.constant 0 : index
    %c0_8 = arith.constant 0 : index
    %16 = vector.load %arg4[%c0_7, %c0_8] : memref<4x32xbf16, #tpu.memory_space<vmem>>, vector<4x32xbf16>
    %cst_9 = arith.constant dense<0.000000e+00> : vector<16x32xf32>
    %17 = tpu.matmul %15, %16, %cst_9 {dimension_numbers = #tpu.dot_dimension_numbers<[1], [0], [0], [1], [0, 0, 1, 1], [], []>} : vector<16x4xbf16>, vector<4x32xbf16>, vector<16x32xf32> -> vector<16x32xf32>
    %18 = arith.addf %14, %17 : vector<16x32xf32>
    %c0_10 = arith.constant 0 : index
    %c0_11 = arith.constant 0 : index
    %19 = vector.load %arg5[%c0_10, %c0_11] : memref<16x32xf32, #tpu.memory_space<vmem>>, vector<16x32xf32>
    %20 = arith.addf %18, %19 : vector<16x32xf32>
    %21 = arith.truncf %20 : vector<16x32xf32> to vector<16x32xbf16>
    %c0_12 = arith.constant 0 : index
    %c0_13 = arith.constant 0 : index
    %c0_14 = arith.constant 0 : index
    %22 = vector.load %arg6[%c0_12, %c0_13, %c0_14] : memref<1x16x32xbf16, #tpu.memory_space<vmem>>, vector<1x16x32xbf16>
    %23 = vector.shape_cast %22 : vector<1x16x32xbf16> to vector<16x32xbf16>
    %24 = vector.shape_cast %21 : vector<16x32xbf16> to vector<1x16x32xbf16>
    tpu.vector_store %arg6[%c0_12, %c0_13, %c0_14], %24 {strides = array<i32>} : memref<1x16x32xbf16, #tpu.memory_space<vmem>>, vector<1x16x32xbf16>,
    return
  }
  func.func @transform_0(%arg0: i32) -> (i32, i32, i32) {
    %c0_i32 = arith.constant 0 : i32
    %c0_i32_0 = arith.constant 0 : i32
    %c0_i32_1 = arith.constant 0 : i32
    return %arg0, %c0_i32, %c0_i32_0 : i32, i32, i32
  }
  func.func @transform_1(%arg0: i32) -> (i32, i32) {
    %c0_i32 = arith.constant 0 : i32
    %c0_i32_0 = arith.constant 0 : i32
    %c0_i32_1 = arith.constant 0 : i32
    return %c0_i32, %c0_i32_0 : i32, i32
  }
  func.func @transform_2(%arg0: i32) -> (i32, i32) {
    %c0_i32 = arith.constant 0 : i32
    %c0_i32_0 = arith.constant 0 : i32
    %c0_i32_1 = arith.constant 0 : i32
    return %c0_i32, %c0_i32_0 : i32, i32
  }
  func.func @transform_3(%arg0: i32) -> (i32, i32) {
    %c0_i32 = arith.constant 0 : i32
    %c0_i32_0 = arith.constant 0 : i32
    %c0_i32_1 = arith.constant 0 : i32
    return %c0_i32, %c0_i32_0 : i32, i32
  }
  func.func @transform_4(%arg0: i32) -> (i32, i32) {
    %c0_i32 = arith.constant 0 : i32
    %c0_i32_0 = arith.constant 0 : i32
    %c0_i32_1 = arith.constant 0 : i32
    return %c0_i32, %c0_i32_0 : i32, i32
  }
  func.func @transform_5(%arg0: i32) -> (i32, i32, i32) {
    %c0_i32 = arith.constant 0 : i32
    %c0_i32_0 = arith.constant 0 : i32
    %c0_i32_1 = arith.constant 0 : i32
    return %arg0, %c0_i32, %c0_i32_0 : i32, i32, i32
  }
}

module attributes {stable_mosaic.version = 11 : i64} {
  func.func @_attn_block_kernel(%arg0: i32, %arg1: memref<1x16x32xbf16, #tpu.memory_space<vmem>>, %arg2: memref<1x16x32xbf16, #tpu.memory_space<vmem>>, %arg3: memref<32x32xbf16, #tpu.memory_space<vmem>>, %arg4: memref<1x32xf32, #tpu.memory_space<vmem>>, %arg5: memref<32x64xbf16, #tpu.memory_space<vmem>>, %arg6: memref<1x64xf32, #tpu.memory_space<vmem>>, %arg7: memref<32x32xbf16, #tpu.memory_space<vmem>>, %arg8: memref<1x32xf32, #tpu.memory_space<vmem>>, %arg9: memref<1x32xf32, #tpu.memory_space<vmem>>, %arg10: memref<1x32xf32, #tpu.memory_space<vmem>>, %arg11: memref<1x16x32xbf16, #tpu.memory_space<vmem>>) attributes {dimension_semantics = [#tpu.dimension_semantics<parallel>], iteration_bounds = array<i64: 2>, scalar_prefetch = 0 : i64, scratch_operands = 0 : i64, tpu.core_type = #tpu.core_type<tc>, window_params = [{transform_indices = @transform_0, window_bounds = array<i64: 1, 16, 32>}, {transform_indices = @transform_1, window_bounds = array<i64: 1, 16, 32>}, {pipeline_mode = #tpu.pipeline_mode<synchronous>, transform_indices = @transform_2, window_bounds = array<i64: 32, 32>}, {pipeline_mode = #tpu.pipeline_mode<synchronous>, transform_indices = @transform_3, window_bounds = array<i64: 1, 32>}, {pipeline_mode = #tpu.pipeline_mode<synchronous>, transform_indices = @transform_4, window_bounds = array<i64: 32, 64>}, {pipeline_mode = #tpu.pipeline_mode<synchronous>, transform_indices = @transform_5, window_bounds = array<i64: 1, 64>}, {pipeline_mode = #tpu.pipeline_mode<synchronous>, transform_indices = @transform_6, window_bounds = array<i64: 32, 32>}, {pipeline_mode = #tpu.pipeline_mode<synchronous>, transform_indices = @transform_7, window_bounds = array<i64: 1, 32>}, {pipeline_mode = #tpu.pipeline_mode<synchronous>, transform_indices = @transform_8, window_bounds = array<i64: 1, 32>}, {pipeline_mode = #tpu.pipeline_mode<synchronous>, transform_indices = @transform_9, window_bounds = array<i64: 1, 32>}, {transform_indices = @transform_10, window_bounds = array<i64: 1, 16, 32>}]} {
    %c0 = arith.constant 0 : index
    %c0_0 = arith.constant 0 : index
    %c0_1 = arith.constant 0 : index
    %0 = vector.load %arg1[%c0, %c0_0, %c0_1] : memref<1x16x32xbf16, #tpu.memory_space<vmem>>, vector<1x16x32xbf16>
    %1 = vector.shape_cast %0 : vector<1x16x32xbf16> to vector<16x32xbf16>
    %c0_2 = arith.constant 0 : index
    %c0_3 = arith.constant 0 : index
    %c0_4 = arith.constant 0 : index
    %2 = vector.load %arg2[%c0_2, %c0_3, %c0_4] : memref<1x16x32xbf16, #tpu.memory_space<vmem>>, vector<1x16x32xbf16>
    %3 = vector.shape_cast %2 : vector<1x16x32xbf16> to vector<16x32xbf16>
    %c0_5 = arith.constant 0 : index
    %c0_6 = arith.constant 0 : index
    %4 = vector.load %arg3[%c0_5, %c0_6] : memref<32x32xbf16, #tpu.memory_space<vmem>>, vector<32x32xbf16>
    %cst = arith.constant dense<0.000000e+00> : vector<16x32xf32>
    %5 = tpu.matmul %1, %4, %cst {dimension_numbers = #tpu.dot_dimension_numbers<[1], [0], [0], [1], [0, 0, 1, 1], [], []>} : vector<16x32xbf16>, vector<32x32xbf16>, vector<16x32xf32> -> vector<16x32xf32>
    %c0_7 = arith.constant 0 : index
    %c0_8 = arith.constant 0 : index
    %6 = vector.load %arg4[%c0_7, %c0_8] : memref<1x32xf32, #tpu.memory_space<vmem>>, vector<1x32xf32>
    %7 = vector.broadcast %6 : vector<1x32xf32> to vector<16x32xf32>
    %8 = arith.addf %5, %7 : vector<16x32xf32>
    %9 = arith.truncf %8 : vector<16x32xf32> to vector<16x32xbf16>
    %c0_9 = arith.constant 0 : index
    %c0_10 = arith.constant 0 : index
    %10 = vector.load %arg5[%c0_9, %c0_10] : memref<32x64xbf16, #tpu.memory_space<vmem>>, vector<32x64xbf16>
    %cst_11 = arith.constant dense<0.000000e+00> : vector<16x64xf32>
    %11 = tpu.matmul %3, %10, %cst_11 {dimension_numbers = #tpu.dot_dimension_numbers<[1], [0], [0], [1], [0, 0, 1, 1], [], []>} : vector<16x32xbf16>, vector<32x64xbf16>, vector<16x64xf32> -> vector<16x64xf32>
    %c0_12 = arith.constant 0 : index
    %c0_13 = arith.constant 0 : index
    %12 = vector.load %arg6[%c0_12, %c0_13] : memref<1x64xf32, #tpu.memory_space<vmem>>, vector<1x64xf32>
    %13 = vector.broadcast %12 : vector<1x64xf32> to vector<16x64xf32>
    %14 = arith.addf %11, %13 : vector<16x64xf32>
    %15 = arith.truncf %14 : vector<16x64xf32> to vector<16x64xbf16>
    %16 = vector.extract_strided_slice %9 {offsets = [0, 0], sizes = [16, 8], strides = [1, 1]} : vector<16x32xbf16> to vector<16x8xbf16>
    %17 = vector.extract_strided_slice %15 {offsets = [0, 0], sizes = [16, 8], strides = [1, 1]} : vector<16x64xbf16> to vector<16x8xbf16>
    %18 = vector.extract_strided_slice %15 {offsets = [0, 32], sizes = [16, 8], strides = [1, 1]} : vector<16x64xbf16> to vector<16x8xbf16>
    %cst_14 = arith.constant dense<0.000000e+00> : vector<16x16xf32>
    %19 = tpu.matmul %16, %17, %cst_14 {dimension_numbers = #tpu.dot_dimension_numbers<[1], [1], [0], [0], [0, 0, 1, 0], [], []>} : vector<16x8xbf16>, vector<16x8xbf16>, vector<16x16xf32> -> vector<16x16xf32>
    %cst_15 = arith.constant 0.353553385 : f32
    %20 = vector.broadcast %cst_15 : f32 to vector<16x16xf32>
    %21 = arith.mulf %19, %20 : vector<16x16xf32>
    %cst_16 = arith.constant dense<0xFF800000> : vector<16xf32>
    %22 = vector.multi_reduction <maximumf>, %21, %cst_16 [1] : vector<16x16xf32> to vector<16xf32>
    %23 = vector.shape_cast %22 : vector<16xf32> to vector<16x1xf32>
    %24 = vector.broadcast %23 : vector<16x1xf32> to vector<16x16xf32>
    %25 = arith.subf %21, %24 : vector<16x16xf32>
    %26 = math.exp %25 : vector<16x16xf32>
    %cst_17 = arith.constant dense<0.000000e+00> : vector<16xf32>
    %27 = vector.multi_reduction <add>, %26, %cst_17 [1] : vector<16x16xf32> to vector<16xf32>
    %28 = vector.shape_cast %27 : vector<16xf32> to vector<16x1xf32>
    %29 = tpu.reciprocal %28 {approx = true} : vector<16x1xf32> -> vector<16x1xf32>
    %30 = arith.truncf %26 : vector<16x16xf32> to vector<16x16xbf16>
    %cst_18 = arith.constant dense<0.000000e+00> : vector<16x8xf32>
    %31 = tpu.matmul %30, %18, %cst_18 {dimension_numbers = #tpu.dot_dimension_numbers<[1], [0], [0], [1], [0, 0, 1, 1], [], []>} : vector<16x16xbf16>, vector<16x8xbf16>, vector<16x8xf32> -> vector<16x8xf32>
    %32 = vector.broadcast %29 : vector<16x1xf32> to vector<16x8xf32>
    %33 = arith.mulf %31, %32 : vector<16x8xf32>
    %34 = vector.extract_strided_slice %9 {offsets = [0, 8], sizes = [16, 8], strides = [1, 1]} : vector<16x32xbf16> to vector<16x8xbf16>
    %35 = vector.extract_strided_slice %15 {offsets = [0, 8], sizes = [16, 8], strides = [1, 1]} : vector<16x64xbf16> to vector<16x8xbf16>
    %36 = vector.extract_strided_slice %15 {offsets = [0, 40], sizes = [16, 8], strides = [1, 1]} : vector<16x64xbf16> to vector<16x8xbf16>
    %cst_19 = arith.constant dense<0.000000e+00> : vector<16x16xf32>
    %37 = tpu.matmul %34, %35, %cst_19 {dimension_numbers = #tpu.dot_dimension_numbers<[1], [1], [0], [0], [0, 0, 1, 0], [], []>} : vector<16x8xbf16>, vector<16x8xbf16>, vector<16x16xf32> -> vector<16x16xf32>
    %cst_20 = arith.constant 0.353553385 : f32
    %38 = vector.broadcast %cst_20 : f32 to vector<16x16xf32>
    %39 = arith.mulf %37, %38 : vector<16x16xf32>
    %cst_21 = arith.constant dense<0xFF800000> : vector<16xf32>
    %40 = vector.multi_reduction <maximumf>, %39, %cst_21 [1] : vector<16x16xf32> to vector<16xf32>
    %41 = vector.shape_cast %40 : vector<16xf32> to vector<16x1xf32>
    %42 = vector.broadcast %41 : vector<16x1xf32> to vector<16x16xf32>
    %43 = arith.subf %39, %42 : vector<16x16xf32>
    %44 = math.exp %43 : vector<16x16xf32>
    %cst_22 = arith.constant dense<0.000000e+00> : vector<16xf32>
    %45 = vector.multi_reduction <add>, %44, %cst_22 [1] : vector<16x16xf32> to vector<16xf32>
    %46 = vector.shape_cast %45 : vector<16xf32> to vector<16x1xf32>
    %47 = tpu.reciprocal %46 {approx = true} : vector<16x1xf32> -> vector<16x1xf32>
    %48 = arith.truncf %44 : vector<16x16xf32> to vector<16x16xbf16>
    %cst_23 = arith.constant dense<0.000000e+00> : vector<16x8xf32>
    %49 = tpu.matmul %48, %36, %cst_23 {dimension_numbers = #tpu.dot_dimension_numbers<[1], [0], [0], [1], [0, 0, 1, 1], [], []>} : vector<16x16xbf16>, vector<16x8xbf16>, vector<16x8xf32> -> vector<16x8xf32>
    %50 = vector.broadcast %47 : vector<16x1xf32> to vector<16x8xf32>
    %51 = arith.mulf %49, %50 : vector<16x8xf32>
    %52 = vector.extract_strided_slice %9 {offsets = [0, 16], sizes = [16, 8], strides = [1, 1]} : vector<16x32xbf16> to vector<16x8xbf16>
    %53 = vector.extract_strided_slice %15 {offsets = [0, 16], sizes = [16, 8], strides = [1, 1]} : vector<16x64xbf16> to vector<16x8xbf16>
    %54 = vector.extract_strided_slice %15 {offsets = [0, 48], sizes = [16, 8], strides = [1, 1]} : vector<16x64xbf16> to vector<16x8xbf16>
    %cst_24 = arith.constant dense<0.000000e+00> : vector<16x16xf32>
    %55 = tpu.matmul %52, %53, %cst_24 {dimension_numbers = #tpu.dot_dimension_numbers<[1], [1], [0], [0], [0, 0, 1, 0], [], []>} : vector<16x8xbf16>, vector<16x8xbf16>, vector<16x16xf32> -> vector<16x16xf32>
    %cst_25 = arith.constant 0.353553385 : f32
    %56 = vector.broadcast %cst_25 : f32 to vector<16x16xf32>
    %57 = arith.mulf %55, %56 : vector<16x16xf32>
    %cst_26 = arith.constant dense<0xFF800000> : vector<16xf32>
    %58 = vector.multi_reduction <maximumf>, %57, %cst_26 [1] : vector<16x16xf32> to vector<16xf32>
    %59 = vector.shape_cast %58 : vector<16xf32> to vector<16x1xf32>
    %60 = vector.broadcast %59 : vector<16x1xf32> to vector<16x16xf32>
    %61 = arith.subf %57, %60 : vector<16x16xf32>
    %62 = math.exp %61 : vector<16x16xf32>
    %cst_27 = arith.constant dense<0.000000e+00> : vector<16xf32>
    %63 = vector.multi_reduction <add>, %62, %cst_27 [1] : vector<16x16xf32> to vector<16xf32>
    %64 = vector.shape_cast %63 : vector<16xf32> to vector<16x1xf32>
    %65 = tpu.reciprocal %64 {approx = true} : vector<16x1xf32> -> vector<16x1xf32>
    %66 = arith.truncf %62 : vector<16x16xf32> to vector<16x16xbf16>
    %cst_28 = arith.constant dense<0.000000e+00> : vector<16x8xf32>
    %67 = tpu.matmul %66, %54, %cst_28 {dimension_numbers = #tpu.dot_dimension_numbers<[1], [0], [0], [1], [0, 0, 1, 1], [], []>} : vector<16x16xbf16>, vector<16x8xbf16>, vector<16x8xf32> -> vector<16x8xf32>
    %68 = vector.broadcast %65 : vector<16x1xf32> to vector<16x8xf32>
    %69 = arith.mulf %67, %68 : vector<16x8xf32>
    %70 = vector.extract_strided_slice %9 {offsets = [0, 24], sizes = [16, 8], strides = [1, 1]} : vector<16x32xbf16> to vector<16x8xbf16>
    %71 = vector.extract_strided_slice %15 {offsets = [0, 24], sizes = [16, 8], strides = [1, 1]} : vector<16x64xbf16> to vector<16x8xbf16>
    %72 = vector.extract_strided_slice %15 {offsets = [0, 56], sizes = [16, 8], strides = [1, 1]} : vector<16x64xbf16> to vector<16x8xbf16>
    %cst_29 = arith.constant dense<0.000000e+00> : vector<16x16xf32>
    %73 = tpu.matmul %70, %71, %cst_29 {dimension_numbers = #tpu.dot_dimension_numbers<[1], [1], [0], [0], [0, 0, 1, 0], [], []>} : vector<16x8xbf16>, vector<16x8xbf16>, vector<16x16xf32> -> vector<16x16xf32>
    %cst_30 = arith.constant 0.353553385 : f32
    %74 = vector.broadcast %cst_30 : f32 to vector<16x16xf32>
    %75 = arith.mulf %73, %74 : vector<16x16xf32>
    %cst_31 = arith.constant dense<0xFF800000> : vector<16xf32>
    %76 = vector.multi_reduction <maximumf>, %75, %cst_31 [1] : vector<16x16xf32> to vector<16xf32>
    %77 = vector.shape_cast %76 : vector<16xf32> to vector<16x1xf32>
    %78 = vector.broadcast %77 : vector<16x1xf32> to vector<16x16xf32>
    %79 = arith.subf %75, %78 : vector<16x16xf32>
    %80 = math.exp %79 : vector<16x16xf32>
    %cst_32 = arith.constant dense<0.000000e+00> : vector<16xf32>
    %81 = vector.multi_reduction <add>, %80, %cst_32 [1] : vector<16x16xf32> to vector<16xf32>
    %82 = vector.shape_cast %81 : vector<16xf32> to vector<16x1xf32>
    %83 = tpu.reciprocal %82 {approx = true} : vector<16x1xf32> -> vector<16x1xf32>
    %84 = arith.truncf %80 : vector<16x16xf32> to vector<16x16xbf16>
    %cst_33 = arith.constant dense<0.000000e+00> : vector<16x8xf32>
    %85 = tpu.matmul %84, %72, %cst_33 {dimension_numbers = #tpu.dot_dimension_numbers<[1], [0], [0], [1], [0, 0, 1, 1], [], []>} : vector<16x16xbf16>, vector<16x8xbf16>, vector<16x8xf32> -> vector<16x8xf32>
    %86 = vector.broadcast %83 : vector<16x1xf32> to vector<16x8xf32>
    %87 = arith.mulf %85, %86 : vector<16x8xf32>
    %88 = tpu.concatenate %33, %51, %69, %87 in 1 : vector<16x8xf32>, vector<16x8xf32>, vector<16x8xf32>, vector<16x8xf32> -> vector<16x32xf32>
    %89 = arith.truncf %88 : vector<16x32xf32> to vector<16x32xbf16>
    %c0_34 = arith.constant 0 : index
    %c0_35 = arith.constant 0 : index
    %90 = vector.load %arg7[%c0_34, %c0_35] : memref<32x32xbf16, #tpu.memory_space<vmem>>, vector<32x32xbf16>
    %cst_36 = arith.constant dense<0.000000e+00> : vector<16x32xf32>
    %91 = tpu.matmul %89, %90, %cst_36 {dimension_numbers = #tpu.dot_dimension_numbers<[1], [0], [0], [1], [0, 0, 1, 1], [], []>} : vector<16x32xbf16>, vector<32x32xbf16>, vector<16x32xf32> -> vector<16x32xf32>
    %c0_37 = arith.constant 0 : index
    %c0_38 = arith.constant 0 : index
    %92 = vector.load %arg8[%c0_37, %c0_38] : memref<1x32xf32, #tpu.memory_space<vmem>>, vector<1x32xf32>
    %93 = vector.broadcast %92 : vector<1x32xf32> to vector<16x32xf32>
    %94 = arith.addf %91, %93 : vector<16x32xf32>
    %95 = arith.extf %1 : vector<16x32xbf16> to vector<16x32xf32>
    %96 = arith.addf %95, %94 : vector<16x32xf32>
    %c0_39 = arith.constant 0 : index
    %c0_40 = arith.constant 0 : index
    %97 = vector.load %arg9[%c0_39, %c0_40] : memref<1x32xf32, #tpu.memory_space<vmem>>, vector<1x32xf32>
    %c0_41 = arith.constant 0 : index
    %c0_42 = arith.constant 0 : index
    %98 = vector.load %arg10[%c0_41, %c0_42] : memref<1x32xf32, #tpu.memory_space<vmem>>, vector<1x32xf32>
    %cst_43 = arith.constant dense<0.000000e+00> : vector<16xf32>
    %99 = vector.multi_reduction <add>, %96, %cst_43 [1] : vector<16x32xf32> to vector<16xf32>
    %100 = vector.shape_cast %99 : vector<16xf32> to vector<16x1xf32>
    %cst_44 = arith.constant 3.200000e+01 : f32
    %101 = vector.broadcast %cst_44 : f32 to vector<16x1xf32>
    %102 = arith.divf %100, %101 : vector<16x1xf32>
    %103 = vector.broadcast %102 : vector<16x1xf32> to vector<16x32xf32>
    %104 = arith.subf %96, %103 : vector<16x32xf32>
    %105 = arith.mulf %104, %104 : vector<16x32xf32>
    %cst_45 = arith.constant dense<0.000000e+00> : vector<16xf32>
    %106 = vector.multi_reduction <add>, %105, %cst_45 [1] : vector<16x32xf32> to vector<16xf32>
    %107 = vector.shape_cast %106 : vector<16xf32> to vector<16x1xf32>
    %cst_46 = arith.constant 3.200000e+01 : f32
    %108 = vector.broadcast %cst_46 : f32 to vector<16x1xf32>
    %109 = arith.divf %107, %108 : vector<16x1xf32>
    %110 = vector.broadcast %102 : vector<16x1xf32> to vector<16x32xf32>
    %111 = arith.subf %96, %110 : vector<16x32xf32>
    %cst_47 = arith.constant 9.99999974E-6 : f32
    %112 = vector.broadcast %cst_47 : f32 to vector<16x1xf32>
    %113 = arith.addf %109, %112 : vector<16x1xf32>
    %114 = math.rsqrt %113 : vector<16x1xf32>
    %115 = vector.broadcast %114 : vector<16x1xf32> to vector<16x32xf32>
    %116 = arith.mulf %111, %115 : vector<16x32xf32>
    %117 = vector.broadcast %97 : vector<1x32xf32> to vector<16x32xf32>
    %118 = arith.mulf %116, %117 : vector<16x32xf32>
    %119 = vector.broadcast %98 : vector<1x32xf32> to vector<16x32xf32>
    %120 = arith.addf %118, %119 : vector<16x32xf32>
    %121 = arith.truncf %120 : vector<16x32xf32> to vector<16x32xbf16>
    %c0_48 = arith.constant 0 : index
    %c0_49 = arith.constant 0 : index
    %c0_50 = arith.constant 0 : index
    %122 = vector.load %arg11[%c0_48, %c0_49, %c0_50] : memref<1x16x32xbf16, #tpu.memory_space<vmem>>, vector<1x16x32xbf16>
    %123 = vector.shape_cast %122 : vector<1x16x32xbf16> to vector<16x32xbf16>
    %124 = vector.shape_cast %121 : vector<16x32xbf16> to vector<1x16x32xbf16>
    tpu.vector_store %arg11[%c0_48, %c0_49, %c0_50], %124 {strides = array<i32>} : memref<1x16x32xbf16, #tpu.memory_space<vmem>>, vector<1x16x32xbf16>,
    return
  }
  func.func @transform_0(%arg0: i32) -> (i32, i32, i32) {
    %c0_i32 = arith.constant 0 : i32
    %c0_i32_0 = arith.constant 0 : i32
    %c0_i32_1 = arith.constant 0 : i32
    return %arg0, %c0_i32, %c0_i32_0 : i32, i32, i32
  }
  func.func @transform_1(%arg0: i32) -> (i32, i32, i32) {
    %c0_i32 = arith.constant 0 : i32
    %c0_i32_0 = arith.constant 0 : i32
    %c0_i32_1 = arith.constant 0 : i32
    return %arg0, %c0_i32, %c0_i32_0 : i32, i32, i32
  }
  func.func @transform_2(%arg0: i32) -> (i32, i32) {
    %c0_i32 = arith.constant 0 : i32
    %c0_i32_0 = arith.constant 0 : i32
    %c0_i32_1 = arith.constant 0 : i32
    return %c0_i32, %c0_i32_0 : i32, i32
  }
  func.func @transform_3(%arg0: i32) -> (i32, i32) {
    %c0_i32 = arith.constant 0 : i32
    %c0_i32_0 = arith.constant 0 : i32
    %c0_i32_1 = arith.constant 0 : i32
    return %c0_i32, %c0_i32_0 : i32, i32
  }
  func.func @transform_4(%arg0: i32) -> (i32, i32) {
    %c0_i32 = arith.constant 0 : i32
    %c0_i32_0 = arith.constant 0 : i32
    %c0_i32_1 = arith.constant 0 : i32
    return %c0_i32, %c0_i32_0 : i32, i32
  }
  func.func @transform_5(%arg0: i32) -> (i32, i32) {
    %c0_i32 = arith.constant 0 : i32
    %c0_i32_0 = arith.constant 0 : i32
    %c0_i32_1 = arith.constant 0 : i32
    return %c0_i32, %c0_i32_0 : i32, i32
  }
  func.func @transform_6(%arg0: i32) -> (i32, i32) {
    %c0_i32 = arith.constant 0 : i32
    %c0_i32_0 = arith.constant 0 : i32
    %c0_i32_1 = arith.constant 0 : i32
    return %c0_i32, %c0_i32_0 : i32, i32
  }
  func.func @transform_7(%arg0: i32) -> (i32, i32) {
    %c0_i32 = arith.constant 0 : i32
    %c0_i32_0 = arith.constant 0 : i32
    %c0_i32_1 = arith.constant 0 : i32
    return %c0_i32, %c0_i32_0 : i32, i32
  }
  func.func @transform_8(%arg0: i32) -> (i32, i32) {
    %c0_i32 = arith.constant 0 : i32
    %c0_i32_0 = arith.constant 0 : i32
    %c0_i32_1 = arith.constant 0 : i32
    return %c0_i32, %c0_i32_0 : i32, i32
  }
  func.func @transform_9(%arg0: i32) -> (i32, i32) {
    %c0_i32 = arith.constant 0 : i32
    %c0_i32_0 = arith.constant 0 : i32
    %c0_i32_1 = arith.constant 0 : i32
    return %c0_i32, %c0_i32_0 : i32, i32
  }
  func.func @transform_10(%arg0: i32) -> (i32, i32, i32) {
    %c0_i32 = arith.constant 0 : i32
    %c0_i32_0 = arith.constant 0 : i32
    %c0_i32_1 = arith.constant 0 : i32
    return %arg0, %c0_i32, %c0_i32_0 : i32, i32, i32
  }
}

module attributes {stable_mosaic.version = 11 : i64} {
  func.func @_layernorm_kernel(%arg0: i32, %arg1: memref<32x32xbf16, #tpu.memory_space<vmem>>, %arg2: memref<1x32xf32, #tpu.memory_space<vmem>>, %arg3: memref<1x32xf32, #tpu.memory_space<vmem>>, %arg4: memref<32x32xbf16, #tpu.memory_space<vmem>>) attributes {dimension_semantics = [#tpu.dimension_semantics<parallel>], iteration_bounds = array<i64: 1>, scalar_prefetch = 0 : i64, scratch_operands = 0 : i64, tpu.core_type = #tpu.core_type<tc>, window_params = [{transform_indices = @transform_0, window_bounds = array<i64: 32, 32>}, {pipeline_mode = #tpu.pipeline_mode<synchronous>, transform_indices = @transform_1, window_bounds = array<i64: 1, 32>}, {pipeline_mode = #tpu.pipeline_mode<synchronous>, transform_indices = @transform_2, window_bounds = array<i64: 1, 32>}, {transform_indices = @transform_3, window_bounds = array<i64: 32, 32>}]} {
    %c0 = arith.constant 0 : index
    %c0_0 = arith.constant 0 : index
    %0 = vector.load %arg1[%c0, %c0_0] : memref<32x32xbf16, #tpu.memory_space<vmem>>, vector<32x32xbf16>
    %1 = arith.extf %0 : vector<32x32xbf16> to vector<32x32xf32>
    %c0_1 = arith.constant 0 : index
    %c0_2 = arith.constant 0 : index
    %2 = vector.load %arg2[%c0_1, %c0_2] : memref<1x32xf32, #tpu.memory_space<vmem>>, vector<1x32xf32>
    %c0_3 = arith.constant 0 : index
    %c0_4 = arith.constant 0 : index
    %3 = vector.load %arg3[%c0_3, %c0_4] : memref<1x32xf32, #tpu.memory_space<vmem>>, vector<1x32xf32>
    %cst = arith.constant dense<0.000000e+00> : vector<32xf32>
    %4 = vector.multi_reduction <add>, %1, %cst [1] : vector<32x32xf32> to vector<32xf32>
    %5 = vector.shape_cast %4 : vector<32xf32> to vector<32x1xf32>
    %cst_5 = arith.constant 3.200000e+01 : f32
    %6 = vector.broadcast %cst_5 : f32 to vector<32x1xf32>
    %7 = arith.divf %5, %6 : vector<32x1xf32>
    %8 = vector.broadcast %7 : vector<32x1xf32> to vector<32x32xf32>
    %9 = arith.subf %1, %8 : vector<32x32xf32>
    %10 = arith.mulf %9, %9 : vector<32x32xf32>
    %cst_6 = arith.constant dense<0.000000e+00> : vector<32xf32>
    %11 = vector.multi_reduction <add>, %10, %cst_6 [1] : vector<32x32xf32> to vector<32xf32>
    %12 = vector.shape_cast %11 : vector<32xf32> to vector<32x1xf32>
    %cst_7 = arith.constant 3.200000e+01 : f32
    %13 = vector.broadcast %cst_7 : f32 to vector<32x1xf32>
    %14 = arith.divf %12, %13 : vector<32x1xf32>
    %15 = vector.broadcast %7 : vector<32x1xf32> to vector<32x32xf32>
    %16 = arith.subf %1, %15 : vector<32x32xf32>
    %cst_8 = arith.constant 9.99999974E-6 : f32
    %17 = vector.broadcast %cst_8 : f32 to vector<32x1xf32>
    %18 = arith.addf %14, %17 : vector<32x1xf32>
    %19 = math.rsqrt %18 : vector<32x1xf32>
    %20 = vector.broadcast %19 : vector<32x1xf32> to vector<32x32xf32>
    %21 = arith.mulf %16, %20 : vector<32x32xf32>
    %22 = vector.broadcast %2 : vector<1x32xf32> to vector<32x32xf32>
    %23 = arith.mulf %21, %22 : vector<32x32xf32>
    %24 = vector.broadcast %3 : vector<1x32xf32> to vector<32x32xf32>
    %25 = arith.addf %23, %24 : vector<32x32xf32>
    %26 = arith.truncf %25 : vector<32x32xf32> to vector<32x32xbf16>
    %c0_9 = arith.constant 0 : index
    %c0_10 = arith.constant 0 : index
    %27 = vector.load %arg4[%c0_9, %c0_10] : memref<32x32xbf16, #tpu.memory_space<vmem>>, vector<32x32xbf16>
    tpu.vector_store %arg4[%c0_9, %c0_10], %26 {strides = array<i32>} : memref<32x32xbf16, #tpu.memory_space<vmem>>, vector<32x32xbf16>,
    return
  }
  func.func @transform_0(%arg0: i32) -> (i32, i32) {
    %c0_i32 = arith.constant 0 : i32
    %c0_i32_0 = arith.constant 0 : i32
    return %arg0, %c0_i32 : i32, i32
  }
  func.func @transform_1(%arg0: i32) -> (i32, i32) {
    %c0_i32 = arith.constant 0 : i32
    %c0_i32_0 = arith.constant 0 : i32
    %c0_i32_1 = arith.constant 0 : i32
    return %c0_i32, %c0_i32_0 : i32, i32
  }
  func.func @transform_2(%arg0: i32) -> (i32, i32) {
    %c0_i32 = arith.constant 0 : i32
    %c0_i32_0 = arith.constant 0 : i32
    %c0_i32_1 = arith.constant 0 : i32
    return %c0_i32, %c0_i32_0 : i32, i32
  }
  func.func @transform_3(%arg0: i32) -> (i32, i32) {
    %c0_i32 = arith.constant 0 : i32
    %c0_i32_0 = arith.constant 0 : i32
    return %arg0, %c0_i32 : i32, i32
  }
}

module attributes {stable_mosaic.version = 11 : i64} {
  func.func @_ffn_ln_kernel(%arg0: i32, %arg1: memref<32x32xbf16, #tpu.memory_space<vmem>>, %arg2: memref<32x64xbf16, #tpu.memory_space<vmem>>, %arg3: memref<64x32xbf16, #tpu.memory_space<vmem>>, %arg4: memref<1x32xf32, #tpu.memory_space<vmem>>, %arg5: memref<1x32xf32, #tpu.memory_space<vmem>>, %arg6: memref<32x32xbf16, #tpu.memory_space<vmem>>) attributes {dimension_semantics = [#tpu.dimension_semantics<parallel>], iteration_bounds = array<i64: 1>, scalar_prefetch = 0 : i64, scratch_operands = 0 : i64, tpu.core_type = #tpu.core_type<tc>, window_params = [{transform_indices = @transform_0, window_bounds = array<i64: 32, 32>}, {pipeline_mode = #tpu.pipeline_mode<synchronous>, transform_indices = @transform_1, window_bounds = array<i64: 32, 64>}, {pipeline_mode = #tpu.pipeline_mode<synchronous>, transform_indices = @transform_2, window_bounds = array<i64: 64, 32>}, {pipeline_mode = #tpu.pipeline_mode<synchronous>, transform_indices = @transform_3, window_bounds = array<i64: 1, 32>}, {pipeline_mode = #tpu.pipeline_mode<synchronous>, transform_indices = @transform_4, window_bounds = array<i64: 1, 32>}, {transform_indices = @transform_5, window_bounds = array<i64: 32, 32>}]} {
    %c0 = arith.constant 0 : index
    %c0_0 = arith.constant 0 : index
    %0 = vector.load %arg1[%c0, %c0_0] : memref<32x32xbf16, #tpu.memory_space<vmem>>, vector<32x32xbf16>
    %c0_1 = arith.constant 0 : index
    %c0_2 = arith.constant 0 : index
    %1 = vector.load %arg2[%c0_1, %c0_2] : memref<32x64xbf16, #tpu.memory_space<vmem>>, vector<32x64xbf16>
    %cst = arith.constant dense<0.000000e+00> : vector<32x64xf32>
    %2 = tpu.matmul %0, %1, %cst {dimension_numbers = #tpu.dot_dimension_numbers<[1], [0], [0], [1], [0, 0, 1, 1], [], []>} : vector<32x32xbf16>, vector<32x64xbf16>, vector<32x64xf32> -> vector<32x64xf32>
    %cst_3 = arith.constant 5.000000e-01 : f32
    %3 = vector.broadcast %cst_3 : f32 to vector<32x64xf32>
    %4 = arith.mulf %3, %2 : vector<32x64xf32>
    %cst_4 = arith.constant 0.707106769 : f32
    %5 = vector.broadcast %cst_4 : f32 to vector<32x64xf32>
    %6 = arith.mulf %2, %5 : vector<32x64xf32>
    %cst_5 = arith.constant 0.000000e+00 : f32
    %7 = vector.broadcast %cst_5 : f32 to vector<32x64xf32>
    %8 = arith.cmpf oge, %6, %7 : vector<32x64xf32>
    %cst_6 = arith.constant 1.000000e+00 : f32
    %cst_7 = arith.constant -1.000000e+00 : f32
    %9 = vector.broadcast %cst_6 : f32 to vector<32x64xf32>
    %10 = vector.broadcast %cst_7 : f32 to vector<32x64xf32>
    %11 = arith.select %8, %9, %10 : vector<32x64xi1>, vector<32x64xf32>
    %12 = math.absf %6 : vector<32x64xf32>
    %cst_8 = arith.constant 0.327591091 : f32
    %13 = vector.broadcast %cst_8 : f32 to vector<32x64xf32>
    %14 = arith.mulf %13, %12 : vector<32x64xf32>
    %cst_9 = arith.constant 1.000000e+00 : f32
    %15 = vector.broadcast %cst_9 : f32 to vector<32x64xf32>
    %16 = arith.addf %15, %14 : vector<32x64xf32>
    %cst_10 = arith.constant 1.000000e+00 : f32
    %17 = vector.broadcast %cst_10 : f32 to vector<32x64xf32>
    %18 = arith.divf %17, %16 : vector<32x64xf32>
    %cst_11 = arith.constant 1.06140542 : f32
    %19 = vector.broadcast %cst_11 : f32 to vector<32x64xf32>
    %20 = arith.mulf %19, %18 : vector<32x64xf32>
    %cst_12 = arith.constant -1.45315206 : f32
    %21 = vector.broadcast %cst_12 : f32 to vector<32x64xf32>
    %22 = arith.addf %20, %21 : vector<32x64xf32>
    %23 = arith.mulf %22, %18 : vector<32x64xf32>
    %cst_13 = arith.constant 1.42141378 : f32
    %24 = vector.broadcast %cst_13 : f32 to vector<32x64xf32>
    %25 = arith.addf %23, %24 : vector<32x64xf32>
    %26 = arith.mulf %25, %18 : vector<32x64xf32>
    %cst_14 = arith.constant -0.284496725 : f32
    %27 = vector.broadcast %cst_14 : f32 to vector<32x64xf32>
    %28 = arith.addf %26, %27 : vector<32x64xf32>
    %29 = arith.mulf %28, %18 : vector<32x64xf32>
    %cst_15 = arith.constant 0.254829586 : f32
    %30 = vector.broadcast %cst_15 : f32 to vector<32x64xf32>
    %31 = arith.addf %29, %30 : vector<32x64xf32>
    %32 = arith.mulf %31, %18 : vector<32x64xf32>
    %cst_16 = arith.constant 0.000000e+00 : f32
    %33 = vector.broadcast %cst_16 : f32 to vector<32x64xf32>
    %34 = arith.subf %33, %12 : vector<32x64xf32>
    %35 = arith.mulf %34, %12 : vector<32x64xf32>
    %36 = math.exp %35 : vector<32x64xf32>
    %37 = arith.mulf %32, %36 : vector<32x64xf32>
    %cst_17 = arith.constant 1.000000e+00 : f32
    %38 = vector.broadcast %cst_17 : f32 to vector<32x64xf32>
    %39 = arith.subf %38, %37 : vector<32x64xf32>
    %40 = arith.mulf %11, %39 : vector<32x64xf32>
    %cst_18 = arith.constant 1.000000e+00 : f32
    %41 = vector.broadcast %cst_18 : f32 to vector<32x64xf32>
    %42 = arith.addf %41, %40 : vector<32x64xf32>
    %43 = arith.mulf %4, %42 : vector<32x64xf32>
    %44 = arith.truncf %43 : vector<32x64xf32> to vector<32x64xbf16>
    %c0_19 = arith.constant 0 : index
    %c0_20 = arith.constant 0 : index
    %45 = vector.load %arg3[%c0_19, %c0_20] : memref<64x32xbf16, #tpu.memory_space<vmem>>, vector<64x32xbf16>
    %cst_21 = arith.constant dense<0.000000e+00> : vector<32x32xf32>
    %46 = tpu.matmul %44, %45, %cst_21 {dimension_numbers = #tpu.dot_dimension_numbers<[1], [0], [0], [1], [0, 0, 1, 1], [], []>} : vector<32x64xbf16>, vector<64x32xbf16>, vector<32x32xf32> -> vector<32x32xf32>
    %47 = arith.extf %0 : vector<32x32xbf16> to vector<32x32xf32>
    %48 = arith.addf %47, %46 : vector<32x32xf32>
    %c0_22 = arith.constant 0 : index
    %c0_23 = arith.constant 0 : index
    %49 = vector.load %arg4[%c0_22, %c0_23] : memref<1x32xf32, #tpu.memory_space<vmem>>, vector<1x32xf32>
    %c0_24 = arith.constant 0 : index
    %c0_25 = arith.constant 0 : index
    %50 = vector.load %arg5[%c0_24, %c0_25] : memref<1x32xf32, #tpu.memory_space<vmem>>, vector<1x32xf32>
    %cst_26 = arith.constant dense<0.000000e+00> : vector<32xf32>
    %51 = vector.multi_reduction <add>, %48, %cst_26 [1] : vector<32x32xf32> to vector<32xf32>
    %52 = vector.shape_cast %51 : vector<32xf32> to vector<32x1xf32>
    %cst_27 = arith.constant 3.200000e+01 : f32
    %53 = vector.broadcast %cst_27 : f32 to vector<32x1xf32>
    %54 = arith.divf %52, %53 : vector<32x1xf32>
    %55 = vector.broadcast %54 : vector<32x1xf32> to vector<32x32xf32>
    %56 = arith.subf %48, %55 : vector<32x32xf32>
    %57 = arith.mulf %56, %56 : vector<32x32xf32>
    %cst_28 = arith.constant dense<0.000000e+00> : vector<32xf32>
    %58 = vector.multi_reduction <add>, %57, %cst_28 [1] : vector<32x32xf32> to vector<32xf32>
    %59 = vector.shape_cast %58 : vector<32xf32> to vector<32x1xf32>
    %cst_29 = arith.constant 3.200000e+01 : f32
    %60 = vector.broadcast %cst_29 : f32 to vector<32x1xf32>
    %61 = arith.divf %59, %60 : vector<32x1xf32>
    %62 = vector.broadcast %54 : vector<32x1xf32> to vector<32x32xf32>
    %63 = arith.subf %48, %62 : vector<32x32xf32>
    %cst_30 = arith.constant 9.99999974E-6 : f32
    %64 = vector.broadcast %cst_30 : f32 to vector<32x1xf32>
    %65 = arith.addf %61, %64 : vector<32x1xf32>
    %66 = math.rsqrt %65 : vector<32x1xf32>
    %67 = vector.broadcast %66 : vector<32x1xf32> to vector<32x32xf32>
    %68 = arith.mulf %63, %67 : vector<32x32xf32>
    %69 = vector.broadcast %49 : vector<1x32xf32> to vector<32x32xf32>
    %70 = arith.mulf %68, %69 : vector<32x32xf32>
    %71 = vector.broadcast %50 : vector<1x32xf32> to vector<32x32xf32>
    %72 = arith.addf %70, %71 : vector<32x32xf32>
    %73 = arith.truncf %72 : vector<32x32xf32> to vector<32x32xbf16>
    %c0_31 = arith.constant 0 : index
    %c0_32 = arith.constant 0 : index
    %74 = vector.load %arg6[%c0_31, %c0_32] : memref<32x32xbf16, #tpu.memory_space<vmem>>, vector<32x32xbf16>
    tpu.vector_store %arg6[%c0_31, %c0_32], %73 {strides = array<i32>} : memref<32x32xbf16, #tpu.memory_space<vmem>>, vector<32x32xbf16>,
    return
  }
  func.func @transform_0(%arg0: i32) -> (i32, i32) {
    %c0_i32 = arith.constant 0 : i32
    %c0_i32_0 = arith.constant 0 : i32
    return %arg0, %c0_i32 : i32, i32
  }
  func.func @transform_1(%arg0: i32) -> (i32, i32) {
    %c0_i32 = arith.constant 0 : i32
    %c0_i32_0 = arith.constant 0 : i32
    %c0_i32_1 = arith.constant 0 : i32
    return %c0_i32, %c0_i32_0 : i32, i32
  }
  func.func @transform_2(%arg0: i32) -> (i32, i32) {
    %c0_i32 = arith.constant 0 : i32
    %c0_i32_0 = arith.constant 0 : i32
    %c0_i32_1 = arith.constant 0 : i32
    return %c0_i32, %c0_i32_0 : i32, i32
  }
  func.func @transform_3(%arg0: i32) -> (i32, i32) {
    %c0_i32 = arith.constant 0 : i32
    %c0_i32_0 = arith.constant 0 : i32
    %c0_i32_1 = arith.constant 0 : i32
    return %c0_i32, %c0_i32_0 : i32, i32
  }
  func.func @transform_4(%arg0: i32) -> (i32, i32) {
    %c0_i32 = arith.constant 0 : i32
    %c0_i32_0 = arith.constant 0 : i32
    %c0_i32_1 = arith.constant 0 : i32
    return %c0_i32, %c0_i32_0 : i32, i32
  }
  func.func @transform_5(%arg0: i32) -> (i32, i32) {
    %c0_i32 = arith.constant 0 : i32
    %c0_i32_0 = arith.constant 0 : i32
    return %arg0, %c0_i32 : i32, i32
  }
}

module attributes {stable_mosaic.version = 11 : i64} {
  func.func @_attn_block_kernel(%arg0: i32, %arg1: memref<1x16x32xbf16, #tpu.memory_space<vmem>>, %arg2: memref<1x16x32xbf16, #tpu.memory_space<vmem>>, %arg3: memref<32x32xbf16, #tpu.memory_space<vmem>>, %arg4: memref<1x32xf32, #tpu.memory_space<vmem>>, %arg5: memref<32x64xbf16, #tpu.memory_space<vmem>>, %arg6: memref<1x64xf32, #tpu.memory_space<vmem>>, %arg7: memref<32x32xbf16, #tpu.memory_space<vmem>>, %arg8: memref<1x32xf32, #tpu.memory_space<vmem>>, %arg9: memref<1x32xf32, #tpu.memory_space<vmem>>, %arg10: memref<1x32xf32, #tpu.memory_space<vmem>>, %arg11: memref<1x16x32xbf16, #tpu.memory_space<vmem>>) attributes {dimension_semantics = [#tpu.dimension_semantics<parallel>], iteration_bounds = array<i64: 2>, scalar_prefetch = 0 : i64, scratch_operands = 0 : i64, tpu.core_type = #tpu.core_type<tc>, window_params = [{transform_indices = @transform_0, window_bounds = array<i64: 1, 16, 32>}, {transform_indices = @transform_1, window_bounds = array<i64: 1, 16, 32>}, {pipeline_mode = #tpu.pipeline_mode<synchronous>, transform_indices = @transform_2, window_bounds = array<i64: 32, 32>}, {pipeline_mode = #tpu.pipeline_mode<synchronous>, transform_indices = @transform_3, window_bounds = array<i64: 1, 32>}, {pipeline_mode = #tpu.pipeline_mode<synchronous>, transform_indices = @transform_4, window_bounds = array<i64: 32, 64>}, {pipeline_mode = #tpu.pipeline_mode<synchronous>, transform_indices = @transform_5, window_bounds = array<i64: 1, 64>}, {pipeline_mode = #tpu.pipeline_mode<synchronous>, transform_indices = @transform_6, window_bounds = array<i64: 32, 32>}, {pipeline_mode = #tpu.pipeline_mode<synchronous>, transform_indices = @transform_7, window_bounds = array<i64: 1, 32>}, {pipeline_mode = #tpu.pipeline_mode<synchronous>, transform_indices = @transform_8, window_bounds = array<i64: 1, 32>}, {pipeline_mode = #tpu.pipeline_mode<synchronous>, transform_indices = @transform_9, window_bounds = array<i64: 1, 32>}, {transform_indices = @transform_10, window_bounds = array<i64: 1, 16, 32>}]} {
    %c0 = arith.constant 0 : index
    %c0_0 = arith.constant 0 : index
    %c0_1 = arith.constant 0 : index
    %0 = vector.load %arg1[%c0, %c0_0, %c0_1] : memref<1x16x32xbf16, #tpu.memory_space<vmem>>, vector<1x16x32xbf16>
    %1 = vector.shape_cast %0 : vector<1x16x32xbf16> to vector<16x32xbf16>
    %c0_2 = arith.constant 0 : index
    %c0_3 = arith.constant 0 : index
    %c0_4 = arith.constant 0 : index
    %2 = vector.load %arg2[%c0_2, %c0_3, %c0_4] : memref<1x16x32xbf16, #tpu.memory_space<vmem>>, vector<1x16x32xbf16>
    %3 = vector.shape_cast %2 : vector<1x16x32xbf16> to vector<16x32xbf16>
    %c0_5 = arith.constant 0 : index
    %c0_6 = arith.constant 0 : index
    %4 = vector.load %arg3[%c0_5, %c0_6] : memref<32x32xbf16, #tpu.memory_space<vmem>>, vector<32x32xbf16>
    %cst = arith.constant dense<0.000000e+00> : vector<16x32xf32>
    %5 = tpu.matmul %1, %4, %cst {dimension_numbers = #tpu.dot_dimension_numbers<[1], [0], [0], [1], [0, 0, 1, 1], [], []>} : vector<16x32xbf16>, vector<32x32xbf16>, vector<16x32xf32> -> vector<16x32xf32>
    %c0_7 = arith.constant 0 : index
    %c0_8 = arith.constant 0 : index
    %6 = vector.load %arg4[%c0_7, %c0_8] : memref<1x32xf32, #tpu.memory_space<vmem>>, vector<1x32xf32>
    %7 = vector.broadcast %6 : vector<1x32xf32> to vector<16x32xf32>
    %8 = arith.addf %5, %7 : vector<16x32xf32>
    %9 = arith.truncf %8 : vector<16x32xf32> to vector<16x32xbf16>
    %c0_9 = arith.constant 0 : index
    %c0_10 = arith.constant 0 : index
    %10 = vector.load %arg5[%c0_9, %c0_10] : memref<32x64xbf16, #tpu.memory_space<vmem>>, vector<32x64xbf16>
    %cst_11 = arith.constant dense<0.000000e+00> : vector<16x64xf32>
    %11 = tpu.matmul %3, %10, %cst_11 {dimension_numbers = #tpu.dot_dimension_numbers<[1], [0], [0], [1], [0, 0, 1, 1], [], []>} : vector<16x32xbf16>, vector<32x64xbf16>, vector<16x64xf32> -> vector<16x64xf32>
    %c0_12 = arith.constant 0 : index
    %c0_13 = arith.constant 0 : index
    %12 = vector.load %arg6[%c0_12, %c0_13] : memref<1x64xf32, #tpu.memory_space<vmem>>, vector<1x64xf32>
    %13 = vector.broadcast %12 : vector<1x64xf32> to vector<16x64xf32>
    %14 = arith.addf %11, %13 : vector<16x64xf32>
    %15 = arith.truncf %14 : vector<16x64xf32> to vector<16x64xbf16>
    %16 = tpu.iota {dimensions = array<i32: 0>} : vector<16x16xi32>
    %17 = tpu.iota {dimensions = array<i32: 1>} : vector<16x16xi32>
    %18 = arith.cmpi sgt, %17, %16 : vector<16x16xi32>
    %19 = vector.extract_strided_slice %9 {offsets = [0, 0], sizes = [16, 8], strides = [1, 1]} : vector<16x32xbf16> to vector<16x8xbf16>
    %20 = vector.extract_strided_slice %15 {offsets = [0, 0], sizes = [16, 8], strides = [1, 1]} : vector<16x64xbf16> to vector<16x8xbf16>
    %21 = vector.extract_strided_slice %15 {offsets = [0, 32], sizes = [16, 8], strides = [1, 1]} : vector<16x64xbf16> to vector<16x8xbf16>
    %cst_14 = arith.constant dense<0.000000e+00> : vector<16x16xf32>
    %22 = tpu.matmul %19, %20, %cst_14 {dimension_numbers = #tpu.dot_dimension_numbers<[1], [1], [0], [0], [0, 0, 1, 0], [], []>} : vector<16x8xbf16>, vector<16x8xbf16>, vector<16x16xf32> -> vector<16x16xf32>
    %cst_15 = arith.constant 0.353553385 : f32
    %23 = vector.broadcast %cst_15 : f32 to vector<16x16xf32>
    %24 = arith.mulf %22, %23 : vector<16x16xf32>
    %cst_16 = arith.constant -1.000000e+30 : f32
    %25 = vector.broadcast %cst_16 : f32 to vector<16x16xf32>
    %26 = arith.select %18, %25, %24 : vector<16x16xi1>, vector<16x16xf32>
    %cst_17 = arith.constant dense<0xFF800000> : vector<16xf32>
    %27 = vector.multi_reduction <maximumf>, %26, %cst_17 [1] : vector<16x16xf32> to vector<16xf32>
    %28 = vector.shape_cast %27 : vector<16xf32> to vector<16x1xf32>
    %29 = vector.broadcast %28 : vector<16x1xf32> to vector<16x16xf32>
    %30 = arith.subf %26, %29 : vector<16x16xf32>
    %31 = math.exp %30 : vector<16x16xf32>
    %cst_18 = arith.constant dense<0.000000e+00> : vector<16xf32>
    %32 = vector.multi_reduction <add>, %31, %cst_18 [1] : vector<16x16xf32> to vector<16xf32>
    %33 = vector.shape_cast %32 : vector<16xf32> to vector<16x1xf32>
    %34 = tpu.reciprocal %33 {approx = true} : vector<16x1xf32> -> vector<16x1xf32>
    %35 = arith.truncf %31 : vector<16x16xf32> to vector<16x16xbf16>
    %cst_19 = arith.constant dense<0.000000e+00> : vector<16x8xf32>
    %36 = tpu.matmul %35, %21, %cst_19 {dimension_numbers = #tpu.dot_dimension_numbers<[1], [0], [0], [1], [0, 0, 1, 1], [], []>} : vector<16x16xbf16>, vector<16x8xbf16>, vector<16x8xf32> -> vector<16x8xf32>
    %37 = vector.broadcast %34 : vector<16x1xf32> to vector<16x8xf32>
    %38 = arith.mulf %36, %37 : vector<16x8xf32>
    %39 = vector.extract_strided_slice %9 {offsets = [0, 8], sizes = [16, 8], strides = [1, 1]} : vector<16x32xbf16> to vector<16x8xbf16>
    %40 = vector.extract_strided_slice %15 {offsets = [0, 8], sizes = [16, 8], strides = [1, 1]} : vector<16x64xbf16> to vector<16x8xbf16>
    %41 = vector.extract_strided_slice %15 {offsets = [0, 40], sizes = [16, 8], strides = [1, 1]} : vector<16x64xbf16> to vector<16x8xbf16>
    %cst_20 = arith.constant dense<0.000000e+00> : vector<16x16xf32>
    %42 = tpu.matmul %39, %40, %cst_20 {dimension_numbers = #tpu.dot_dimension_numbers<[1], [1], [0], [0], [0, 0, 1, 0], [], []>} : vector<16x8xbf16>, vector<16x8xbf16>, vector<16x16xf32> -> vector<16x16xf32>
    %cst_21 = arith.constant 0.353553385 : f32
    %43 = vector.broadcast %cst_21 : f32 to vector<16x16xf32>
    %44 = arith.mulf %42, %43 : vector<16x16xf32>
    %cst_22 = arith.constant -1.000000e+30 : f32
    %45 = vector.broadcast %cst_22 : f32 to vector<16x16xf32>
    %46 = arith.select %18, %45, %44 : vector<16x16xi1>, vector<16x16xf32>
    %cst_23 = arith.constant dense<0xFF800000> : vector<16xf32>
    %47 = vector.multi_reduction <maximumf>, %46, %cst_23 [1] : vector<16x16xf32> to vector<16xf32>
    %48 = vector.shape_cast %47 : vector<16xf32> to vector<16x1xf32>
    %49 = vector.broadcast %48 : vector<16x1xf32> to vector<16x16xf32>
    %50 = arith.subf %46, %49 : vector<16x16xf32>
    %51 = math.exp %50 : vector<16x16xf32>
    %cst_24 = arith.constant dense<0.000000e+00> : vector<16xf32>
    %52 = vector.multi_reduction <add>, %51, %cst_24 [1] : vector<16x16xf32> to vector<16xf32>
    %53 = vector.shape_cast %52 : vector<16xf32> to vector<16x1xf32>
    %54 = tpu.reciprocal %53 {approx = true} : vector<16x1xf32> -> vector<16x1xf32>
    %55 = arith.truncf %51 : vector<16x16xf32> to vector<16x16xbf16>
    %cst_25 = arith.constant dense<0.000000e+00> : vector<16x8xf32>
    %56 = tpu.matmul %55, %41, %cst_25 {dimension_numbers = #tpu.dot_dimension_numbers<[1], [0], [0], [1], [0, 0, 1, 1], [], []>} : vector<16x16xbf16>, vector<16x8xbf16>, vector<16x8xf32> -> vector<16x8xf32>
    %57 = vector.broadcast %54 : vector<16x1xf32> to vector<16x8xf32>
    %58 = arith.mulf %56, %57 : vector<16x8xf32>
    %59 = vector.extract_strided_slice %9 {offsets = [0, 16], sizes = [16, 8], strides = [1, 1]} : vector<16x32xbf16> to vector<16x8xbf16>
    %60 = vector.extract_strided_slice %15 {offsets = [0, 16], sizes = [16, 8], strides = [1, 1]} : vector<16x64xbf16> to vector<16x8xbf16>
    %61 = vector.extract_strided_slice %15 {offsets = [0, 48], sizes = [16, 8], strides = [1, 1]} : vector<16x64xbf16> to vector<16x8xbf16>
    %cst_26 = arith.constant dense<0.000000e+00> : vector<16x16xf32>
    %62 = tpu.matmul %59, %60, %cst_26 {dimension_numbers = #tpu.dot_dimension_numbers<[1], [1], [0], [0], [0, 0, 1, 0], [], []>} : vector<16x8xbf16>, vector<16x8xbf16>, vector<16x16xf32> -> vector<16x16xf32>
    %cst_27 = arith.constant 0.353553385 : f32
    %63 = vector.broadcast %cst_27 : f32 to vector<16x16xf32>
    %64 = arith.mulf %62, %63 : vector<16x16xf32>
    %cst_28 = arith.constant -1.000000e+30 : f32
    %65 = vector.broadcast %cst_28 : f32 to vector<16x16xf32>
    %66 = arith.select %18, %65, %64 : vector<16x16xi1>, vector<16x16xf32>
    %cst_29 = arith.constant dense<0xFF800000> : vector<16xf32>
    %67 = vector.multi_reduction <maximumf>, %66, %cst_29 [1] : vector<16x16xf32> to vector<16xf32>
    %68 = vector.shape_cast %67 : vector<16xf32> to vector<16x1xf32>
    %69 = vector.broadcast %68 : vector<16x1xf32> to vector<16x16xf32>
    %70 = arith.subf %66, %69 : vector<16x16xf32>
    %71 = math.exp %70 : vector<16x16xf32>
    %cst_30 = arith.constant dense<0.000000e+00> : vector<16xf32>
    %72 = vector.multi_reduction <add>, %71, %cst_30 [1] : vector<16x16xf32> to vector<16xf32>
    %73 = vector.shape_cast %72 : vector<16xf32> to vector<16x1xf32>
    %74 = tpu.reciprocal %73 {approx = true} : vector<16x1xf32> -> vector<16x1xf32>
    %75 = arith.truncf %71 : vector<16x16xf32> to vector<16x16xbf16>
    %cst_31 = arith.constant dense<0.000000e+00> : vector<16x8xf32>
    %76 = tpu.matmul %75, %61, %cst_31 {dimension_numbers = #tpu.dot_dimension_numbers<[1], [0], [0], [1], [0, 0, 1, 1], [], []>} : vector<16x16xbf16>, vector<16x8xbf16>, vector<16x8xf32> -> vector<16x8xf32>
    %77 = vector.broadcast %74 : vector<16x1xf32> to vector<16x8xf32>
    %78 = arith.mulf %76, %77 : vector<16x8xf32>
    %79 = vector.extract_strided_slice %9 {offsets = [0, 24], sizes = [16, 8], strides = [1, 1]} : vector<16x32xbf16> to vector<16x8xbf16>
    %80 = vector.extract_strided_slice %15 {offsets = [0, 24], sizes = [16, 8], strides = [1, 1]} : vector<16x64xbf16> to vector<16x8xbf16>
    %81 = vector.extract_strided_slice %15 {offsets = [0, 56], sizes = [16, 8], strides = [1, 1]} : vector<16x64xbf16> to vector<16x8xbf16>
    %cst_32 = arith.constant dense<0.000000e+00> : vector<16x16xf32>
    %82 = tpu.matmul %79, %80, %cst_32 {dimension_numbers = #tpu.dot_dimension_numbers<[1], [1], [0], [0], [0, 0, 1, 0], [], []>} : vector<16x8xbf16>, vector<16x8xbf16>, vector<16x16xf32> -> vector<16x16xf32>
    %cst_33 = arith.constant 0.353553385 : f32
    %83 = vector.broadcast %cst_33 : f32 to vector<16x16xf32>
    %84 = arith.mulf %82, %83 : vector<16x16xf32>
    %cst_34 = arith.constant -1.000000e+30 : f32
    %85 = vector.broadcast %cst_34 : f32 to vector<16x16xf32>
    %86 = arith.select %18, %85, %84 : vector<16x16xi1>, vector<16x16xf32>
    %cst_35 = arith.constant dense<0xFF800000> : vector<16xf32>
    %87 = vector.multi_reduction <maximumf>, %86, %cst_35 [1] : vector<16x16xf32> to vector<16xf32>
    %88 = vector.shape_cast %87 : vector<16xf32> to vector<16x1xf32>
    %89 = vector.broadcast %88 : vector<16x1xf32> to vector<16x16xf32>
    %90 = arith.subf %86, %89 : vector<16x16xf32>
    %91 = math.exp %90 : vector<16x16xf32>
    %cst_36 = arith.constant dense<0.000000e+00> : vector<16xf32>
    %92 = vector.multi_reduction <add>, %91, %cst_36 [1] : vector<16x16xf32> to vector<16xf32>
    %93 = vector.shape_cast %92 : vector<16xf32> to vector<16x1xf32>
    %94 = tpu.reciprocal %93 {approx = true} : vector<16x1xf32> -> vector<16x1xf32>
    %95 = arith.truncf %91 : vector<16x16xf32> to vector<16x16xbf16>
    %cst_37 = arith.constant dense<0.000000e+00> : vector<16x8xf32>
    %96 = tpu.matmul %95, %81, %cst_37 {dimension_numbers = #tpu.dot_dimension_numbers<[1], [0], [0], [1], [0, 0, 1, 1], [], []>} : vector<16x16xbf16>, vector<16x8xbf16>, vector<16x8xf32> -> vector<16x8xf32>
    %97 = vector.broadcast %94 : vector<16x1xf32> to vector<16x8xf32>
    %98 = arith.mulf %96, %97 : vector<16x8xf32>
    %99 = tpu.concatenate %38, %58, %78, %98 in 1 : vector<16x8xf32>, vector<16x8xf32>, vector<16x8xf32>, vector<16x8xf32> -> vector<16x32xf32>
    %100 = arith.truncf %99 : vector<16x32xf32> to vector<16x32xbf16>
    %c0_38 = arith.constant 0 : index
    %c0_39 = arith.constant 0 : index
    %101 = vector.load %arg7[%c0_38, %c0_39] : memref<32x32xbf16, #tpu.memory_space<vmem>>, vector<32x32xbf16>
    %cst_40 = arith.constant dense<0.000000e+00> : vector<16x32xf32>
    %102 = tpu.matmul %100, %101, %cst_40 {dimension_numbers = #tpu.dot_dimension_numbers<[1], [0], [0], [1], [0, 0, 1, 1], [], []>} : vector<16x32xbf16>, vector<32x32xbf16>, vector<16x32xf32> -> vector<16x32xf32>
    %c0_41 = arith.constant 0 : index
    %c0_42 = arith.constant 0 : index
    %103 = vector.load %arg8[%c0_41, %c0_42] : memref<1x32xf32, #tpu.memory_space<vmem>>, vector<1x32xf32>
    %104 = vector.broadcast %103 : vector<1x32xf32> to vector<16x32xf32>
    %105 = arith.addf %102, %104 : vector<16x32xf32>
    %106 = arith.extf %1 : vector<16x32xbf16> to vector<16x32xf32>
    %107 = arith.addf %106, %105 : vector<16x32xf32>
    %c0_43 = arith.constant 0 : index
    %c0_44 = arith.constant 0 : index
    %108 = vector.load %arg9[%c0_43, %c0_44] : memref<1x32xf32, #tpu.memory_space<vmem>>, vector<1x32xf32>
    %c0_45 = arith.constant 0 : index
    %c0_46 = arith.constant 0 : index
    %109 = vector.load %arg10[%c0_45, %c0_46] : memref<1x32xf32, #tpu.memory_space<vmem>>, vector<1x32xf32>
    %cst_47 = arith.constant dense<0.000000e+00> : vector<16xf32>
    %110 = vector.multi_reduction <add>, %107, %cst_47 [1] : vector<16x32xf32> to vector<16xf32>
    %111 = vector.shape_cast %110 : vector<16xf32> to vector<16x1xf32>
    %cst_48 = arith.constant 3.200000e+01 : f32
    %112 = vector.broadcast %cst_48 : f32 to vector<16x1xf32>
    %113 = arith.divf %111, %112 : vector<16x1xf32>
    %114 = vector.broadcast %113 : vector<16x1xf32> to vector<16x32xf32>
    %115 = arith.subf %107, %114 : vector<16x32xf32>
    %116 = arith.mulf %115, %115 : vector<16x32xf32>
    %cst_49 = arith.constant dense<0.000000e+00> : vector<16xf32>
    %117 = vector.multi_reduction <add>, %116, %cst_49 [1] : vector<16x32xf32> to vector<16xf32>
    %118 = vector.shape_cast %117 : vector<16xf32> to vector<16x1xf32>
    %cst_50 = arith.constant 3.200000e+01 : f32
    %119 = vector.broadcast %cst_50 : f32 to vector<16x1xf32>
    %120 = arith.divf %118, %119 : vector<16x1xf32>
    %121 = vector.broadcast %113 : vector<16x1xf32> to vector<16x32xf32>
    %122 = arith.subf %107, %121 : vector<16x32xf32>
    %cst_51 = arith.constant 9.99999974E-6 : f32
    %123 = vector.broadcast %cst_51 : f32 to vector<16x1xf32>
    %124 = arith.addf %120, %123 : vector<16x1xf32>
    %125 = math.rsqrt %124 : vector<16x1xf32>
    %126 = vector.broadcast %125 : vector<16x1xf32> to vector<16x32xf32>
    %127 = arith.mulf %122, %126 : vector<16x32xf32>
    %128 = vector.broadcast %108 : vector<1x32xf32> to vector<16x32xf32>
    %129 = arith.mulf %127, %128 : vector<16x32xf32>
    %130 = vector.broadcast %109 : vector<1x32xf32> to vector<16x32xf32>
    %131 = arith.addf %129, %130 : vector<16x32xf32>
    %132 = arith.truncf %131 : vector<16x32xf32> to vector<16x32xbf16>
    %c0_52 = arith.constant 0 : index
    %c0_53 = arith.constant 0 : index
    %c0_54 = arith.constant 0 : index
    %133 = vector.load %arg11[%c0_52, %c0_53, %c0_54] : memref<1x16x32xbf16, #tpu.memory_space<vmem>>, vector<1x16x32xbf16>
    %134 = vector.shape_cast %133 : vector<1x16x32xbf16> to vector<16x32xbf16>
    %135 = vector.shape_cast %132 : vector<16x32xbf16> to vector<1x16x32xbf16>
    tpu.vector_store %arg11[%c0_52, %c0_53, %c0_54], %135 {strides = array<i32>} : memref<1x16x32xbf16, #tpu.memory_space<vmem>>, vector<1x16x32xbf16>,
    return
  }
  func.func @transform_0(%arg0: i32) -> (i32, i32, i32) {
    %c0_i32 = arith.constant 0 : i32
    %c0_i32_0 = arith.constant 0 : i32
    %c0_i32_1 = arith.constant 0 : i32
    return %arg0, %c0_i32, %c0_i32_0 : i32, i32, i32
  }
  func.func @transform_1(%arg0: i32) -> (i32, i32, i32) {
    %c0_i32 = arith.constant 0 : i32
    %c0_i32_0 = arith.constant 0 : i32
    %c0_i32_1 = arith.constant 0 : i32
    return %arg0, %c0_i32, %c0_i32_0 : i32, i32, i32
  }
  func.func @transform_2(%arg0: i32) -> (i32, i32) {
    %c0_i32 = arith.constant 0 : i32
    %c0_i32_0 = arith.constant 0 : i32
    %c0_i32_1 = arith.constant 0 : i32
    return %c0_i32, %c0_i32_0 : i32, i32
  }
  func.func @transform_3(%arg0: i32) -> (i32, i32) {
    %c0_i32 = arith.constant 0 : i32
    %c0_i32_0 = arith.constant 0 : i32
    %c0_i32_1 = arith.constant 0 : i32
    return %c0_i32, %c0_i32_0 : i32, i32
  }
  func.func @transform_4(%arg0: i32) -> (i32, i32) {
    %c0_i32 = arith.constant 0 : i32
    %c0_i32_0 = arith.constant 0 : i32
    %c0_i32_1 = arith.constant 0 : i32
    return %c0_i32, %c0_i32_0 : i32, i32
  }
  func.func @transform_5(%arg0: i32) -> (i32, i32) {
    %c0_i32 = arith.constant 0 : i32
    %c0_i32_0 = arith.constant 0 : i32
    %c0_i32_1 = arith.constant 0 : i32
    return %c0_i32, %c0_i32_0 : i32, i32
  }
  func.func @transform_6(%arg0: i32) -> (i32, i32) {
    %c0_i32 = arith.constant 0 : i32
    %c0_i32_0 = arith.constant 0 : i32
    %c0_i32_1 = arith.constant 0 : i32
    return %c0_i32, %c0_i32_0 : i32, i32
  }
  func.func @transform_7(%arg0: i32) -> (i32, i32) {
    %c0_i32 = arith.constant 0 : i32
    %c0_i32_0 = arith.constant 0 : i32
    %c0_i32_1 = arith.constant 0 : i32
    return %c0_i32, %c0_i32_0 : i32, i32
  }
  func.func @transform_8(%arg0: i32) -> (i32, i32) {
    %c0_i32 = arith.constant 0 : i32
    %c0_i32_0 = arith.constant 0 : i32
    %c0_i32_1 = arith.constant 0 : i32
    return %c0_i32, %c0_i32_0 : i32, i32
  }
  func.func @transform_9(%arg0: i32) -> (i32, i32) {
    %c0_i32 = arith.constant 0 : i32
    %c0_i32_0 = arith.constant 0 : i32
    %c0_i32_1 = arith.constant 0 : i32
    return %c0_i32, %c0_i32_0 : i32, i32
  }
  func.func @transform_10(%arg0: i32) -> (i32, i32, i32) {
    %c0_i32 = arith.constant 0 : i32
    %c0_i32_0 = arith.constant 0 : i32
    %c0_i32_1 = arith.constant 0 : i32
    return %arg0, %c0_i32, %c0_i32_0 : i32, i32, i32
  }
}

module attributes {stable_mosaic.version = 11 : i64} {
  func.func @_layernorm_kernel(%arg0: i32, %arg1: memref<32x32xbf16, #tpu.memory_space<vmem>>, %arg2: memref<1x32xf32, #tpu.memory_space<vmem>>, %arg3: memref<1x32xf32, #tpu.memory_space<vmem>>, %arg4: memref<32x32xbf16, #tpu.memory_space<vmem>>) attributes {dimension_semantics = [#tpu.dimension_semantics<parallel>], iteration_bounds = array<i64: 1>, scalar_prefetch = 0 : i64, scratch_operands = 0 : i64, tpu.core_type = #tpu.core_type<tc>, window_params = [{transform_indices = @transform_0, window_bounds = array<i64: 32, 32>}, {pipeline_mode = #tpu.pipeline_mode<synchronous>, transform_indices = @transform_1, window_bounds = array<i64: 1, 32>}, {pipeline_mode = #tpu.pipeline_mode<synchronous>, transform_indices = @transform_2, window_bounds = array<i64: 1, 32>}, {transform_indices = @transform_3, window_bounds = array<i64: 32, 32>}]} {
    %c0 = arith.constant 0 : index
    %c0_0 = arith.constant 0 : index
    %0 = vector.load %arg1[%c0, %c0_0] : memref<32x32xbf16, #tpu.memory_space<vmem>>, vector<32x32xbf16>
    %1 = arith.extf %0 : vector<32x32xbf16> to vector<32x32xf32>
    %c0_1 = arith.constant 0 : index
    %c0_2 = arith.constant 0 : index
    %2 = vector.load %arg2[%c0_1, %c0_2] : memref<1x32xf32, #tpu.memory_space<vmem>>, vector<1x32xf32>
    %c0_3 = arith.constant 0 : index
    %c0_4 = arith.constant 0 : index
    %3 = vector.load %arg3[%c0_3, %c0_4] : memref<1x32xf32, #tpu.memory_space<vmem>>, vector<1x32xf32>
    %cst = arith.constant dense<0.000000e+00> : vector<32xf32>
    %4 = vector.multi_reduction <add>, %1, %cst [1] : vector<32x32xf32> to vector<32xf32>
    %5 = vector.shape_cast %4 : vector<32xf32> to vector<32x1xf32>
    %cst_5 = arith.constant 3.200000e+01 : f32
    %6 = vector.broadcast %cst_5 : f32 to vector<32x1xf32>
    %7 = arith.divf %5, %6 : vector<32x1xf32>
    %8 = vector.broadcast %7 : vector<32x1xf32> to vector<32x32xf32>
    %9 = arith.subf %1, %8 : vector<32x32xf32>
    %10 = arith.mulf %9, %9 : vector<32x32xf32>
    %cst_6 = arith.constant dense<0.000000e+00> : vector<32xf32>
    %11 = vector.multi_reduction <add>, %10, %cst_6 [1] : vector<32x32xf32> to vector<32xf32>
    %12 = vector.shape_cast %11 : vector<32xf32> to vector<32x1xf32>
    %cst_7 = arith.constant 3.200000e+01 : f32
    %13 = vector.broadcast %cst_7 : f32 to vector<32x1xf32>
    %14 = arith.divf %12, %13 : vector<32x1xf32>
    %15 = vector.broadcast %7 : vector<32x1xf32> to vector<32x32xf32>
    %16 = arith.subf %1, %15 : vector<32x32xf32>
    %cst_8 = arith.constant 9.99999974E-6 : f32
    %17 = vector.broadcast %cst_8 : f32 to vector<32x1xf32>
    %18 = arith.addf %14, %17 : vector<32x1xf32>
    %19 = math.rsqrt %18 : vector<32x1xf32>
    %20 = vector.broadcast %19 : vector<32x1xf32> to vector<32x32xf32>
    %21 = arith.mulf %16, %20 : vector<32x32xf32>
    %22 = vector.broadcast %2 : vector<1x32xf32> to vector<32x32xf32>
    %23 = arith.mulf %21, %22 : vector<32x32xf32>
    %24 = vector.broadcast %3 : vector<1x32xf32> to vector<32x32xf32>
    %25 = arith.addf %23, %24 : vector<32x32xf32>
    %26 = arith.truncf %25 : vector<32x32xf32> to vector<32x32xbf16>
    %c0_9 = arith.constant 0 : index
    %c0_10 = arith.constant 0 : index
    %27 = vector.load %arg4[%c0_9, %c0_10] : memref<32x32xbf16, #tpu.memory_space<vmem>>, vector<32x32xbf16>
    tpu.vector_store %arg4[%c0_9, %c0_10], %26 {strides = array<i32>} : memref<32x32xbf16, #tpu.memory_space<vmem>>, vector<32x32xbf16>,
    return
  }
  func.func @transform_0(%arg0: i32) -> (i32, i32) {
    %c0_i32 = arith.constant 0 : i32
    %c0_i32_0 = arith.constant 0 : i32
    return %arg0, %c0_i32 : i32, i32
  }
  func.func @transform_1(%arg0: i32) -> (i32, i32) {
    %c0_i32 = arith.constant 0 : i32
    %c0_i32_0 = arith.constant 0 : i32
    %c0_i32_1 = arith.constant 0 : i32
    return %c0_i32, %c0_i32_0 : i32, i32
  }
  func.func @transform_2(%arg0: i32) -> (i32, i32) {
    %c0_i32 = arith.constant 0 : i32
    %c0_i32_0 = arith.constant 0 : i32
    %c0_i32_1 = arith.constant 0 : i32
    return %c0_i32, %c0_i32_0 : i32, i32
  }
  func.func @transform_3(%arg0: i32) -> (i32, i32) {
    %c0_i32 = arith.constant 0 : i32
    %c0_i32_0 = arith.constant 0 : i32
    return %arg0, %c0_i32 : i32, i32
  }
}

</mosaic_0001>

<llo_original>
// kernel: informer_forward.11
$region0: #{informer_forward.11}
  #allocation0 [shape = 'u32[]', space=smem, size = 0x4, offset = 0x4, fixed_abs, tag = 'smem constant byte address 0x4 - core index']
  #allocation1 [shape = 'u32[144,128]{1,0:T(1,128)}', space=vmem, size = 0x12000, scoped, tag = 'internal scratch']
  %s0 = inlined_call_operand.vmem [shape: f32[2,16,4], index: 0, kind: input, shape index: {}]
  %s1 = inlined_call_operand.vmem [shape: bf16[4,32], index: 1, kind: input, shape index: {}]
  %s2 = inlined_call_operand.vmem [shape: bf16[4,32], index: 2, kind: input, shape index: {}]
  %s3 = inlined_call_operand.vmem [shape: bf16[4,32], index: 3, kind: input, shape index: {}]
  %s4 = inlined_call_operand.vmem [shape: f32[16,32], index: 4, kind: input, shape index: {}]
  %s5 = inlined_call_operand.vmem [shape: bf16[2,16,32], index: 5, kind: output, shape index: {}]
  %s6 = sld [smem:[#allocation0]]
  $region53: #{informer_forward.11} parent=0
    _
  %s8 = ssub.s32 1, %s6
  %s9 = scalar_select 0, %s8, %s6
  loop: start=0, step=1, limit=4
  $region2: #{informer_forward.11} parent=0 // loop_pre_header
    _
  $region3: #{informer_forward.11} parent=0 // loop_header
    %s11 = sphi 0, %s15
    %p12 = scmp.ge.s32.totalorder %s11, 4
    %s21 = sphi 0, %s23
    %s24 = sphi 0, %s21
    %s25 = sphi 0, %s24
    %s41 = sphi 0, %s25
    %s45 = sphi 0, %s45
    %s47 = sphi 0, %s45
    %s48 = sphi 0, %s47
    %s62 = sphi 0, %s48
    %s66 = sphi 0, %s66
    %s68 = sphi 0, %s66
    %s69 = sphi 0, %s68
    %s83 = sphi 0, %s69
    %s87 = sphi 0, %s87
    %s89 = sphi 0, %s87
    %s90 = sphi 0, %s89
    %s104 = sphi 0, %s90
    %s108 = sphi 0, %s108
    %s110 = sphi 0, %s108
    %s111 = sphi 0, %s110
    %s125 = sphi 0, %s111
    %s131 = sphi 0, %s133
    %s134 = sphi 0, %s131
    %s135 = sphi 0, %s134
    %s151 = sphi 0, %s135
  $region4: #{informer_forward.11} parent=0 // loop_header_branch
    %14 = sbr.rel (%p12) target = $region8
  $region5: #{informer_forward.11} parent=0 // loop_body
    %s16 = ssub.s32 %s11, 1
    %s17 = ssub.s32 %s11, 2
    %s18 = sadd.s32 %s11, 1
    %s19 = ssub.s32 %s11, %s18
    %p20 = scmp.eq.s32.totalorder %s19, 0
    %s22 = sadd.s32 %s21, 1
    %s23 = scalar_select %p20, %s21, %s22
    %p26 = pneg %p20
    %p27 = scmp.eq.s32.totalorder %s11, 1
    %p28 = por %p26, %p27
    %p29 = scmp.ne.s32.totalorder %s21, %s24
    %p30 = scmp.eq.s32.totalorder %s11, 0
    %p31 = por %p29, %p30
    %p32 = scmp.ne.s32.totalorder %s21, %s24
    %p33 = scmp.eq.s32.totalorder %s16, 1
    %p34 = por %p32, %p33
    %p35 = scmp.ne.s32.totalorder %s24, %s25
    %p36 = scmp.eq.s32.totalorder %s16, 0
    %p37 = por %p35, %p36
    %p38 = scmp.ne.s32.totalorder %s24, %s25
    %p39 = scmp.eq.s32.totalorder %s17, 1
    %p40 = por %p38, %p39
    %p42 = scmp.ne.s32.totalorder %s25, %s41
    %p43 = scmp.eq.s32.totalorder %s17, 0
    %p44 = por %p42, %p43
    %s46 = sadd.s32 %s45, 1
    %p49 = scmp.eq.s32.totalorder %s11, 1
    %p50 = scmp.ne.s32.totalorder %s45, %s47
    %p51 = scmp.eq.s32.totalorder %s11, 0
    %p52 = por %p50, %p51
    %p53 = scmp.ne.s32.totalorder %s45, %s47
    %p54 = scmp.eq.s32.totalorder %s16, 1
    %p55 = por %p53, %p54
    %p56 = scmp.ne.s32.totalorder %s47, %s48
    %p57 = scmp.eq.s32.totalorder %s16, 0
    %p58 = por %p56, %p57
    %p59 = scmp.ne.s32.totalorder %s47, %s48
    %p60 = scmp.eq.s32.totalorder %s17, 1
    %p61 = por %p59, %p60
    %p63 = scmp.ne.s32.totalorder %s48, %s62
    %p64 = scmp.eq.s32.totalorder %s17, 0
    %p65 = por %p63, %p64
    %s67 = sadd.s32 %s66, 1
    %p70 = scmp.eq.s32.totalorder %s11, 1
    %p71 = scmp.ne.s32.totalorder %s66, %s68
    %p72 = scmp.eq.s32.totalorder %s11, 0
    %p73 = por %p71, %p72
    %p74 = scmp.ne.s32.totalorder %s66, %s68
    %p75 = scmp.eq.s32.totalorder %s16, 1
    %p76 = por %p74, %p75
    %p77 = scmp.ne.s32.totalorder %s68, %s69
    %p78 = scmp.eq.s32.totalorder %s16, 0
    %p79 = por %p77, %p78
    %p80 = scmp.ne.s32.totalorder %s68, %s69
    %p81 = scmp.eq.s32.totalorder %s17, 1
    %p82 = por %p80, %p81
    %p84 = scmp.ne.s32.totalorder %s69, %s83
    %p85 = scmp.eq.s32.totalorder %s17, 0
    %p86 = por %p84, %p85
    %s88 = sadd.s32 %s87, 1
    %p91 = scmp.eq.s32.totalorder %s11, 1
    %p92 = scmp.ne.s32.totalorder %s87, %s89
    %p93 = scmp.eq.s32.totalorder %s11, 0
    %p94 = por %p92, %p93
    %p95 = scmp.ne.s32.totalorder %s87, %s89
    %p96 = scmp.eq.s32.totalorder %s16, 1
    %p97 = por %p95, %p96
    %p98 = scmp.ne.s32.totalorder %s89, %s90
    %p99 = scmp.eq.s32.totalorder %s16, 0
    %p100 = por %p98, %p99
    %p101 = scmp.ne.s32.totalorder %s89, %s90
    %p102 = scmp.eq.s32.totalorder %s17, 1
    %p103 = por %p101, %p102
    %p105 = scmp.ne.s32.totalorder %s90, %s104
    %p106 = scmp.eq.s32.totalorder %s17, 0
    %p107 = por %p105, %p106
    %s109 = sadd.s32 %s108, 1
    %p112 = scmp.eq.s32.totalorder %s11, 1
    %p113 = scmp.ne.s32.totalorder %s108, %s110
    %p114 = scmp.eq.s32.totalorder %s11, 0
    %p115 = por %p113, %p114
    %p116 = scmp.ne.s32.totalorder %s108, %s110
    %p117 = scmp.eq.s32.totalorder %s16, 1
    %p118 = por %p116, %p117
    %p119 = scmp.ne.s32.totalorder %s110, %s111
    %p120 = scmp.eq.s32.totalorder %s16, 0
    %p121 = por %p119, %p120
    %p122 = scmp.ne.s32.totalorder %s110, %s111
    %p123 = scmp.eq.s32.totalorder %s17, 1
    %p124 = por %p122, %p123
    %p126 = scmp.ne.s32.totalorder %s111, %s125
    %p127 = scmp.eq.s32.totalorder %s17, 0
    %p128 = por %p126, %p127
    %s129 = ssub.s32 %s11, %s18
    %p130 = scmp.eq.s32.totalorder %s129, 0
    %s132 = sadd.s32 %s131, 1
    %s133 = scalar_select %p130, %s131, %s132
    %p136 = pneg %p130
    %p137 = scmp.eq.s32.totalorder %s11, 1
    %p138 = por %p136, %p137
    %p139 = scmp.ne.s32.totalorder %s131, %s134
    %p140 = scmp.eq.s32.totalorder %s11, 0
    %p141 = por %p139, %p140
    %p142 = scmp.ne.s32.totalorder %s131, %s134
    %p143 = scmp.eq.s32.totalorder %s16, 1
    %p144 = por %p142, %p143
    %p145 = scmp.ne.s32.totalorder %s134, %s135
    %p146 = scmp.eq.s32.totalorder %s16, 0
    %p147 = por %p145, %p146
    %p148 = scmp.ne.s32.totalorder %s134, %s135
    %p149 = scmp.eq.s32.totalorder %s17, 1
    %p150 = por %p148, %p149
    %p152 = scmp.ne.s32.totalorder %s135, %s151
    %p153 = scmp.eq.s32.totalorder %s17, 0
    %p154 = por %p152, %p153
    %p155 = scmp.le.s32.totalorder 1, %s11
    %p156 = scmp.lt.s32.totalorder %s11, 3
    %p157 = pnand %p155, %p156
    %p158 = pneg %p157
    // Predicated region
    $region9: #{informer_forward.11} parent=5 // pred_check
      _
    $region10: #{informer_forward.11} parent=5 // pred_check_branch
      %160 = sbr.rel (%p157) target = $region12
    $region11: #{informer_forward.11} parent=5 // pred_region
      %s161 = ssub.s32 %s11, 1
      // Predicated region
      $region13: #{informer_forward.11} parent=11 // pred_check
        %p162 = pneg %p58
      $region14: #{informer_forward.11} parent=11 // pred_check_branch
        %164 = sbr.rel (%p162) target = $region16
      $region15: #{informer_forward.11} parent=11 // pred_region
        _
      $region16: #{informer_forward.11} parent=11 // pred_fallthru
        _
      // Predicated region
      $region17: #{informer_forward.11} parent=11 // pred_check
        %p165 = pneg %p79
      $region18: #{informer_forward.11} parent=11 // pred_check_branch
        %167 = sbr.rel (%p165) target = $region20
      $region19: #{informer_forward.11} parent=11 // pred_region
        _
      $region20: #{informer_forward.11} parent=11 // pred_fallthru
        _
      // Predicated region
      $region21: #{informer_forward.11} parent=11 // pred_check
        %p168 = pneg %p100
      $region22: #{informer_forward.11} parent=11 // pred_check_branch
        %170 = sbr.rel (%p168) target = $region24
      $region23: #{informer_forward.11} parent=11 // pred_region
        _
      $region24: #{informer_forward.11} parent=11 // pred_fallthru
        _
      // Predicated region
      $region25: #{informer_forward.11} parent=11 // pred_check
        %p171 = pneg %p121
      $region26: #{informer_forward.11} parent=11 // pred_check_branch
        %173 = sbr.rel (%p171) target = $region28
      $region27: #{informer_forward.11} parent=11 // pred_region
        _
      $region28: #{informer_forward.11} parent=11 // pred_fallthru
        _
    $region12: #{informer_forward.11} parent=5 // pred_fallthru
      _
    %p174 = scmp.lt.s32.totalorder %s11, 2
    // Predicated region
    $region29: #{informer_forward.11} parent=5 // pred_check
      %p175 = pneg %p174
    $region30: #{informer_forward.11} parent=5 // pred_check_branch
      %177 = sbr.rel (%p175) target = $region32
    $region31: #{informer_forward.11} parent=5 // pred_region
      // Predicated region
      $region33: #{informer_forward.11} parent=31 // pred_check
        %p178 = pneg %p31
      $region34: #{informer_forward.11} parent=31 // pred_check_branch
        %180 = sbr.rel (%p178) target = $region36
      $region35: #{informer_forward.11} parent=31 // pred_region
        %p181 = scmp.lt.s32.totalorder %s11, 1
        %s182 = scalar_select %p181, %s11, 1
        %s183 = smul.addr %s182, 2
        %s184 = smul.addr %s183, 8
        %s185 = scalar_lea.vmem %s0, %s184
      $region36: #{informer_forward.11} parent=31 // pred_fallthru
        _
    $region32: #{informer_forward.11} parent=5 // pred_fallthru
      _
    %p186 = scmp.le.s32.totalorder 1, %s11
    %p187 = scmp.lt.s32.totalorder %s11, 3
    %p188 = pnand %p186, %p187
    %p189 = pneg %p188
    // Predicated region
    $region37: #{informer_forward.11} parent=5 // pred_check
      _
    $region38: #{informer_forward.11} parent=5 // pred_check_branch
      %191 = sbr.rel (%p188) target = $region40
    $region39: #{informer_forward.11} parent=5 // pred_region
      %s192 = ssub.s32 %s11, 1
      %p193 = scmp.lt.s32.totalorder %s16, 1
      %s194 = scalar_select %p193, %s16, 1
      %s195 = smul.addr %s194, 2
      %s196 = smul.addr %s195, 8
      %s197 = scalar_lea.vmem %s0, %s196
      %p198 = pneg %p37
      %p199 = pneg %p34
      %p200 = pneg %p58
      %p201 = pneg %p55
      %p202 = pneg %p79
      %p203 = pneg %p76
      %p204 = pneg %p100
      %p205 = pneg %p97
      %p206 = pneg %p121
      %p207 = pneg %p118
      %p208 = pneg %p147
      %p209 = pneg %p144
      %p210 = scmp.lt.s32.totalorder %s16, 1
      %s211 = scalar_select %p210, %s16, 1
      %s212 = smul.addr %s211, 2
      %s213 = smul.addr %s212, 4
      %s214 = scalar_lea.vmem %s5, %s213
      %p215 = scmp.lt.s32.totalorder %s16, 1
      %s216 = scalar_select %p215, %s16, 1
      %s217 = smul.addr %s216, 2
      %s218 = smul.addr %s217, 8
      %s219 = scalar_lea.vmem %s0, %s218
      %p220 = scmp.lt.s32.totalorder %s16, 1
      %s221 = scalar_select %p220, %s16, 1
      %s222 = smul.addr %s221, 2
      %s223 = smul.addr %s222, 4
      %s224 = scalar_lea.vmem %s5, %s223
      %v226 = vld [vmem:[%s219] sm:$0xff]
      %v227 = vld [vmem:[%s219 + $0x8] sm:$0xff]
      %v229 = vrot.slane %v227, 7
      %vm232 = vcmask 1040384
      %v233 = vrot.slane %v226, 7
      %v234 = vsel %vm232, %v233, %v229
      %v237 = vsel %vm232, %v229, %v233
      %vm238 = vcmask 1046528
      %v239 = vrot.slane %v226, 1
      %v240 = vrot.slane %v227, 1
      %v241 = vsel %vm238, %v239, %v240
      %v245 = vsel %vm238, %v240, %v239
      %v246 = vpack.c.bf16 %v234, %v237
      %v247 = vld [vmem:[%s1] sm:$0x3]
      %v248 = vpack.c.bf16 %v227, %v226
      %v249 = vld [vmem:[%s2] sm:$0x3]
      %vm250 = vcmask 31744
      %v252 = vsel %vm250, %v248, 0
      %vm254 = vcmask 1041408
      %v256 = vsel %vm254, %v249, 0
      %258 = vmatprep.subr.bf16.mxu0 0
      %259 = vmatpush1.bf16.msra.mxu0 %v256
      %260 = vmatprep.subr.bf16.mxu0 0
      %261 = vmatpush1.bf16.msra.mxu0 0
      %262 = vmatprep.subr.bf16.mxu0 0
      %263 = vmatpush1.bf16.msra.mxu0 0
      %264 = vmatprep.subr.bf16.mxu0 0
      %265 = vmatpush1.bf16.msra.mxu0 0
      %266 = vmatprep.subr.bf16.mxu0 0
      %267 = vmatpush1.bf16.msra.mxu0 0
      %268 = vmatprep.subr.bf16.mxu0 0
      %269 = vmatpush1.bf16.msra.mxu0 0
      %270 = vmatprep.subr.bf16.mxu0 0
      %271 = vmatpush1.bf16.msra.mxu0 0
      %272 = vmatprep.subr.bf16.mxu0 0
      %273 = vmatpush1.bf16.msra.mxu0 0
      %274 = vmatprep.subr.bf16.mxu0 0
      %275 = vmatpush1.bf16.msra.mxu0 0
      %276 = vmatprep.subr.bf16.mxu0 0
      %277 = vmatpush1.bf16.msra.mxu0 0
      %278 = vmatprep.subr.bf16.mxu0 0
      %279 = vmatpush1.bf16.msra.mxu0 0
      %280 = vmatprep.subr.bf16.mxu0 0
      %281 = vmatpush1.bf16.msra.mxu0 0
      %282 = vmatprep.subr.bf16.mxu0 0
      %283 = vmatpush1.bf16.msra.mxu0 0
      %284 = vmatprep.subr.bf16.mxu0 0
      %285 = vmatpush1.bf16.msra.mxu0 0
      %286 = vmatprep.subr.bf16.mxu0 0
      %287 = vmatpush1.bf16.msra.mxu0 0
      %288 = vmatprep.subr.bf16.mxu0 0
      %289 = vmatpush1.bf16.msra.mxu0 0
      %290 = vmatprep.mubr.bf16.mxu0 0
      %291 = vmatmul.mubr.bf16.gmra.mrb[0].mxu0 %v252
      %v292 = vpop.f32.mrb[0].mxu0
      %v293 = vadd.f32 0.0, %v292
      %v294 = vpop.f32.mrb[0].mxu0
      %v295 = vpop.f32.mrb[0].mxu0
      %v296 = vadd.f32 0.0, %v295
      %v297 = vpop.f32.mrb[0].mxu0
      %298 = vdwg.mxu0
      %v300 = vsel %vm250, %v246, 0
      %v303 = vsel %vm254, %v247, 0
      %305 = vmatprep.subr.bf16.mxu0 0
      %306 = vmatpush1.bf16.msra.mxu0 %v303
      %307 = vmatprep.subr.bf16.mxu0 0
      %308 = vmatpush1.bf16.msra.mxu0 0
      %309 = vmatprep.subr.bf16.mxu0 0
      %310 = vmatpush1.bf16.msra.mxu0 0
      %311 = vmatprep.subr.bf16.mxu0 0
      %312 = vmatpush1.bf16.msra.mxu0 0
      %313 = vmatprep.subr.bf16.mxu0 0
      %314 = vmatpush1.bf16.msra.mxu0 0
      %315 = vmatprep.subr.bf16.mxu0 0
      %316 = vmatpush1.bf16.msra.mxu0 0
      %317 = vmatprep.subr.bf16.mxu0 0
      %318 = vmatpush1.bf16.msra.mxu0 0
      %319 = vmatprep.subr.bf16.mxu0 0
      %320 = vmatpush1.bf16.msra.mxu0 0
      %321 = vmatprep.subr.bf16.mxu0 0
      %322 = vmatpush1.bf16.msra.mxu0 0
      %323 = vmatprep.subr.bf16.mxu0 0
      %324 = vmatpush1.bf16.msra.mxu0 0
      %325 = vmatprep.subr.bf16.mxu0 0
      %326 = vmatpush1.bf16.msra.mxu0 0
      %327 = vmatprep.subr.bf16.mxu0 0
      %328 = vmatpush1.bf16.msra.mxu0 0
      %329 = vmatprep.subr.bf16.mxu0 0
      %330 = vmatpush1.bf16.msra.mxu0 0
      %331 = vmatprep.subr.bf16.mxu0 0
      %332 = vmatpush1.bf16.msra.mxu0 0
      %333 = vmatprep.subr.bf16.mxu0 0
      %334 = vmatpush1.bf16.msra.mxu0 0
      %335 = vmatprep.subr.bf16.mxu0 0
      %336 = vmatpush1.bf16.msra.mxu0 0
      %337 = vmatprep.mubr.bf16.mxu0 0
      %338 = vmatmul.mubr.bf16.gmra.mrb[0].mxu0 %v300
      %v339 = vpop.f32.mrb[0].mxu0
      %v340 = vadd.f32 %v293, %v339
      %v341 = vpop.f32.mrb[0].mxu0
      %v342 = vpop.f32.mrb[0].mxu0
      %v343 = vadd.f32 %v296, %v342
      %v344 = vpop.f32.mrb[0].mxu0
      %345 = vdwg.mxu0
      %v346 = vpack.c.bf16 %v245, %v241
      %v347 = vld [vmem:[%s3] sm:$0x3]
      %v349 = vsel %vm250, %v346, 0
      %v352 = vsel %vm254, %v347, 0
      %354 = vmatprep.subr.bf16.mxu0 0
      %355 = vmatpush1.bf16.msra.mxu0 %v352
      %356 = vmatprep.subr.bf16.mxu0 0
      %357 = vmatpush1.bf16.msra.mxu0 0
      %358 = vmatprep.subr.bf16.mxu0 0
      %359 = vmatpush1.bf16.msra.mxu0 0
      %360 = vmatprep.subr.bf16.mxu0 0
      %361 = vmatpush1.bf16.msra.mxu0 0
      %362 = vmatprep.subr.bf16.mxu0 0
      %363 = vmatpush1.bf16.msra.mxu0 0
      %364 = vmatprep.subr.bf16.mxu0 0
      %365 = vmatpush1.bf16.msra.mxu0 0
      %366 = vmatprep.subr.bf16.mxu0 0
      %367 = vmatpush1.bf16.msra.mxu0 0
      %368 = vmatprep.subr.bf16.mxu0 0
      %369 = vmatpush1.bf16.msra.mxu0 0
      %370 = vmatprep.subr.bf16.mxu0 0
      %371 = vmatpush1.bf16.msra.mxu0 0
      %372 = vmatprep.subr.bf16.mxu0 0
      %373 = vmatpush1.bf16.msra.mxu0 0
      %374 = vmatprep.subr.bf16.mxu0 0
      %375 = vmatpush1.bf16.msra.mxu0 0
      %376 = vmatprep.subr.bf16.mxu0 0
      %377 = vmatpush1.bf16.msra.mxu0 0
      %378 = vmatprep.subr.bf16.mxu0 0
      %379 = vmatpush1.bf16.msra.mxu0 0
      %380 = vmatprep.subr.bf16.mxu0 0
      %381 = vmatpush1.bf16.msra.mxu0 0
      %382 = vmatprep.subr.bf16.mxu0 0
      %383 = vmatpush1.bf16.msra.mxu0 0
      %384 = vmatprep.subr.bf16.mxu0 0
      %385 = vmatpush1.bf16.msra.mxu0 0
      %386 = vmatprep.mubr.bf16.mxu0 0
      %387 = vmatmul.mubr.bf16.gmra.mrb[0].mxu0 %v349
      %v388 = vpop.f32.mrb[0].mxu0
      %v389 = vadd.f32 0.0, %v388
      %v390 = vpop.f32.mrb[0].mxu0
      %v391 = vpop.f32.mrb[0].mxu0
      %v392 = vadd.f32 0.0, %v391
      %v393 = vpop.f32.mrb[0].mxu0
      %394 = vdwg.mxu0
      %v395 = vadd.f32 %v340, %v389
      %v396 = vadd.f32 %v343, %v392
      %v397 = vld [vmem:[%s4] sm:$0xff]
      %v398 = vld [vmem:[%s4 + $0x8] sm:$0xff]
      %v399 = vadd.f32 %v395, %v397
      %v400 = vadd.f32 %v396, %v398
      %v401 = vpack.c.bf16 %v400, %v399
      %v403 = vunpack.c.l.b16 %v401
      %v404 = vunpack.c.h.b16 %v401
      %v405 = vpack.c.b16 %v403, %v403
      %v406 = vpack.c.b16 %v404, %v404
      %vm409 = vcmask 257024
      %410 = vst.msk [vmem:[%s224] sm:$0xf] %vm409, %v405
      %411 = vst.msk [vmem:[%s224 + $0x4] sm:$0xf] %vm409, %v406
      %p412 = scmp.lt.s32.totalorder %s16, 1
      %s413 = scalar_select %p412, %s16, 1
      %s414 = smul.addr %s413, 2
      %s415 = smul.addr %s414, 4
      %s416 = scalar_lea.vmem %s5, %s415
      // Predicated region
      $region41: #{informer_forward.11} parent=39 // pred_check
        %p417 = pneg %p144
      $region42: #{informer_forward.11} parent=39 // pred_check_branch
        %419 = sbr.rel (%p417) target = $region44
      $region43: #{informer_forward.11} parent=39 // pred_region
        _
      $region44: #{informer_forward.11} parent=39 // pred_fallthru
        _
    $region40: #{informer_forward.11} parent=5 // pred_fallthru
      _
    %p420 = scmp.le.s32.totalorder 2, %s11
    // Predicated region
    $region45: #{informer_forward.11} parent=5 // pred_check
      %p421 = pneg %p420
    $region46: #{informer_forward.11} parent=5 // pred_check_branch
      %423 = sbr.rel (%p421) target = $region48
    $region47: #{informer_forward.11} parent=5 // pred_region
      %s424 = ssub.s32 %s11, 2
      // Predicated region
      $region49: #{informer_forward.11} parent=47 // pred_check
        %p425 = pneg %p150
      $region50: #{informer_forward.11} parent=47 // pred_check_branch
        %427 = sbr.rel (%p425) target = $region52
      $region51: #{informer_forward.11} parent=47 // pred_region
        %p428 = scmp.lt.s32.totalorder %s17, 1
        %s429 = scalar_select %p428, %s17, 1
        %s430 = smul.addr %s429, 2
        %s431 = smul.addr %s430, 4
        %s432 = scalar_lea.vmem %s5, %s431
      $region52: #{informer_forward.11} parent=47 // pred_fallthru
        _
    $region48: #{informer_forward.11} parent=5 // pred_fallthru
      _
  $region6: #{informer_forward.11} parent=0 // loop_footer
    %s15 = sadd.s32 1, %s11
  $region7: #{informer_forward.11} parent=0 // loop_footer_branch
    %10 = sbr.rel target = $region3
  $region8: #{informer_forward.11} parent=0 // loop_exit
    _

// kernel: informer_forward.16
$region0: #{informer_forward.16}
  #allocation0 [shape = 'u32[]', space=smem, size = 0x4, offset = 0x4, fixed_abs, tag = 'smem constant byte address 0x4 - core index']
  #allocation1 [shape = 'u32[144,128]{1,0:T(1,128)}', space=vmem, size = 0x12000, scoped, tag = 'internal scratch']
  %s0 = inlined_call_operand.vmem [shape: bf16[32,32], index: 0, kind: input, shape index: {}]
  %s1 = inlined_call_operand.vmem [shape: f32[1,32], index: 1, kind: input, shape index: {}]
  %s2 = inlined_call_operand.vmem [shape: f32[1,32], index: 2, kind: input, shape index: {}]
  %s3 = inlined_call_operand.vmem [shape: bf16[32,32], index: 3, kind: output, shape index: {}]
  %s4 = sld [smem:[#allocation0]]
  $region22: #{informer_forward.16} parent=0
    _
  %s6 = ssub.s32 1, %s4
  %s7 = scalar_select 0, %s6, %s4
  // Predicated region
  $region2: #{informer_forward.16} parent=0 // pred_check
    _
  $region3: #{informer_forward.16} parent=0 // pred_check_branch
    %9 = sbr.rel (0) target = $region5
  $region4: #{informer_forward.16} parent=0 // pred_region
    _
  $region5: #{informer_forward.16} parent=0 // pred_fallthru
    _
  // Predicated region
  $region6: #{informer_forward.16} parent=0 // pred_check
    _
  $region7: #{informer_forward.16} parent=0 // pred_check_branch
    %11 = sbr.rel (0) target = $region9
  $region8: #{informer_forward.16} parent=0 // pred_region
    _
  $region9: #{informer_forward.16} parent=0 // pred_fallthru
    _
  // Predicated region
  $region10: #{informer_forward.16} parent=0 // pred_check
    _
  $region11: #{informer_forward.16} parent=0 // pred_check_branch
    %13 = sbr.rel (0) target = $region13
  $region12: #{informer_forward.16} parent=0 // pred_region
    _
  $region13: #{informer_forward.16} parent=0 // pred_fallthru
    _
  %v14 = vld [vmem:[%s0] sm:$0xf]
  %v15 = vld [vmem:[%s0 + $0x4] sm:$0xf]
  %v16 = vld [vmem:[%s0 + $0x8] sm:$0xf]
  %v17 = vld [vmem:[%s0 + $0xc] sm:$0xf]
  %v18 = vunpack.c.l.bf16 %v14
  %v19 = vunpack.c.l.bf16 %v15
  %v20 = vunpack.c.l.bf16 %v16
  %v21 = vunpack.c.l.bf16 %v17
  %v22 = vld [vmem:[%s1] sm:$0x1]
  %v23 = vld [vmem:[%s2] sm:$0x1]
  %vm24 = vcmask 261120
  %v25 = vsel %vm24, %v18, 0.0
  %26 = vadd.xlane.f32.xlu0 %v25
  %v27 = vpop.xlane.xlu0 %26
  %v28 = vsel %vm24, %v19, 0.0
  %29 = vadd.xlane.f32.xlu0 %v28
  %v30 = vpop.xlane.xlu0 %29
  %v31 = vsel %vm24, %v20, 0.0
  %32 = vadd.xlane.f32.xlu0 %v31
  %v33 = vpop.xlane.xlu0 %32
  %v34 = vsel %vm24, %v21, 0.0
  %35 = vadd.xlane.f32.xlu0 %v34
  %v36 = vpop.xlane.xlu0 %35
  %v37 = vrcp.pop 32.0
  %v38 = vmul.f32 %v27, %v37
  %v39 = vmul.f32 %v30, %v37
  %v40 = vmul.f32 %v33, %v37
  %v41 = vmul.f32 %v36, %v37
  %v42 = vsub.f32 %v18, %v38
  %v43 = vsub.f32 %v19, %v39
  %v44 = vsub.f32 %v20, %v40
  %v45 = vsub.f32 %v21, %v41
  %v46 = vmul.f32 %v42, %v42
  %v47 = vmul.f32 %v43, %v43
  %v48 = vmul.f32 %v44, %v44
  %v49 = vmul.f32 %v45, %v45
  %v50 = vsel %vm24, %v46, 0.0
  %51 = vadd.xlane.f32.xlu0 %v50
  %v52 = vpop.xlane.xlu0 %51
  %v53 = vsel %vm24, %v47, 0.0
  %54 = vadd.xlane.f32.xlu0 %v53
  %v55 = vpop.xlane.xlu0 %54
  %v56 = vsel %vm24, %v48, 0.0
  %57 = vadd.xlane.f32.xlu0 %v56
  %v58 = vpop.xlane.xlu0 %57
  %v59 = vsel %vm24, %v49, 0.0
  %60 = vadd.xlane.f32.xlu0 %v59
  %v61 = vpop.xlane.xlu0 %60
  %v62 = vmul.f32 %v52, %v37
  %v63 = vmul.f32 %v55, %v37
  %v64 = vmul.f32 %v58, %v37
  %v65 = vmul.f32 %v61, %v37
  %v66 = vadd.f32 %v62, 1e-05
  %v67 = vadd.f32 %v63, 1e-05
  %v68 = vadd.f32 %v64, 1e-05
  %v69 = vadd.f32 %v65, 1e-05
  %v70 = vrsqrt.pop %v66
  %v71 = vrsqrt.pop %v67
  %v72 = vrsqrt.pop %v68
  %v73 = vrsqrt.pop %v69
  %v74 = vmul.f32 %v42, %v70
  %v75 = vmul.f32 %v43, %v71
  %v76 = vmul.f32 %v44, %v72
  %v77 = vmul.f32 %v45, %v73
  %v79 = vlaneseq
  %v80 = vshrl.u32 %v79, 7
  %v81 = vsub.s32 0, %v80
  %v82 = vrot.slane %v22, %v81
  %v84 = vmul.f32 %v74, %v82
  %v85 = vmul.f32 %v75, %v82
  %v86 = vmul.f32 %v76, %v82
  %v87 = vmul.f32 %v77, %v82
  %v89 = vlaneseq
  %v90 = vshrl.u32 %v89, 7
  %v91 = vsub.s32 0, %v90
  %v92 = vrot.slane %v23, %v91
  %v94 = vadd.f32 %v84, %v92
  %v95 = vadd.f32 %v85, %v92
  %v96 = vadd.f32 %v86, %v92
  %v97 = vadd.f32 %v87, %v92
  %v98 = vpack.c.bf16 %v95, %v94
  %v99 = vpack.c.bf16 %v97, %v96
  %v102 = vunpack.c.l.b16 %v98
  %v103 = vunpack.c.h.b16 %v98
  %v104 = vunpack.c.l.b16 %v99
  %v105 = vunpack.c.h.b16 %v99
  %v106 = vpack.c.b16 %v102, %v102
  %v107 = vpack.c.b16 %v103, %v103
  %v108 = vpack.c.b16 %v104, %v104
  %v109 = vpack.c.b16 %v105, %v105
  %vm114 = vcmask 257024
  %115 = vst.msk [vmem:[%s3] sm:$0xf] %vm114, %v106
  %116 = vst.msk [vmem:[%s3 + $0x4] sm:$0xf] %vm114, %v107
  %117 = vst.msk [vmem:[%s3 + $0x8] sm:$0xf] %vm114, %v108
  %118 = vst.msk [vmem:[%s3 + $0xc] sm:$0xf] %vm114, %v109
  // Predicated region
  $region14: #{informer_forward.16} parent=0 // pred_check
    _
  $region15: #{informer_forward.16} parent=0 // pred_check_branch
    %120 = sbr.rel (0) target = $region17
  $region16: #{informer_forward.16} parent=0 // pred_region
    _
  $region17: #{informer_forward.16} parent=0 // pred_fallthru
    _
  // Predicated region
  $region18: #{informer_forward.16} parent=0 // pred_check
    _
  $region19: #{informer_forward.16} parent=0 // pred_check_branch
    %122 = sbr.rel (0) target = $region21
  $region20: #{informer_forward.16} parent=0 // pred_region
    _
  $region21: #{informer_forward.16} parent=0 // pred_fallthru
    _

// kernel: informer_forward.12
$region0: #{informer_forward.12}
  #allocation0 [shape = 'u32[]', space=smem, size = 0x4, offset = 0x4, fixed_abs, tag = 'smem constant byte address 0x4 - core index']
  #allocation1 [shape = 'u32[144,128]{1,0:T(1,128)}', space=vmem, size = 0x12000, scoped, tag = 'internal scratch']
  %s0 = inlined_call_operand.vmem [shape: bf16[2,16,32], index: 0, kind: input, shape index: {}, may-alias: {0,1}]
  %s1 = inlined_call_operand.vmem [shape: bf16[2,16,32], index: 1, kind: input, shape index: {}, may-alias: {0,1}]
  %s2 = inlined_call_operand.vmem [shape: bf16[32,32], index: 2, kind: input, shape index: {}]
  %s3 = inlined_call_operand.vmem [shape: f32[1,32], index: 3, kind: input, shape index: {}]
  %s4 = inlined_call_operand.vmem [shape: bf16[32,64], index: 4, kind: input, shape index: {}]
  %s5 = inlined_call_operand.vmem [shape: f32[1,64], index: 5, kind: input, shape index: {}]
  %s6 = inlined_call_operand.vmem [shape: bf16[32,32], index: 6, kind: input, shape index: {}]
  %s7 = inlined_call_operand.vmem [shape: f32[1,32], index: 7, kind: input, shape index: {}]
  %s8 = inlined_call_operand.vmem [shape: f32[1,32], index: 8, kind: input, shape index: {}]
  %s9 = inlined_call_operand.vmem [shape: f32[1,32], index: 9, kind: input, shape index: {}]
  %s10 = inlined_call_operand.vmem [shape: bf16[2,16,32], index: 10, kind: output, shape index: {}]
  %s11 = sld [smem:[#allocation0]]
  $region73: #{informer_forward.12} parent=0
    _
  %s13 = ssub.s32 1, %s11
  %s14 = scalar_select 0, %s13, %s11
  loop: start=0, step=1, limit=4
  $region2: #{informer_forward.12} parent=0 // loop_pre_header
    _
  $region3: #{informer_forward.12} parent=0 // loop_header
    %s16 = sphi 0, %s20
    %p17 = scmp.ge.s32.totalorder %s16, 4
    %s26 = sphi 0, %s28
    %s29 = sphi 0, %s26
    %s30 = sphi 0, %s29
    %s46 = sphi 0, %s30
    %s52 = sphi 0, %s54
    %s55 = sphi 0, %s52
    %s56 = sphi 0, %s55
    %s72 = sphi 0, %s56
    %s76 = sphi 0, %s76
    %s78 = sphi 0, %s76
    %s79 = sphi 0, %s78
    %s93 = sphi 0, %s79
    %s97 = sphi 0, %s97
    %s99 = sphi 0, %s97
    %s100 = sphi 0, %s99
    %s114 = sphi 0, %s100
    %s118 = sphi 0, %s118
    %s120 = sphi 0, %s118
    %s121 = sphi 0, %s120
    %s135 = sphi 0, %s121
    %s139 = sphi 0, %s139
    %s141 = sphi 0, %s139
    %s142 = sphi 0, %s141
    %s156 = sphi 0, %s142
    %s160 = sphi 0, %s160
    %s162 = sphi 0, %s160
    %s163 = sphi 0, %s162
    %s177 = sphi 0, %s163
    %s181 = sphi 0, %s181
    %s183 = sphi 0, %s181
    %s184 = sphi 0, %s183
    %s198 = sphi 0, %s184
    %s202 = sphi 0, %s202
    %s204 = sphi 0, %s202
    %s205 = sphi 0, %s204
    %s219 = sphi 0, %s205
    %s223 = sphi 0, %s223
    %s225 = sphi 0, %s223
    %s226 = sphi 0, %s225
    %s240 = sphi 0, %s226
    %s246 = sphi 0, %s248
    %s249 = sphi 0, %s246
    %s250 = sphi 0, %s249
    %s266 = sphi 0, %s250
  $region4: #{informer_forward.12} parent=0 // loop_header_branch
    %19 = sbr.rel (%p17) target = $region8
  $region5: #{informer_forward.12} parent=0 // loop_body
    %s21 = ssub.s32 %s16, 1
    %s22 = ssub.s32 %s16, 2
    %s23 = sadd.s32 %s16, 1
    %s24 = ssub.s32 %s16, %s23
    %p25 = scmp.eq.s32.totalorder %s24, 0
    %s27 = sadd.s32 %s26, 1
    %s28 = scalar_select %p25, %s26, %s27
    %p31 = pneg %p25
    %p32 = scmp.eq.s32.totalorder %s16, 1
    %p33 = por %p31, %p32
    %p34 = scmp.ne.s32.totalorder %s26, %s29
    %p35 = scmp.eq.s32.totalorder %s16, 0
    %p36 = por %p34, %p35
    %p37 = scmp.ne.s32.totalorder %s26, %s29
    %p38 = scmp.eq.s32.totalorder %s21, 1
    %p39 = por %p37, %p38
    %p40 = scmp.ne.s32.totalorder %s29, %s30
    %p41 = scmp.eq.s32.totalorder %s21, 0
    %p42 = por %p40, %p41
    %p43 = scmp.ne.s32.totalorder %s29, %s30
    %p44 = scmp.eq.s32.totalorder %s22, 1
    %p45 = por %p43, %p44
    %p47 = scmp.ne.s32.totalorder %s30, %s46
    %p48 = scmp.eq.s32.totalorder %s22, 0
    %p49 = por %p47, %p48
    %s50 = ssub.s32 %s16, %s23
    %p51 = scmp.eq.s32.totalorder %s50, 0
    %s53 = sadd.s32 %s52, 1
    %s54 = scalar_select %p51, %s52, %s53
    %p57 = pneg %p51
    %p58 = scmp.eq.s32.totalorder %s16, 1
    %p59 = por %p57, %p58
    %p60 = scmp.ne.s32.totalorder %s52, %s55
    %p61 = scmp.eq.s32.totalorder %s16, 0
    %p62 = por %p60, %p61
    %p63 = scmp.ne.s32.totalorder %s52, %s55
    %p64 = scmp.eq.s32.totalorder %s21, 1
    %p65 = por %p63, %p64
    %p66 = scmp.ne.s32.totalorder %s55, %s56
    %p67 = scmp.eq.s32.totalorder %s21, 0
    %p68 = por %p66, %p67
    %p69 = scmp.ne.s32.totalorder %s55, %s56
    %p70 = scmp.eq.s32.totalorder %s22, 1
    %p71 = por %p69, %p70
    %p73 = scmp.ne.s32.totalorder %s56, %s72
    %p74 = scmp.eq.s32.totalorder %s22, 0
    %p75 = por %p73, %p74
    %s77 = sadd.s32 %s76, 1
    %p80 = scmp.eq.s32.totalorder %s16, 1
    %p81 = scmp.ne.s32.totalorder %s76, %s78
    %p82 = scmp.eq.s32.totalorder %s16, 0
    %p83 = por %p81, %p82
    %p84 = scmp.ne.s32.totalorder %s76, %s78
    %p85 = scmp.eq.s32.totalorder %s21, 1
    %p86 = por %p84, %p85
    %p87 = scmp.ne.s32.totalorder %s78, %s79
    %p88 = scmp.eq.s32.totalorder %s21, 0
    %p89 = por %p87, %p88
    %p90 = scmp.ne.s32.totalorder %s78, %s79
    %p91 = scmp.eq.s32.totalorder %s22, 1
    %p92 = por %p90, %p91
    %p94 = scmp.ne.s32.totalorder %s79, %s93
    %p95 = scmp.eq.s32.totalorder %s22, 0
    %p96 = por %p94, %p95
    %s98 = sadd.s32 %s97, 1
    %p101 = scmp.eq.s32.totalorder %s16, 1
    %p102 = scmp.ne.s32.totalorder %s97, %s99
    %p103 = scmp.eq.s32.totalorder %s16, 0
    %p104 = por %p102, %p103
    %p105 = scmp.ne.s32.totalorder %s97, %s99
    %p106 = scmp.eq.s32.totalorder %s21, 1
    %p107 = por %p105, %p106
    %p108 = scmp.ne.s32.totalorder %s99, %s100
    %p109 = scmp.eq.s32.totalorder %s21, 0
    %p110 = por %p108, %p109
    %p111 = scmp.ne.s32.totalorder %s99, %s100
    %p112 = scmp.eq.s32.totalorder %s22, 1
    %p113 = por %p111, %p112
    %p115 = scmp.ne.s32.totalorder %s100, %s114
    %p116 = scmp.eq.s32.totalorder %s22, 0
    %p117 = por %p115, %p116
    %s119 = sadd.s32 %s118, 1
    %p122 = scmp.eq.s32.totalorder %s16, 1
    %p123 = scmp.ne.s32.totalorder %s118, %s120
    %p124 = scmp.eq.s32.totalorder %s16, 0
    %p125 = por %p123, %p124
    %p126 = scmp.ne.s32.totalorder %s118, %s120
    %p127 = scmp.eq.s32.totalorder %s21, 1
    %p128 = por %p126, %p127
    %p129 = scmp.ne.s32.totalorder %s120, %s121
    %p130 = scmp.eq.s32.totalorder %s21, 0
    %p131 = por %p129, %p130
    %p132 = scmp.ne.s32.totalorder %s120, %s121
    %p133 = scmp.eq.s32.totalorder %s22, 1
    %p134 = por %p132, %p133
    %p136 = scmp.ne.s32.totalorder %s121, %s135
    %p137 = scmp.eq.s32.totalorder %s22, 0
    %p138 = por %p136, %p137
    %s140 = sadd.s32 %s139, 1
    %p143 = scmp.eq.s32.totalorder %s16, 1
    %p144 = scmp.ne.s32.totalorder %s139, %s141
    %p145 = scmp.eq.s32.totalorder %s16, 0
    %p146 = por %p144, %p145
    %p147 = scmp.ne.s32.totalorder %s139, %s141
    %p148 = scmp.eq.s32.totalorder %s21, 1
    %p149 = por %p147, %p148
    %p150 = scmp.ne.s32.totalorder %s141, %s142
    %p151 = scmp.eq.s32.totalorder %s21, 0
    %p152 = por %p150, %p151
    %p153 = scmp.ne.s32.totalorder %s141, %s142
    %p154 = scmp.eq.s32.totalorder %s22, 1
    %p155 = por %p153, %p154
    %p157 = scmp.ne.s32.totalorder %s142, %s156
    %p158 = scmp.eq.s32.totalorder %s22, 0
    %p159 = por %p157, %p158
    %s161 = sadd.s32 %s160, 1
    %p164 = scmp.eq.s32.totalorder %s16, 1
    %p165 = scmp.ne.s32.totalorder %s160, %s162
    %p166 = scmp.eq.s32.totalorder %s16, 0
    %p167 = por %p165, %p166
    %p168 = scmp.ne.s32.totalorder %s160, %s162
    %p169 = scmp.eq.s32.totalorder %s21, 1
    %p170 = por %p168, %p169
    %p171 = scmp.ne.s32.totalorder %s162, %s163
    %p172 = scmp.eq.s32.totalorder %s21, 0
    %p173 = por %p171, %p172
    %p174 = scmp.ne.s32.totalorder %s162, %s163
    %p175 = scmp.eq.s32.totalorder %s22, 1
    %p176 = por %p174, %p175
    %p178 = scmp.ne.s32.totalorder %s163, %s177
    %p179 = scmp.eq.s32.totalorder %s22, 0
    %p180 = por %p178, %p179
    %s182 = sadd.s32 %s181, 1
    %p185 = scmp.eq.s32.totalorder %s16, 1
    %p186 = scmp.ne.s32.totalorder %s181, %s183
    %p187 = scmp.eq.s32.totalorder %s16, 0
    %p188 = por %p186, %p187
    %p189 = scmp.ne.s32.totalorder %s181, %s183
    %p190 = scmp.eq.s32.totalorder %s21, 1
    %p191 = por %p189, %p190
    %p192 = scmp.ne.s32.totalorder %s183, %s184
    %p193 = scmp.eq.s32.totalorder %s21, 0
    %p194 = por %p192, %p193
    %p195 = scmp.ne.s32.totalorder %s183, %s184
    %p196 = scmp.eq.s32.totalorder %s22, 1
    %p197 = por %p195, %p196
    %p199 = scmp.ne.s32.totalorder %s184, %s198
    %p200 = scmp.eq.s32.totalorder %s22, 0
    %p201 = por %p199, %p200
    %s203 = sadd.s32 %s202, 1
    %p206 = scmp.eq.s32.totalorder %s16, 1
    %p207 = scmp.ne.s32.totalorder %s202, %s204
    %p208 = scmp.eq.s32.totalorder %s16, 0
    %p209 = por %p207, %p208
    %p210 = scmp.ne.s32.totalorder %s202, %s204
    %p211 = scmp.eq.s32.totalorder %s21, 1
    %p212 = por %p210, %p211
    %p213 = scmp.ne.s32.totalorder %s204, %s205
    %p214 = scmp.eq.s32.totalorder %s21, 0
    %p215 = por %p213, %p214
    %p216 = scmp.ne.s32.totalorder %s204, %s205
    %p217 = scmp.eq.s32.totalorder %s22, 1
    %p218 = por %p216, %p217
    %p220 = scmp.ne.s32.totalorder %s205, %s219
    %p221 = scmp.eq.s32.totalorder %s22, 0
    %p222 = por %p220, %p221
    %s224 = sadd.s32 %s223, 1
    %p227 = scmp.eq.s32.totalorder %s16, 1
    %p228 = scmp.ne.s32.totalorder %s223, %s225
    %p229 = scmp.eq.s32.totalorder %s16, 0
    %p230 = por %p228, %p229
    %p231 = scmp.ne.s32.totalorder %s223, %s225
    %p232 = scmp.eq.s32.totalorder %s21, 1
    %p233 = por %p231, %p232
    %p234 = scmp.ne.s32.totalorder %s225, %s226
    %p235 = scmp.eq.s32.totalorder %s21, 0
    %p236 = por %p234, %p235
    %p237 = scmp.ne.s32.totalorder %s225, %s226
    %p238 = scmp.eq.s32.totalorder %s22, 1
    %p239 = por %p237, %p238
    %p241 = scmp.ne.s32.totalorder %s226, %s240
    %p242 = scmp.eq.s32.totalorder %s22, 0
    %p243 = por %p241, %p242
    %s244 = ssub.s32 %s16, %s23
    %p245 = scmp.eq.s32.totalorder %s244, 0
    %s247 = sadd.s32 %s246, 1
    %s248 = scalar_select %p245, %s246, %s247
    %p251 = pneg %p245
    %p252 = scmp.eq.s32.totalorder %s16, 1
    %p253 = por %p251, %p252
    %p254 = scmp.ne.s32.totalorder %s246, %s249
    %p255 = scmp.eq.s32.totalorder %s16, 0
    %p256 = por %p254, %p255
    %p257 = scmp.ne.s32.totalorder %s246, %s249
    %p258 = scmp.eq.s32.totalorder %s21, 1
    %p259 = por %p257, %p258
    %p260 = scmp.ne.s32.totalorder %s249, %s250
    %p261 = scmp.eq.s32.totalorder %s21, 0
    %p262 = por %p260, %p261
    %p263 = scmp.ne.s32.totalorder %s249, %s250
    %p264 = scmp.eq.s32.totalorder %s22, 1
    %p265 = por %p263, %p264
    %p267 = scmp.ne.s32.totalorder %s250, %s266
    %p268 = scmp.eq.s32.totalorder %s22, 0
    %p269 = por %p267, %p268
    %p270 = scmp.le.s32.totalorder 1, %s16
    %p271 = scmp.lt.s32.totalorder %s16, 3
    %p272 = pnand %p270, %p271
    %p273 = pneg %p272
    // Predicated region
    $region9: #{informer_forward.12} parent=5 // pred_check
      _
    $region10: #{informer_forward.12} parent=5 // pred_check_branch
      %275 = sbr.rel (%p272) target = $region12
    $region11: #{informer_forward.12} parent=5 // pred_region
      %s276 = ssub.s32 %s16, 1
      // Predicated region
      $region13: #{informer_forward.12} parent=11 // pred_check
        %p277 = pneg %p89
      $region14: #{informer_forward.12} parent=11 // pred_check_branch
        %279 = sbr.rel (%p277) target = $region16
      $region15: #{informer_forward.12} parent=11 // pred_region
        _
      $region16: #{informer_forward.12} parent=11 // pred_fallthru
        _
      // Predicated region
      $region17: #{informer_forward.12} parent=11 // pred_check
        %p280 = pneg %p110
      $region18: #{informer_forward.12} parent=11 // pred_check_branch
        %282 = sbr.rel (%p280) target = $region20
      $region19: #{informer_forward.12} parent=11 // pred_region
        _
      $region20: #{informer_forward.12} parent=11 // pred_fallthru
        _
      // Predicated region
      $region21: #{informer_forward.12} parent=11 // pred_check
        %p283 = pneg %p131
      $region22: #{informer_forward.12} parent=11 // pred_check_branch
        %285 = sbr.rel (%p283) target = $region24
      $region23: #{informer_forward.12} parent=11 // pred_region
        _
      $region24: #{informer_forward.12} parent=11 // pred_fallthru
        _
      // Predicated region
      $region25: #{informer_forward.12} parent=11 // pred_check
        %p286 = pneg %p152
      $region26: #{informer_forward.12} parent=11 // pred_check_branch
        %288 = sbr.rel (%p286) target = $region28
      $region27: #{informer_forward.12} parent=11 // pred_region
        _
      $region28: #{informer_forward.12} parent=11 // pred_fallthru
        _
      // Predicated region
      $region29: #{informer_forward.12} parent=11 // pred_check
        %p289 = pneg %p173
      $region30: #{informer_forward.12} parent=11 // pred_check_branch
        %291 = sbr.rel (%p289) target = $region32
      $region31: #{informer_forward.12} parent=11 // pred_region
        _
      $region32: #{informer_forward.12} parent=11 // pred_fallthru
        _
      // Predicated region
      $region33: #{informer_forward.12} parent=11 // pred_check
        %p292 = pneg %p194
      $region34: #{informer_forward.12} parent=11 // pred_check_branch
        %294 = sbr.rel (%p292) target = $region36
      $region35: #{informer_forward.12} parent=11 // pred_region
        _
      $region36: #{informer_forward.12} parent=11 // pred_fallthru
        _
      // Predicated region
      $region37: #{informer_forward.12} parent=11 // pred_check
        %p295 = pneg %p215
      $region38: #{informer_forward.12} parent=11 // pred_check_branch
        %297 = sbr.rel (%p295) target = $region40
      $region39: #{informer_forward.12} parent=11 // pred_region
        _
      $region40: #{informer_forward.12} parent=11 // pred_fallthru
        _
      // Predicated region
      $region41: #{informer_forward.12} parent=11 // pred_check
        %p298 = pneg %p236
      $region42: #{informer_forward.12} parent=11 // pred_check_branch
        %300 = sbr.rel (%p298) target = $region44
      $region43: #{informer_forward.12} parent=11 // pred_region
        _
      $region44: #{informer_forward.12} parent=11 // pred_fallthru
        _
    $region12: #{informer_forward.12} parent=5 // pred_fallthru
      _
    %p301 = scmp.lt.s32.totalorder %s16, 2
    // Predicated region
    $region45: #{informer_forward.12} parent=5 // pred_check
      %p302 = pneg %p301
    $region46: #{informer_forward.12} parent=5 // pred_check_branch
      %304 = sbr.rel (%p302) target = $region48
    $region47: #{informer_forward.12} parent=5 // pred_region
      // Predicated region
      $region49: #{informer_forward.12} parent=47 // pred_check
        %p305 = pneg %p36
      $region50: #{informer_forward.12} parent=47 // pred_check_branch
        %307 = sbr.rel (%p305) target = $region52
      $region51: #{informer_forward.12} parent=47 // pred_region
        %p308 = scmp.lt.s32.totalorder %s16, 1
        %s309 = scalar_select %p308, %s16, 1
        %s310 = smul.addr %s309, 2
        %s311 = smul.addr %s310, 4
        %s312 = scalar_lea.vmem %s0, %s311
      $region52: #{informer_forward.12} parent=47 // pred_fallthru
        _
      // Predicated region
      $region53: #{informer_forward.12} parent=47 // pred_check
        %p313 = pneg %p62
      $region54: #{informer_forward.12} parent=47 // pred_check_branch
        %315 = sbr.rel (%p313) target = $region56
      $region55: #{informer_forward.12} parent=47 // pred_region
        %p316 = scmp.lt.s32.totalorder %s16, 1
        %s317 = scalar_select %p316, %s16, 1
        %s318 = smul.addr %s317, 2
        %s319 = smul.addr %s318, 4
        %s320 = scalar_lea.vmem %s1, %s319
      $region56: #{informer_forward.12} parent=47 // pred_fallthru
        _
    $region48: #{informer_forward.12} parent=5 // pred_fallthru
      _
    %p321 = scmp.le.s32.totalorder 1, %s16
    %p322 = scmp.lt.s32.totalorder %s16, 3
    %p323 = pnand %p321, %p322
    %p324 = pneg %p323
    // Predicated region
    $region57: #{informer_forward.12} parent=5 // pred_check
      _
    $region58: #{informer_forward.12} parent=5 // pred_check_branch
      %326 = sbr.rel (%p323) target = $region60
    $region59: #{informer_forward.12} parent=5 // pred_region
      %s327 = ssub.s32 %s16, 1
      %p328 = scmp.lt.s32.totalorder %s21, 1
      %s329 = scalar_select %p328, %s21, 1
      %s330 = smul.addr %s329, 2
      %s331 = smul.addr %s330, 4
      %s332 = scalar_lea.vmem %s0, %s331
      %p333 = pneg %p42
      %p334 = pneg %p39
      %p335 = scmp.lt.s32.totalorder %s21, 1
      %s336 = scalar_select %p335, %s21, 1
      %s337 = smul.addr %s336, 2
      %s338 = smul.addr %s337, 4
      %s339 = scalar_lea.vmem %s1, %s338
      %p340 = pneg %p68
      %p341 = pneg %p65
      %p342 = pneg %p89
      %p343 = pneg %p86
      %p344 = pneg %p110
      %p345 = pneg %p107
      %p346 = pneg %p131
      %p347 = pneg %p128
      %p348 = pneg %p152
      %p349 = pneg %p149
      %p350 = pneg %p173
      %p351 = pneg %p170
      %p352 = pneg %p194
      %p353 = pneg %p191
      %p354 = pneg %p215
      %p355 = pneg %p212
      %p356 = pneg %p236
      %p357 = pneg %p233
      %p358 = pneg %p262
      %p359 = pneg %p259
      %p360 = scmp.lt.s32.totalorder %s21, 1
      %s361 = scalar_select %p360, %s21, 1
      %s362 = smul.addr %s361, 2
      %s363 = smul.addr %s362, 4
      %s364 = scalar_lea.vmem %s10, %s363
      %p365 = scmp.lt.s32.totalorder %s21, 1
      %s366 = scalar_select %p365, %s21, 1
      %s367 = smul.addr %s366, 2
      %s368 = smul.addr %s367, 4
      %s369 = scalar_lea.vmem %s0, %s368
      %p370 = scmp.lt.s32.totalorder %s21, 1
      %s371 = scalar_select %p370, %s21, 1
      %s372 = smul.addr %s371, 2
      %s373 = smul.addr %s372, 4
      %s374 = scalar_lea.vmem %s1, %s373
      %p375 = scmp.lt.s32.totalorder %s21, 1
      %s376 = scalar_select %p375, %s21, 1
      %s377 = smul.addr %s376, 2
      %s378 = smul.addr %s377, 4
      %s379 = scalar_lea.vmem %s10, %s378
      %v381 = vld [vmem:[%s369] sm:$0xf]
      %v382 = vld [vmem:[%s369 + $0x4] sm:$0xf]
      %v383 = vld [vmem:[%s374] sm:$0xf]
      %v384 = vld [vmem:[%s374 + $0x4] sm:$0xf]
      %v385 = vld [vmem:[%s2] sm:$0xf]
      %v386 = vld [vmem:[%s2 + $0x4] sm:$0xf]
      %v387 = vld [vmem:[%s2 + $0x8] sm:$0xf]
      %v388 = vld [vmem:[%s2 + $0xc] sm:$0xf]
      %v389 = vld [vmem:[%s3] sm:$0x1]
      %v391 = vlaneseq
      %v392 = vshrl.u32 %v391, 7
      %v393 = vsub.s32 0, %v392
      %v394 = vrot.slane %v389, %v393
      %v398 = vunpack.c.l.b16 %v381
      %v399 = vunpack.c.l.b16 %v382
      %v400 = vpack.c.b16 %v399, %v398
      %v405 = vunpack.c.l.b16 %v385
      %v406 = vunpack.c.l.b16 %v386
      %v407 = vunpack.c.l.b16 %v387
      %v408 = vunpack.c.l.b16 %v388
      %v409 = vpack.c.b16 %v406, %v405
      %v410 = vpack.c.b16 %v408, %v407
      %vm413 = vcmask 261120
      %v415 = vsel %vm413, %v400, 0
      %417 = vmatprep.subr.bf16.mxu0 0
      %418 = vmatpush1.bf16.msra.mxu0 %v409
      %419 = vmatprep.subr.bf16.mxu0 0
      %420 = vmatpush1.bf16.msra.mxu0 %v410
      %421 = vmatprep.subr.bf16.mxu0 0
      %422 = vmatpush1.bf16.msra.mxu0 0
      %423 = vmatprep.subr.bf16.mxu0 0
      %424 = vmatpush1.bf16.msra.mxu0 0
      %425 = vmatprep.subr.bf16.mxu0 0
      %426 = vmatpush1.bf16.msra.mxu0 0
      %427 = vmatprep.subr.bf16.mxu0 0
      %428 = vmatpush1.bf16.msra.mxu0 0
      %429 = vmatprep.subr.bf16.mxu0 0
      %430 = vmatpush1.bf16.msra.mxu0 0
      %431 = vmatprep.subr.bf16.mxu0 0
      %432 = vmatpush1.bf16.msra.mxu0 0
      %433 = vmatprep.subr.bf16.mxu0 0
      %434 = vmatpush1.bf16.msra.mxu0 0
      %435 = vmatprep.subr.bf16.mxu0 0
      %436 = vmatpush1.bf16.msra.mxu0 0
      %437 = vmatprep.subr.bf16.mxu0 0
      %438 = vmatpush1.bf16.msra.mxu0 0
      %439 = vmatprep.subr.bf16.mxu0 0
      %440 = vmatpush1.bf16.msra.mxu0 0
      %441 = vmatprep.subr.bf16.mxu0 0
      %442 = vmatpush1.bf16.msra.mxu0 0
      %443 = vmatprep.subr.bf16.mxu0 0
      %444 = vmatpush1.bf16.msra.mxu0 0
      %445 = vmatprep.subr.bf16.mxu0 0
      %446 = vmatpush1.bf16.msra.mxu0 0
      %447 = vmatprep.subr.bf16.mxu0 0
      %448 = vmatpush1.bf16.msra.mxu0 0
      %449 = vmatprep.mubr.bf16.mxu0 0
      %450 = vmatmul.mubr.bf16.gmra.mrb[0].mxu0 %v415
      %v451 = vpop.f32.mrb[0].mxu0
      %v452 = vadd.f32 %v394, %v451
      %v453 = vpop.f32.mrb[0].mxu0
      %v454 = vpop.f32.mrb[0].mxu0
      %v455 = vadd.f32 %v394, %v454
      %v456 = vpop.f32.mrb[0].mxu0
      %457 = vdwg.mxu0
      %v458 = vpack.c.bf16 %v455, %v452
      %v459 = vld [vmem:[%s4] sm:$0xf]
      %v460 = vld [vmem:[%s4 + $0x4] sm:$0xf]
      %v461 = vld [vmem:[%s4 + $0x8] sm:$0xf]
      %v462 = vld [vmem:[%s4 + $0xc] sm:$0xf]
      %v463 = vld [vmem:[%s5] sm:$0x1]
      %v465 = vlaneseq
      %v466 = vshrl.u32 %v465, 7
      %v467 = vsub.s32 0, %v466
      %v468 = vrot.slane %v463, %v467
      %v472 = vunpack.c.l.b16 %v383
      %v473 = vunpack.c.l.b16 %v384
      %v474 = vpack.c.b16 %v473, %v472
      %v479 = vunpack.c.l.b16 %v459
      %v480 = vunpack.c.l.b16 %v460
      %v481 = vunpack.c.l.b16 %v461
      %v482 = vunpack.c.l.b16 %v462
      %v483 = vpack.c.b16 %v480, %v479
      %v484 = vpack.c.b16 %v482, %v481
      %v488 = vsel %vm413, %v474, 0
      %490 = vmatprep.subr.bf16.mxu0 0
      %491 = vmatpush1.bf16.msra.mxu0 %v483
      %492 = vmatprep.subr.bf16.mxu0 0
      %493 = vmatpush1.bf16.msra.mxu0 %v484
      %494 = vmatprep.subr.bf16.mxu0 0
      %495 = vmatpush1.bf16.msra.mxu0 0
      %496 = vmatprep.subr.bf16.mxu0 0
      %497 = vmatpush1.bf16.msra.mxu0 0
      %498 = vmatprep.subr.bf16.mxu0 0
      %499 = vmatpush1.bf16.msra.mxu0 0
      %500 = vmatprep.subr.bf16.mxu0 0
      %501 = vmatpush1.bf16.msra.mxu0 0
      %502 = vmatprep.subr.bf16.mxu0 0
      %503 = vmatpush1.bf16.msra.mxu0 0
      %504 = vmatprep.subr.bf16.mxu0 0
      %505 = vmatpush1.bf16.msra.mxu0 0
      %506 = vmatprep.subr.bf16.mxu0 0
      %507 = vmatpush1.bf16.msra.mxu0 0
      %508 = vmatprep.subr.bf16.mxu0 0
      %509 = vmatpush1.bf16.msra.mxu0 0
      %510 = vmatprep.subr.bf16.mxu0 0
      %511 = vmatpush1.bf16.msra.mxu0 0
      %512 = vmatprep.subr.bf16.mxu0 0
      %513 = vmatpush1.bf16.msra.mxu0 0
      %514 = vmatprep.subr.bf16.mxu0 0
      %515 = vmatpush1.bf16.msra.mxu0 0
      %516 = vmatprep.subr.bf16.mxu0 0
      %517 = vmatpush1.bf16.msra.mxu0 0
      %518 = vmatprep.subr.bf16.mxu0 0
      %519 = vmatpush1.bf16.msra.mxu0 0
      %520 = vmatprep.subr.bf16.mxu0 0
      %521 = vmatpush1.bf16.msra.mxu0 0
      %522 = vmatprep.mubr.bf16.mxu0 0
      %523 = vmatmul.mubr.bf16.gmra.mrb[0].mxu0 %v488
      %v524 = vpop.f32.mrb[0].mxu0
      %v525 = vadd.f32 %v468, %v524
      %v526 = vpop.f32.mrb[0].mxu0
      %v527 = vpop.f32.mrb[0].mxu0
      %v528 = vadd.f32 %v468, %v527
      %v529 = vpop.f32.mrb[0].mxu0
      %530 = vdwg.mxu0
      %v531 = vpack.c.bf16 %v528, %v525
      %vm532 = vcmask 64512
      %v534 = vsel %vm532, %v458, 0
      %v537 = vsel %vm532, %v531, 0
      %539 = vmatprep.subr.bf16.mxu0 0
      %540 = vmatpush1.bf16.xpose.msra.mxu0 %v537
      %541 = vmatprep.subr.bf16.mxu0 0
      %542 = vmatpush1.bf16.xpose.msra.mxu0 0
      %543 = vmatprep.subr.bf16.mxu0 0
      %544 = vmatpush1.bf16.xpose.msra.mxu0 0
      %545 = vmatprep.subr.bf16.mxu0 0
      %546 = vmatpush1.bf16.xpose.msra.mxu0 0
      %547 = vmatprep.subr.bf16.mxu0 0
      %548 = vmatpush1.bf16.xpose.msra.mxu0 0
      %549 = vmatprep.subr.bf16.mxu0 0
      %550 = vmatpush1.bf16.xpose.msra.mxu0 0
      %551 = vmatprep.subr.bf16.mxu0 0
      %552 = vmatpush1.bf16.xpose.msra.mxu0 0
      %553 = vmatprep.subr.bf16.mxu0 0
      %554 = vmatpush1.bf16.xpose.msra.mxu0 0
      %555 = vmatprep.subr.bf16.mxu0 0
      %556 = vmatpush1.bf16.xpose.msra.mxu0 0
      %557 = vmatprep.subr.bf16.mxu0 0
      %558 = vmatpush1.bf16.xpose.msra.mxu0 0
      %559 = vmatprep.subr.bf16.mxu0 0
      %560 = vmatpush1.bf16.xpose.msra.mxu0 0
      %561 = vmatprep.subr.bf16.mxu0 0
      %562 = vmatpush1.bf16.xpose.msra.mxu0 0
      %563 = vmatprep.subr.bf16.mxu0 0
      %564 = vmatpush1.bf16.xpose.msra.mxu0 0
      %565 = vmatprep.subr.bf16.mxu0 0
      %566 = vmatpush1.bf16.xpose.msra.mxu0 0
      %567 = vmatprep.subr.bf16.mxu0 0
      %568 = vmatpush1.bf16.xpose.msra.mxu0 0
      %569 = vmatprep.subr.bf16.mxu0 0
      %570 = vmatpush1.bf16.xpose.msra.mxu0 0
      %571 = vmatprep.mubr.bf16.mxu0 0
      %572 = vmatmul.mubr.bf16.gmra.mrb[0].mxu0 %v534
      %v573 = vpop.f32.mrb[0].mxu0
      %v574 = vadd.f32 0.0, %v573
      %v575 = vpop.f32.mrb[0].mxu0
      %v576 = vpop.f32.mrb[0].mxu0
      %v577 = vadd.f32 0.0, %v576
      %v578 = vpop.f32.mrb[0].mxu0
      %579 = vdwg.mxu0
      %v580 = vmul.f32 %v574, 0.35355338
      %v581 = vmul.f32 %v577, 0.35355338
      %vm582 = vcmask 130048
      %v583 = vsel %vm582, %v580, -inf
      %584 = vmax.xlane.f32.xlu0 %v583
      %v585 = vpop.xlane.xlu0 %584
      %v586 = vsel %vm582, %v581, -inf
      %587 = vmax.xlane.f32.xlu0 %v586
      %v588 = vpop.xlane.xlu0 %587
      %v589 = vsub.f32 %v580, %v585
      %v590 = vsub.f32 %v581, %v588
      %v591 = vmul.f32 %v589, 1.442695
      %v592 = vpow.pop %v591
      %v593 = vmul.f32 %v590, 1.442695
      %v594 = vpow.pop %v593
      %v595 = vsel %vm582, %v592, 0.0
      %596 = vadd.xlane.f32.xlu0 %v595
      %v597 = vpop.xlane.xlu0 %596
      %v598 = vsel %vm582, %v594, 0.0
      %599 = vadd.xlane.f32.xlu0 %v598
      %v600 = vpop.xlane.xlu0 %599
      %v601 = vrcp.pop %v597
      %v602 = vrcp.pop %v600
      %v603 = vpack.c.bf16 %v594, %v592
      %605 = vrot.lane.b32.xlu0 %v531, 96
      %v606 = vpop.permute.xlu0 %605
      %v609 = vsel %vm582, %v603, 0
      %611 = vmatprep.subr.bf16.mxu0 0
      %612 = vmatpush1.bf16.msra.mxu0 %v606
      %613 = vmatprep.subr.bf16.mxu0 0
      %614 = vmatpush1.bf16.msra.mxu0 0
      %615 = vmatprep.subr.bf16.mxu0 0
      %616 = vmatpush1.bf16.msra.mxu0 0
      %617 = vmatprep.subr.bf16.mxu0 0
      %618 = vmatpush1.bf16.msra.mxu0 0
      %619 = vmatprep.subr.bf16.mxu0 0
      %620 = vmatpush1.bf16.msra.mxu0 0
      %621 = vmatprep.subr.bf16.mxu0 0
      %622 = vmatpush1.bf16.msra.mxu0 0
      %623 = vmatprep.subr.bf16.mxu0 0
      %624 = vmatpush1.bf16.msra.mxu0 0
      %625 = vmatprep.subr.bf16.mxu0 0
      %626 = vmatpush1.bf16.msra.mxu0 0
      %627 = vmatprep.subr.bf16.mxu0 0
      %628 = vmatpush1.bf16.msra.mxu0 0
      %629 = vmatprep.subr.bf16.mxu0 0
      %630 = vmatpush1.bf16.msra.mxu0 0
      %631 = vmatprep.subr.bf16.mxu0 0
      %632 = vmatpush1.bf16.msra.mxu0 0
      %633 = vmatprep.subr.bf16.mxu0 0
      %634 = vmatpush1.bf16.msra.mxu0 0
      %635 = vmatprep.subr.bf16.mxu0 0
      %636 = vmatpush1.bf16.msra.mxu0 0
      %637 = vmatprep.subr.bf16.mxu0 0
      %638 = vmatpush1.bf16.msra.mxu0 0
      %639 = vmatprep.subr.bf16.mxu0 0
      %640 = vmatpush1.bf16.msra.mxu0 0
      %641 = vmatprep.subr.bf16.mxu0 0
      %642 = vmatpush1.bf16.msra.mxu0 0
      %643 = vmatprep.mubr.bf16.mxu0 0
      %644 = vmatmul.mubr.bf16.gmra.mrb[0].mxu0 %v609
      %v645 = vpop.f32.mrb[0].mxu0
      %v646 = vadd.f32 0.0, %v645
      %v647 = vpop.f32.mrb[0].mxu0
      %v648 = vpop.f32.mrb[0].mxu0
      %v649 = vadd.f32 0.0, %v648
      %v650 = vpop.f32.mrb[0].mxu0
      %651 = vdwg.mxu0
      %v652 = vmul.f32 %v646, %v601
      %v653 = vmul.f32 %v649, %v602
      %655 = vrot.lane.b32.xlu0 %v458, 120
      %v656 = vpop.permute.xlu0 %655
      %657 = vrot.lane.b32.xlu0 %v531, 120
      %v658 = vpop.permute.xlu0 %657
      %v660 = vsel %vm532, %v656, 0
      %v663 = vsel %vm532, %v658, 0
      %665 = vmatprep.subr.bf16.mxu0 0
      %666 = vmatpush1.bf16.xpose.msra.mxu0 %v663
      %667 = vmatprep.subr.bf16.mxu0 0
      %668 = vmatpush1.bf16.xpose.msra.mxu0 0
      %669 = vmatprep.subr.bf16.mxu0 0
      %670 = vmatpush1.bf16.xpose.msra.mxu0 0
      %671 = vmatprep.subr.bf16.mxu0 0
      %672 = vmatpush1.bf16.xpose.msra.mxu0 0
      %673 = vmatprep.subr.bf16.mxu0 0
      %674 = vmatpush1.bf16.xpose.msra.mxu0 0
      %675 = vmatprep.subr.bf16.mxu0 0
      %676 = vmatpush1.bf16.xpose.msra.mxu0 0
      %677 = vmatprep.subr.bf16.mxu0 0
      %678 = vmatpush1.bf16.xpose.msra.mxu0 0
      %679 = vmatprep.subr.bf16.mxu0 0
      %680 = vmatpush1.bf16.xpose.msra.mxu0 0
      %681 = vmatprep.subr.bf16.mxu0 0
      %682 = vmatpush1.bf16.xpose.msra.mxu0 0
      %683 = vmatprep.subr.bf16.mxu0 0
      %684 = vmatpush1.bf16.xpose.msra.mxu0 0
      %685 = vmatprep.subr.bf16.mxu0 0
      %686 = vmatpush1.bf16.xpose.msra.mxu0 0
      %687 = vmatprep.subr.bf16.mxu0 0
      %688 = vmatpush1.bf16.xpose.msra.mxu0 0
      %689 = vmatprep.subr.bf16.mxu0 0
      %690 = vmatpush1.bf16.xpose.msra.mxu0 0
      %691 = vmatprep.subr.bf16.mxu0 0
      %692 = vmatpush1.bf16.xpose.msra.mxu0 0
      %693 = vmatprep.subr.bf16.mxu0 0
      %694 = vmatpush1.bf16.xpose.msra.mxu0 0
      %695 = vmatprep.subr.bf16.mxu0 0
      %696 = vmatpush1.bf16.xpose.msra.mxu0 0
      %697 = vmatprep.mubr.bf16.mxu0 0
      %698 = vmatmul.mubr.bf16.gmra.mrb[0].mxu0 %v660
      %v699 = vpop.f32.mrb[0].mxu0
      %v700 = vadd.f32 0.0, %v699
      %v701 = vpop.f32.mrb[0].mxu0
      %v702 = vpop.f32.mrb[0].mxu0
      %v703 = vadd.f32 0.0, %v702
      %v704 = vpop.f32.mrb[0].mxu0
      %705 = vdwg.mxu0
      %v706 = vmul.f32 %v700, 0.35355338
      %v707 = vmul.f32 %v703, 0.35355338
      %v708 = vsel %vm582, %v706, -inf
      %709 = vmax.xlane.f32.xlu0 %v708
      %v710 = vpop.xlane.xlu0 %709
      %v711 = vsel %vm582, %v707, -inf
      %712 = vmax.xlane.f32.xlu0 %v711
      %v713 = vpop.xlane.xlu0 %712
      %v714 = vsub.f32 %v706, %v710
      %v715 = vsub.f32 %v707, %v713
      %v716 = vmul.f32 %v714, 1.442695
      %v717 = vpow.pop %v716
      %v718 = vmul.f32 %v715, 1.442695
      %v719 = vpow.pop %v718
      %v720 = vsel %vm582, %v717, 0.0
      %721 = vadd.xlane.f32.xlu0 %v720
      %v722 = vpop.xlane.xlu0 %721
      %v723 = vsel %vm582, %v719, 0.0
      %724 = vadd.xlane.f32.xlu0 %v723
      %v725 = vpop.xlane.xlu0 %724
      %v726 = vrcp.pop %v722
      %v727 = vrcp.pop %v725
      %v728 = vpack.c.bf16 %v719, %v717
      %729 = vrot.lane.b32.xlu0 %v531, 88
      %v730 = vpop.permute.xlu0 %729
      %v733 = vsel %vm582, %v728, 0
      %735 = vmatprep.subr.bf16.mxu0 0
      %736 = vmatpush1.bf16.msra.mxu0 %v730
      %737 = vmatprep.subr.bf16.mxu0 0
      %738 = vmatpush1.bf16.msra.mxu0 0
      %739 = vmatprep.subr.bf16.mxu0 0
      %740 = vmatpush1.bf16.msra.mxu0 0
      %741 = vmatprep.subr.bf16.mxu0 0
      %742 = vmatpush1.bf16.msra.mxu0 0
      %743 = vmatprep.subr.bf16.mxu0 0
      %744 = vmatpush1.bf16.msra.mxu0 0
      %745 = vmatprep.subr.bf16.mxu0 0
      %746 = vmatpush1.bf16.msra.mxu0 0
      %747 = vmatprep.subr.bf16.mxu0 0
      %748 = vmatpush1.bf16.msra.mxu0 0
      %749 = vmatprep.subr.bf16.mxu0 0
      %750 = vmatpush1.bf16.msra.mxu0 0
      %751 = vmatprep.subr.bf16.mxu0 0
      %752 = vmatpush1.bf16.msra.mxu0 0
      %753 = vmatprep.subr.bf16.mxu0 0
      %754 = vmatpush1.bf16.msra.mxu0 0
      %755 = vmatprep.subr.bf16.mxu0 0
      %756 = vmatpush1.bf16.msra.mxu0 0
      %757 = vmatprep.subr.bf16.mxu0 0
      %758 = vmatpush1.bf16.msra.mxu0 0
      %759 = vmatprep.subr.bf16.mxu0 0
      %760 = vmatpush1.bf16.msra.mxu0 0
      %761 = vmatprep.subr.bf16.mxu0 0
      %762 = vmatpush1.bf16.msra.mxu0 0
      %763 = vmatprep.subr.bf16.mxu0 0
      %764 = vmatpush1.bf16.msra.mxu0 0
      %765 = vmatprep.subr.bf16.mxu0 0
      %766 = vmatpush1.bf16.msra.mxu0 0
      %767 = vmatprep.mubr.bf16.mxu0 0
      %768 = vmatmul.mubr.bf16.gmra.mrb[0].mxu0 %v733
      %v769 = vpop.f32.mrb[0].mxu0
      %v770 = vadd.f32 0.0, %v769
      %v771 = vpop.f32.mrb[0].mxu0
      %v772 = vpop.f32.mrb[0].mxu0
      %v773 = vadd.f32 0.0, %v772
      %v774 = vpop.f32.mrb[0].mxu0
      %775 = vdwg.mxu0
      %v776 = vmul.f32 %v770, %v726
      %v777 = vmul.f32 %v773, %v727
      %778 = vrot.lane.b32.xlu0 %v458, 112
      %v779 = vpop.permute.xlu0 %778
      %780 = vrot.lane.b32.xlu0 %v531, 112
      %v781 = vpop.permute.xlu0 %780
      %v783 = vsel %vm532, %v779, 0
      %v786 = vsel %vm532, %v781, 0
      %788 = vmatprep.subr.bf16.mxu0 0
      %789 = vmatpush1.bf16.xpose.msra.mxu0 %v786
      %790 = vmatprep.subr.bf16.mxu0 0
      %791 = vmatpush1.bf16.xpose.msra.mxu0 0
      %792 = vmatprep.subr.bf16.mxu0 0
      %793 = vmatpush1.bf16.xpose.msra.mxu0 0
      %794 = vmatprep.subr.bf16.mxu0 0
      %795 = vmatpush1.bf16.xpose.msra.mxu0 0
      %796 = vmatprep.subr.bf16.mxu0 0
      %797 = vmatpush1.bf16.xpose.msra.mxu0 0
      %798 = vmatprep.subr.bf16.mxu0 0
      %799 = vmatpush1.bf16.xpose.msra.mxu0 0
      %800 = vmatprep.subr.bf16.mxu0 0
      %801 = vmatpush1.bf16.xpose.msra.mxu0 0
      %802 = vmatprep.subr.bf16.mxu0 0
      %803 = vmatpush1.bf16.xpose.msra.mxu0 0
      %804 = vmatprep.subr.bf16.mxu0 0
      %805 = vmatpush1.bf16.xpose.msra.mxu0 0
      %806 = vmatprep.subr.bf16.mxu0 0
      %807 = vmatpush1.bf16.xpose.msra.mxu0 0
      %808 = vmatprep.subr.bf16.mxu0 0
      %809 = vmatpush1.bf16.xpose.msra.mxu0 0
      %810 = vmatprep.subr.bf16.mxu0 0
      %811 = vmatpush1.bf16.xpose.msra.mxu0 0
      %812 = vmatprep.subr.bf16.mxu0 0
      %813 = vmatpush1.bf16.xpose.msra.mxu0 0
      %814 = vmatprep.subr.bf16.mxu0 0
      %815 = vmatpush1.bf16.xpose.msra.mxu0 0
      %816 = vmatprep.subr.bf16.mxu0 0
      %817 = vmatpush1.bf16.xpose.msra.mxu0 0
      %818 = vmatprep.subr.bf16.mxu0 0
      %819 = vmatpush1.bf16.xpose.msra.mxu0 0
      %820 = vmatprep.mubr.bf16.mxu0 0
      %821 = vmatmul.mubr.bf16.gmra.mrb[0].mxu0 %v783
      %v822 = vpop.f32.mrb[0].mxu0
      %v823 = vadd.f32 0.0, %v822
      %v824 = vpop.f32.mrb[0].mxu0
      %v825 = vpop.f32.mrb[0].mxu0
      %v826 = vadd.f32 0.0, %v825
      %v827 = vpop.f32.mrb[0].mxu0
      %828 = vdwg.mxu0
      %v829 = vmul.f32 %v823, 0.35355338
      %v830 = vmul.f32 %v826, 0.35355338
      %v831 = vsel %vm582, %v829, -inf
      %832 = vmax.xlane.f32.xlu0 %v831
      %v833 = vpop.xlane.xlu0 %832
      %v834 = vsel %vm582, %v830, -inf
      %835 = vmax.xlane.f32.xlu0 %v834
      %v836 = vpop.xlane.xlu0 %835
      %v837 = vsub.f32 %v829, %v833
      %v838 = vsub.f32 %v830, %v836
      %v839 = vmul.f32 %v837, 1.442695
      %v840 = vpow.pop %v839
      %v841 = vmul.f32 %v838, 1.442695
      %v842 = vpow.pop %v841
      %v843 = vsel %vm582, %v840, 0.0
      %844 = vadd.xlane.f32.xlu0 %v843
      %v845 = vpop.xlane.xlu0 %844
      %v846 = vsel %vm582, %v842, 0.0
      %847 = vadd.xlane.f32.xlu0 %v846
      %v848 = vpop.xlane.xlu0 %847
      %v849 = vrcp.pop %v845
      %v850 = vrcp.pop %v848
      %v851 = vpack.c.bf16 %v842, %v840
      %852 = vrot.lane.b32.xlu0 %v531, 80
      %v853 = vpop.permute.xlu0 %852
      %v856 = vsel %vm582, %v851, 0
      %858 = vmatprep.subr.bf16.mxu0 0
      %859 = vmatpush1.bf16.msra.mxu0 %v853
      %860 = vmatprep.subr.bf16.mxu0 0
      %861 = vmatpush1.bf16.msra.mxu0 0
      %862 = vmatprep.subr.bf16.mxu0 0
      %863 = vmatpush1.bf16.msra.mxu0 0
      %864 = vmatprep.subr.bf16.mxu0 0
      %865 = vmatpush1.bf16.msra.mxu0 0
      %866 = vmatprep.subr.bf16.mxu0 0
      %867 = vmatpush1.bf16.msra.mxu0 0
      %868 = vmatprep.subr.bf16.mxu0 0
      %869 = vmatpush1.bf16.msra.mxu0 0
      %870 = vmatprep.subr.bf16.mxu0 0
      %871 = vmatpush1.bf16.msra.mxu0 0
      %872 = vmatprep.subr.bf16.mxu0 0
      %873 = vmatpush1.bf16.msra.mxu0 0
      %874 = vmatprep.subr.bf16.mxu0 0
      %875 = vmatpush1.bf16.msra.mxu0 0
      %876 = vmatprep.subr.bf16.mxu0 0
      %877 = vmatpush1.bf16.msra.mxu0 0
      %878 = vmatprep.subr.bf16.mxu0 0
      %879 = vmatpush1.bf16.msra.mxu0 0
      %880 = vmatprep.subr.bf16.mxu0 0
      %881 = vmatpush1.bf16.msra.mxu0 0
      %882 = vmatprep.subr.bf16.mxu0 0
      %883 = vmatpush1.bf16.msra.mxu0 0
      %884 = vmatprep.subr.bf16.mxu0 0
      %885 = vmatpush1.bf16.msra.mxu0 0
      %886 = vmatprep.subr.bf16.mxu0 0
      %887 = vmatpush1.bf16.msra.mxu0 0
      %888 = vmatprep.subr.bf16.mxu0 0
      %889 = vmatpush1.bf16.msra.mxu0 0
      %890 = vmatprep.mubr.bf16.mxu0 0
      %891 = vmatmul.mubr.bf16.gmra.mrb[0].mxu0 %v856
      %v892 = vpop.f32.mrb[0].mxu0
      %v893 = vadd.f32 0.0, %v892
      %v894 = vpop.f32.mrb[0].mxu0
      %v895 = vpop.f32.mrb[0].mxu0
      %v896 = vadd.f32 0.0, %v895
      %v897 = vpop.f32.mrb[0].mxu0
      %898 = vdwg.mxu0
      %v899 = vmul.f32 %v893, %v849
      %v900 = vmul.f32 %v896, %v850
      %901 = vrot.lane.b32.xlu0 %v458, 104
      %v902 = vpop.permute.xlu0 %901
      %903 = vrot.lane.b32.xlu0 %v531, 104
      %v904 = vpop.permute.xlu0 %903
      %v906 = vsel %vm532, %v902, 0
      %v909 = vsel %vm532, %v904, 0
      %911 = vmatprep.subr.bf16.mxu0 0
      %912 = vmatpush1.bf16.xpose.msra.mxu0 %v909
      %913 = vmatprep.subr.bf16.mxu0 0
      %914 = vmatpush1.bf16.xpose.msra.mxu0 0
      %915 = vmatprep.subr.bf16.mxu0 0
      %916 = vmatpush1.bf16.xpose.msra.mxu0 0
      %917 = vmatprep.subr.bf16.mxu0 0
      %918 = vmatpush1.bf16.xpose.msra.mxu0 0
      %919 = vmatprep.subr.bf16.mxu0 0
      %920 = vmatpush1.bf16.xpose.msra.mxu0 0
      %921 = vmatprep.subr.bf16.mxu0 0
      %922 = vmatpush1.bf16.xpose.msra.mxu0 0
      %923 = vmatprep.subr.bf16.mxu0 0
      %924 = vmatpush1.bf16.xpose.msra.mxu0 0
      %925 = vmatprep.subr.bf16.mxu0 0
      %926 = vmatpush1.bf16.xpose.msra.mxu0 0
      %927 = vmatprep.subr.bf16.mxu0 0
      %928 = vmatpush1.bf16.xpose.msra.mxu0 0
      %929 = vmatprep.subr.bf16.mxu0 0
      %930 = vmatpush1.bf16.xpose.msra.mxu0 0
      %931 = vmatprep.subr.bf16.mxu0 0
      %932 = vmatpush1.bf16.xpose.msra.mxu0 0
      %933 = vmatprep.subr.bf16.mxu0 0
      %934 = vmatpush1.bf16.xpose.msra.mxu0 0
      %935 = vmatprep.subr.bf16.mxu0 0
      %936 = vmatpush1.bf16.xpose.msra.mxu0 0
      %937 = vmatprep.subr.bf16.mxu0 0
      %938 = vmatpush1.bf16.xpose.msra.mxu0 0
      %939 = vmatprep.subr.bf16.mxu0 0
      %940 = vmatpush1.bf16.xpose.msra.mxu0 0
      %941 = vmatprep.subr.bf16.mxu0 0
      %942 = vmatpush1.bf16.xpose.msra.mxu0 0
      %943 = vmatprep.mubr.bf16.mxu0 0
      %944 = vmatmul.mubr.bf16.gmra.mrb[0].mxu0 %v906
      %v945 = vpop.f32.mrb[0].mxu0
      %v946 = vadd.f32 0.0, %v945
      %v947 = vpop.f32.mrb[0].mxu0
      %v948 = vpop.f32.mrb[0].mxu0
      %v949 = vadd.f32 0.0, %v948
      %v950 = vpop.f32.mrb[0].mxu0
      %951 = vdwg.mxu0
      %v952 = vmul.f32 %v946, 0.35355338
      %v953 = vmul.f32 %v949, 0.35355338
      %v954 = vsel %vm582, %v952, -inf
      %955 = vmax.xlane.f32.xlu0 %v954
      %v956 = vpop.xlane.xlu0 %955
      %v957 = vsel %vm582, %v953, -inf
      %958 = vmax.xlane.f32.xlu0 %v957
      %v959 = vpop.xlane.xlu0 %958
      %v960 = vsub.f32 %v952, %v956
      %v961 = vsub.f32 %v953, %v959
      %v962 = vmul.f32 %v960, 1.442695
      %v963 = vpow.pop %v962
      %v964 = vmul.f32 %v961, 1.442695
      %v965 = vpow.pop %v964
      %v966 = vsel %vm582, %v963, 0.0
      %967 = vadd.xlane.f32.xlu0 %v966
      %v968 = vpop.xlane.xlu0 %967
      %v969 = vsel %vm582, %v965, 0.0
      %970 = vadd.xlane.f32.xlu0 %v969
      %v971 = vpop.xlane.xlu0 %970
      %v972 = vrcp.pop %v968
      %v973 = vrcp.pop %v971
      %v974 = vpack.c.bf16 %v965, %v963
      %975 = vrot.lane.b32.xlu0 %v531, 72
      %v976 = vpop.permute.xlu0 %975
      %v979 = vsel %vm582, %v974, 0
      %981 = vmatprep.subr.bf16.mxu0 0
      %982 = vmatpush1.bf16.msra.mxu0 %v976
      %983 = vmatprep.subr.bf16.mxu0 0
      %984 = vmatpush1.bf16.msra.mxu0 0
      %985 = vmatprep.subr.bf16.mxu0 0
      %986 = vmatpush1.bf16.msra.mxu0 0
      %987 = vmatprep.subr.bf16.mxu0 0
      %988 = vmatpush1.bf16.msra.mxu0 0
      %989 = vmatprep.subr.bf16.mxu0 0
      %990 = vmatpush1.bf16.msra.mxu0 0
      %991 = vmatprep.subr.bf16.mxu0 0
      %992 = vmatpush1.bf16.msra.mxu0 0
      %993 = vmatprep.subr.bf16.mxu0 0
      %994 = vmatpush1.bf16.msra.mxu0 0
      %995 = vmatprep.subr.bf16.mxu0 0
      %996 = vmatpush1.bf16.msra.mxu0 0
      %997 = vmatprep.subr.bf16.mxu0 0
      %998 = vmatpush1.bf16.msra.mxu0 0
      %999 = vmatprep.subr.bf16.mxu0 0
      %1000 = vmatpush1.bf16.msra.mxu0 0
      %1001 = vmatprep.subr.bf16.mxu0 0
      %1002 = vmatpush1.bf16.msra.mxu0 0
      %1003 = vmatprep.subr.bf16.mxu0 0
      %1004 = vmatpush1.bf16.msra.mxu0 0
      %1005 = vmatprep.subr.bf16.mxu0 0
      %1006 = vmatpush1.bf16.msra.mxu0 0
      %1007 = vmatprep.subr.bf16.mxu0 0
      %1008 = vmatpush1.bf16.msra.mxu0 0
      %1009 = vmatprep.subr.bf16.mxu0 0
      %1010 = vmatpush1.bf16.msra.mxu0 0
      %1011 = vmatprep.subr.bf16.mxu0 0
      %1012 = vmatpush1.bf16.msra.mxu0 0
      %1013 = vmatprep.mubr.bf16.mxu0 0
      %1014 = vmatmul.mubr.bf16.gmra.mrb[0].mxu0 %v979
      %v1015 = vpop.f32.mrb[0].mxu0
      %v1016 = vadd.f32 0.0, %v1015
      %v1017 = vpop.f32.mrb[0].mxu0
      %v1018 = vpop.f32.mrb[0].mxu0
      %v1019 = vadd.f32 0.0, %v1018
      %v1020 = vpop.f32.mrb[0].mxu0
      %1021 = vdwg.mxu0
      %v1022 = vmul.f32 %v1016, %v972
      %v1023 = vmul.f32 %v1019, %v973
      %1026 = vrot.lane.b32.xlu0 %v776, 8
      %v1027 = vpop.permute.xlu0 %1026
      %1028 = vrot.lane.b32.xlu0 %v777, 8
      %v1029 = vpop.permute.xlu0 %1028
      %1034 = vrot.lane.b32.xlu0 %v899, 16
      %v1035 = vpop.permute.xlu0 %1034
      %1036 = vrot.lane.b32.xlu0 %v900, 16
      %v1037 = vpop.permute.xlu0 %1036
      %1042 = vrot.lane.b32.xlu0 %v1022, 24
      %v1043 = vpop.permute.xlu0 %1042
      %1044 = vrot.lane.b32.xlu0 %v1023, 24
      %v1045 = vpop.permute.xlu0 %1044
      %v1048 = vsel %vm532, %v652, %v1027
      %v1049 = vsel %vm532, %v653, %v1029
      %v1050 = vsel %vm582, %v1048, %v1035
      %v1051 = vsel %vm582, %v1049, %v1037
      %vm1052 = vcmask 195584
      %v1053 = vsel %vm1052, %v1050, %v1043
      %v1054 = vsel %vm1052, %v1051, %v1045
      %v1055 = vpack.c.bf16 %v1054, %v1053
      %v1056 = vld [vmem:[%s6] sm:$0xf]
      %v1057 = vld [vmem:[%s6 + $0x4] sm:$0xf]
      %v1058 = vld [vmem:[%s6 + $0x8] sm:$0xf]
      %v1059 = vld [vmem:[%s6 + $0xc] sm:$0xf]
      %v1060 = vld [vmem:[%s7] sm:$0x1]
      %v1062 = vlaneseq
      %v1063 = vshrl.u32 %v1062, 7
      %v1064 = vsub.s32 0, %v1063
      %v1065 = vrot.slane %v1060, %v1064
      %v1071 = vunpack.c.l.b16 %v1056
      %v1072 = vunpack.c.l.b16 %v1057
      %v1073 = vunpack.c.l.b16 %v1058
      %v1074 = vunpack.c.l.b16 %v1059
      %v1075 = vpack.c.b16 %v1072, %v1071
      %v1076 = vpack.c.b16 %v1074, %v1073
      %v1080 = vsel %vm413, %v1055, 0
      %1082 = vmatprep.subr.bf16.mxu0 0
      %1083 = vmatpush1.bf16.msra.mxu0 %v1075
      %1084 = vmatprep.subr.bf16.mxu0 0
      %1085 = vmatpush1.bf16.msra.mxu0 %v1076
      %1086 = vmatprep.subr.bf16.mxu0 0
      %1087 = vmatpush1.bf16.msra.mxu0 0
      %1088 = vmatprep.subr.bf16.mxu0 0
      %1089 = vmatpush1.bf16.msra.mxu0 0
      %1090 = vmatprep.subr.bf16.mxu0 0
      %1091 = vmatpush1.bf16.msra.mxu0 0
      %1092 = vmatprep.subr.bf16.mxu0 0
      %1093 = vmatpush1.bf16.msra.mxu0 0
      %1094 = vmatprep.subr.bf16.mxu0 0
      %1095 = vmatpush1.bf16.msra.mxu0 0
      %1096 = vmatprep.subr.bf16.mxu0 0
      %1097 = vmatpush1.bf16.msra.mxu0 0
      %1098 = vmatprep.subr.bf16.mxu0 0
      %1099 = vmatpush1.bf16.msra.mxu0 0
      %1100 = vmatprep.subr.bf16.mxu0 0
      %1101 = vmatpush1.bf16.msra.mxu0 0
      %1102 = vmatprep.subr.bf16.mxu0 0
      %1103 = vmatpush1.bf16.msra.mxu0 0
      %1104 = vmatprep.subr.bf16.mxu0 0
      %1105 = vmatpush1.bf16.msra.mxu0 0
      %1106 = vmatprep.subr.bf16.mxu0 0
      %1107 = vmatpush1.bf16.msra.mxu0 0
      %1108 = vmatprep.subr.bf16.mxu0 0
      %1109 = vmatpush1.bf16.msra.mxu0 0
      %1110 = vmatprep.subr.bf16.mxu0 0
      %1111 = vmatpush1.bf16.msra.mxu0 0
      %1112 = vmatprep.subr.bf16.mxu0 0
      %1113 = vmatpush1.bf16.msra.mxu0 0
      %1114 = vmatprep.mubr.bf16.mxu0 0
      %1115 = vmatmul.mubr.bf16.gmra.mrb[0].mxu0 %v1080
      %v1116 = vpop.f32.mrb[0].mxu0
      %v1117 = vadd.f32 %v1065, %v1116
      %v1118 = vpop.f32.mrb[0].mxu0
      %v1119 = vpop.f32.mrb[0].mxu0
      %v1120 = vadd.f32 %v1065, %v1119
      %v1121 = vpop.f32.mrb[0].mxu0
      %1122 = vdwg.mxu0
      %v1123 = vunpack.c.l.bf16 %v381
      %v1124 = vunpack.c.l.bf16 %v382
      %v1125 = vadd.f32 %v1123, %v1117
      %v1126 = vadd.f32 %v1124, %v1120
      %v1127 = vld [vmem:[%s8] sm:$0x1]
      %v1128 = vld [vmem:[%s9] sm:$0x1]
      %v1129 = vsel %vm413, %v1125, 0.0
      %1130 = vadd.xlane.f32.xlu0 %v1129
      %v1131 = vpop.xlane.xlu0 %1130
      %v1132 = vsel %vm413, %v1126, 0.0
      %1133 = vadd.xlane.f32.xlu0 %v1132
      %v1134 = vpop.xlane.xlu0 %1133
      %v1135 = vrcp.pop 32.0
      %v1136 = vmul.f32 %v1131, %v1135
      %v1137 = vmul.f32 %v1134, %v1135
      %v1138 = vsub.f32 %v1125, %v1136
      %v1139 = vsub.f32 %v1126, %v1137
      %v1140 = vmul.f32 %v1138, %v1138
      %v1141 = vmul.f32 %v1139, %v1139
      %v1142 = vsel %vm413, %v1140, 0.0
      %1143 = vadd.xlane.f32.xlu0 %v1142
      %v1144 = vpop.xlane.xlu0 %1143
      %v1145 = vsel %vm413, %v1141, 0.0
      %1146 = vadd.xlane.f32.xlu0 %v1145
      %v1147 = vpop.xlane.xlu0 %1146
      %v1148 = vmul.f32 %v1144, %v1135
      %v1149 = vmul.f32 %v1147, %v1135
      %v1150 = vadd.f32 %v1148, 1e-05
      %v1151 = vadd.f32 %v1149, 1e-05
      %v1152 = vrsqrt.pop %v1150
      %v1153 = vrsqrt.pop %v1151
      %v1154 = vmul.f32 %v1138, %v1152
      %v1155 = vmul.f32 %v1139, %v1153
      %v1157 = vlaneseq
      %v1158 = vshrl.u32 %v1157, 7
      %v1159 = vsub.s32 0, %v1158
      %v1160 = vrot.slane %v1127, %v1159
      %v1162 = vmul.f32 %v1154, %v1160
      %v1163 = vmul.f32 %v1155, %v1160
      %v1165 = vlaneseq
      %v1166 = vshrl.u32 %v1165, 7
      %v1167 = vsub.s32 0, %v1166
      %v1168 = vrot.slane %v1128, %v1167
      %v1170 = vadd.f32 %v1162, %v1168
      %v1171 = vadd.f32 %v1163, %v1168
      %v1172 = vpack.c.bf16 %v1171, %v1170
      %v1174 = vunpack.c.l.b16 %v1172
      %v1175 = vunpack.c.h.b16 %v1172
      %v1176 = vpack.c.b16 %v1174, %v1174
      %v1177 = vpack.c.b16 %v1175, %v1175
      %vm1180 = vcmask 257024
      %1181 = vst.msk [vmem:[%s379] sm:$0xf] %vm1180, %v1176
      %1182 = vst.msk [vmem:[%s379 + $0x4] sm:$0xf] %vm1180, %v1177
      %p1183 = scmp.lt.s32.totalorder %s21, 1
      %s1184 = scalar_select %p1183, %s21, 1
      %s1185 = smul.addr %s1184, 2
      %s1186 = smul.addr %s1185, 4
      %s1187 = scalar_lea.vmem %s10, %s1186
      // Predicated region
      $region61: #{informer_forward.12} parent=59 // pred_check
        %p1188 = pneg %p259
      $region62: #{informer_forward.12} parent=59 // pred_check_branch
        %1190 = sbr.rel (%p1188) target = $region64
      $region63: #{informer_forward.12} parent=59 // pred_region
        _
      $region64: #{informer_forward.12} parent=59 // pred_fallthru
        _
    $region60: #{informer_forward.12} parent=5 // pred_fallthru
      _
    %p1191 = scmp.le.s32.totalorder 2, %s16
    // Predicated region
    $region65: #{informer_forward.12} parent=5 // pred_check
      %p1192 = pneg %p1191
    $region66: #{informer_forward.12} parent=5 // pred_check_branch
      %1194 = sbr.rel (%p1192) target = $region68
    $region67: #{informer_forward.12} parent=5 // pred_region
      %s1195 = ssub.s32 %s16, 2
      // Predicated region
      $region69: #{informer_forward.12} parent=67 // pred_check
        %p1196 = pneg %p265
      $region70: #{informer_forward.12} parent=67 // pred_check_branch
        %1198 = sbr.rel (%p1196) target = $region72
      $region71: #{informer_forward.12} parent=67 // pred_region
        %p1199 = scmp.lt.s32.totalorder %s22, 1
        %s1200 = scalar_select %p1199, %s22, 1
        %s1201 = smul.addr %s1200, 2
        %s1202 = smul.addr %s1201, 4
        %s1203 = scalar_lea.vmem %s10, %s1202
      $region72: #{informer_forward.12} parent=67 // pred_fallthru
        _
    $region68: #{informer_forward.12} parent=5 // pred_fallthru
      _
  $region6: #{informer_forward.12} parent=0 // loop_footer
    %s20 = sadd.s32 1, %s16
  $region7: #{informer_forward.12} parent=0 // loop_footer_branch
    %15 = sbr.rel target = $region3
  $region8: #{informer_forward.12} parent=0 // loop_exit
    _

// kernel: informer_forward.13
$region0: #{informer_forward.13}
  #allocation0 [shape = 'u32[]', space=smem, size = 0x4, offset = 0x4, fixed_abs, tag = 'smem constant byte address 0x4 - core index']
  #allocation1 [shape = 'u32[144,128]{1,0:T(1,128)}', space=vmem, size = 0x12000, scoped, tag = 'internal scratch']
  %s0 = inlined_call_operand.vmem [shape: bf16[32,32], index: 0, kind: input, shape index: {}]
  %s1 = inlined_call_operand.vmem [shape: bf16[32,64], index: 1, kind: input, shape index: {}]
  %s2 = inlined_call_operand.vmem [shape: bf16[64,32], index: 2, kind: input, shape index: {}]
  %s3 = inlined_call_operand.vmem [shape: f32[1,32], index: 3, kind: input, shape index: {}]
  %s4 = inlined_call_operand.vmem [shape: f32[1,32], index: 4, kind: input, shape index: {}]
  %s5 = inlined_call_operand.vmem [shape: bf16[32,32], index: 5, kind: output, shape index: {}]
  %s6 = sld [smem:[#allocation0]]
  $region30: #{informer_forward.13} parent=0
    _
  %s8 = ssub.s32 1, %s6
  %s9 = scalar_select 0, %s8, %s6
  // Predicated region
  $region2: #{informer_forward.13} parent=0 // pred_check
    _
  $region3: #{informer_forward.13} parent=0 // pred_check_branch
    %11 = sbr.rel (0) target = $region5
  $region4: #{informer_forward.13} parent=0 // pred_region
    _
  $region5: #{informer_forward.13} parent=0 // pred_fallthru
    _
  // Predicated region
  $region6: #{informer_forward.13} parent=0 // pred_check
    _
  $region7: #{informer_forward.13} parent=0 // pred_check_branch
    %13 = sbr.rel (0) target = $region9
  $region8: #{informer_forward.13} parent=0 // pred_region
    _
  $region9: #{informer_forward.13} parent=0 // pred_fallthru
    _
  // Predicated region
  $region10: #{informer_forward.13} parent=0 // pred_check
    _
  $region11: #{informer_forward.13} parent=0 // pred_check_branch
    %15 = sbr.rel (0) target = $region13
  $region12: #{informer_forward.13} parent=0 // pred_region
    _
  $region13: #{informer_forward.13} parent=0 // pred_fallthru
    _
  // Predicated region
  $region14: #{informer_forward.13} parent=0 // pred_check
    _
  $region15: #{informer_forward.13} parent=0 // pred_check_branch
    %17 = sbr.rel (0) target = $region17
  $region16: #{informer_forward.13} parent=0 // pred_region
    _
  $region17: #{informer_forward.13} parent=0 // pred_fallthru
    _
  // Predicated region
  $region18: #{informer_forward.13} parent=0 // pred_check
    _
  $region19: #{informer_forward.13} parent=0 // pred_check_branch
    %19 = sbr.rel (0) target = $region21
  $region20: #{informer_forward.13} parent=0 // pred_region
    _
  $region21: #{informer_forward.13} parent=0 // pred_fallthru
    _
  %v21 = vld [vmem:[%s0] sm:$0xf]
  %v22 = vld [vmem:[%s0 + $0x4] sm:$0xf]
  %v23 = vld [vmem:[%s0 + $0x8] sm:$0xf]
  %v24 = vld [vmem:[%s0 + $0xc] sm:$0xf]
  %v25 = vld [vmem:[%s1] sm:$0xf]
  %v26 = vld [vmem:[%s1 + $0x4] sm:$0xf]
  %v27 = vld [vmem:[%s1 + $0x8] sm:$0xf]
  %v28 = vld [vmem:[%s1 + $0xc] sm:$0xf]
  %v33 = vunpack.c.l.b16 %v21
  %v34 = vunpack.c.l.b16 %v22
  %v35 = vunpack.c.l.b16 %v23
  %v36 = vunpack.c.l.b16 %v24
  %v37 = vpack.c.b16 %v34, %v33
  %v38 = vpack.c.b16 %v36, %v35
  %v43 = vunpack.c.l.b16 %v25
  %v44 = vunpack.c.l.b16 %v26
  %v45 = vunpack.c.l.b16 %v27
  %v46 = vunpack.c.l.b16 %v28
  %v47 = vpack.c.b16 %v44, %v43
  %v48 = vpack.c.b16 %v46, %v45
  %vm51 = vcmask 261120
  %v53 = vsel %vm51, %v37, 0
  %v56 = vsel %vm51, %v38, 0
  %58 = vmatprep.subr.bf16.mxu0 0
  %59 = vmatpush1.bf16.msra.mxu0 %v47
  %60 = vmatprep.subr.bf16.mxu0 0
  %61 = vmatpush1.bf16.msra.mxu0 %v48
  %62 = vmatprep.subr.bf16.mxu0 0
  %63 = vmatpush1.bf16.msra.mxu0 0
  %64 = vmatprep.subr.bf16.mxu0 0
  %65 = vmatpush1.bf16.msra.mxu0 0
  %66 = vmatprep.subr.bf16.mxu0 0
  %67 = vmatpush1.bf16.msra.mxu0 0
  %68 = vmatprep.subr.bf16.mxu0 0
  %69 = vmatpush1.bf16.msra.mxu0 0
  %70 = vmatprep.subr.bf16.mxu0 0
  %71 = vmatpush1.bf16.msra.mxu0 0
  %72 = vmatprep.subr.bf16.mxu0 0
  %73 = vmatpush1.bf16.msra.mxu0 0
  %74 = vmatprep.subr.bf16.mxu0 0
  %75 = vmatpush1.bf16.msra.mxu0 0
  %76 = vmatprep.subr.bf16.mxu0 0
  %77 = vmatpush1.bf16.msra.mxu0 0
  %78 = vmatprep.subr.bf16.mxu0 0
  %79 = vmatpush1.bf16.msra.mxu0 0
  %80 = vmatprep.subr.bf16.mxu0 0
  %81 = vmatpush1.bf16.msra.mxu0 0
  %82 = vmatprep.subr.bf16.mxu0 0
  %83 = vmatpush1.bf16.msra.mxu0 0
  %84 = vmatprep.subr.bf16.mxu0 0
  %85 = vmatpush1.bf16.msra.mxu0 0
  %86 = vmatprep.subr.bf16.mxu0 0
  %87 = vmatpush1.bf16.msra.mxu0 0
  %88 = vmatprep.subr.bf16.mxu0 0
  %89 = vmatpush1.bf16.msra.mxu0 0
  %90 = vmatprep.mubr.bf16.mxu0 0
  %91 = vmatmul.mubr.bf16.gmra.mrb[0].mxu0 %v53
  %v92 = vpop.f32.mrb[0].mxu0
  %v93 = vadd.f32 0.0, %v92
  %v94 = vpop.f32.mrb[0].mxu0
  %v95 = vpop.f32.mrb[0].mxu0
  %v96 = vadd.f32 0.0, %v95
  %v97 = vpop.f32.mrb[0].mxu0
  %98 = vmatprep.mubr.bf16.mxu0 0
  %99 = vmatmul.mubr.bf16.gmra.mrb[0].mxu0 %v56
  %v100 = vpop.f32.mrb[0].mxu0
  %v101 = vadd.f32 0.0, %v100
  %v102 = vpop.f32.mrb[0].mxu0
  %v103 = vpop.f32.mrb[0].mxu0
  %v104 = vadd.f32 0.0, %v103
  %v105 = vpop.f32.mrb[0].mxu0
  %106 = vdwg.mxu0
  %v107 = vmul.f32 %v93, 0.5
  %v108 = vmul.f32 %v96, 0.5
  %v109 = vmul.f32 %v101, 0.5
  %v110 = vmul.f32 %v104, 0.5
  %v111 = vmul.f32 %v93, 0.70710677
  %v112 = vmul.f32 %v96, 0.70710677
  %v113 = vmul.f32 %v101, 0.70710677
  %v114 = vmul.f32 %v104, 0.70710677
  %vm115 = vcmp.ge.f32.partialorder %v111, 0.0
  %vm116 = vcmp.ge.f32.partialorder %v112, 0.0
  %vm117 = vcmp.ge.f32.partialorder %v113, 0.0
  %vm118 = vcmp.ge.f32.partialorder %v114, 0.0
  %v119 = vsel %vm115, 1.0, -1.0
  %v120 = vsel %vm116, 1.0, -1.0
  %v121 = vsel %vm117, 1.0, -1.0
  %v122 = vsel %vm118, 1.0, -1.0
  %v123 = vand.u32 2147483647, %v111
  %v124 = vand.u32 2147483647, %v112
  %v125 = vand.u32 2147483647, %v113
  %v126 = vand.u32 2147483647, %v114
  %v127 = vmul.f32 %v123, 0.3275911
  %v128 = vmul.f32 %v124, 0.3275911
  %v129 = vmul.f32 %v125, 0.3275911
  %v130 = vmul.f32 %v126, 0.3275911
  %v131 = vadd.f32 %v127, 1.0
  %v132 = vadd.f32 %v128, 1.0
  %v133 = vadd.f32 %v129, 1.0
  %v134 = vadd.f32 %v130, 1.0
  %v135 = vrcp.pop %v131
  %v136 = vmul.f32 1.0, %v135
  %v137 = vrcp.pop %v132
  %v138 = vmul.f32 1.0, %v137
  %v139 = vrcp.pop %v133
  %v140 = vmul.f32 1.0, %v139
  %v141 = vrcp.pop %v134
  %v142 = vmul.f32 1.0, %v141
  %v143 = vmul.f32 %v136, 1.0614054
  %v144 = vmul.f32 %v138, 1.0614054
  %v145 = vmul.f32 %v140, 1.0614054
  %v146 = vmul.f32 %v142, 1.0614054
  %v147 = vadd.f32 %v143, -1.4531521
  %v148 = vadd.f32 %v144, -1.4531521
  %v149 = vadd.f32 %v145, -1.4531521
  %v150 = vadd.f32 %v146, -1.4531521
  %v151 = vmul.f32 %v147, %v136
  %v152 = vmul.f32 %v148, %v138
  %v153 = vmul.f32 %v149, %v140
  %v154 = vmul.f32 %v150, %v142
  %v155 = vadd.f32 %v151, 1.4214138
  %v156 = vadd.f32 %v152, 1.4214138
  %v157 = vadd.f32 %v153, 1.4214138
  %v158 = vadd.f32 %v154, 1.4214138
  %v159 = vmul.f32 %v155, %v136
  %v160 = vmul.f32 %v156, %v138
  %v161 = vmul.f32 %v157, %v140
  %v162 = vmul.f32 %v158, %v142
  %v163 = vadd.f32 %v159, -0.28449672
  %v164 = vadd.f32 %v160, -0.28449672
  %v165 = vadd.f32 %v161, -0.28449672
  %v166 = vadd.f32 %v162, -0.28449672
  %v167 = vmul.f32 %v163, %v136
  %v168 = vmul.f32 %v164, %v138
  %v169 = vmul.f32 %v165, %v140
  %v170 = vmul.f32 %v166, %v142
  %v171 = vadd.f32 %v167, 0.2548296
  %v172 = vadd.f32 %v168, 0.2548296
  %v173 = vadd.f32 %v169, 0.2548296
  %v174 = vadd.f32 %v170, 0.2548296
  %v175 = vmul.f32 %v171, %v136
  %v176 = vmul.f32 %v172, %v138
  %v177 = vmul.f32 %v173, %v140
  %v178 = vmul.f32 %v174, %v142
  %v179 = vsub.f32 0.0, %v123
  %v180 = vsub.f32 0.0, %v124
  %v181 = vsub.f32 0.0, %v125
  %v182 = vsub.f32 0.0, %v126
  %v183 = vmul.f32 %v179, %v123
  %v184 = vmul.f32 %v180, %v124
  %v185 = vmul.f32 %v181, %v125
  %v186 = vmul.f32 %v182, %v126
  %v187 = vmul.f32 %v183, 1.442695
  %v188 = vpow.pop %v187
  %v189 = vmul.f32 %v184, 1.442695
  %v190 = vpow.pop %v189
  %v191 = vmul.f32 %v185, 1.442695
  %v192 = vpow.pop %v191
  %v193 = vmul.f32 %v186, 1.442695
  %v194 = vpow.pop %v193
  %v195 = vmul.f32 %v175, %v188
  %v196 = vmul.f32 %v176, %v190
  %v197 = vmul.f32 %v177, %v192
  %v198 = vmul.f32 %v178, %v194
  %v199 = vsub.f32 1.0, %v195
  %v200 = vsub.f32 1.0, %v196
  %v201 = vsub.f32 1.0, %v197
  %v202 = vsub.f32 1.0, %v198
  %v203 = vmul.f32 %v119, %v199
  %v204 = vmul.f32 %v120, %v200
  %v205 = vmul.f32 %v121, %v201
  %v206 = vmul.f32 %v122, %v202
  %v207 = vadd.f32 %v203, 1.0
  %v208 = vadd.f32 %v204, 1.0
  %v209 = vadd.f32 %v205, 1.0
  %v210 = vadd.f32 %v206, 1.0
  %v211 = vmul.f32 %v107, %v207
  %v212 = vmul.f32 %v108, %v208
  %v213 = vmul.f32 %v109, %v209
  %v214 = vmul.f32 %v110, %v210
  %v215 = vpack.c.bf16 %v212, %v211
  %v216 = vpack.c.bf16 %v214, %v213
  %v217 = vld [vmem:[%s2] sm:$0xf]
  %v218 = vld [vmem:[%s2 + $0x4] sm:$0xf]
  %v219 = vld [vmem:[%s2 + $0x8] sm:$0xf]
  %v220 = vld [vmem:[%s2 + $0xc] sm:$0xf]
  %v221 = vld [vmem:[%s2 + $0x10] sm:$0xf]
  %v222 = vld [vmem:[%s2 + $0x14] sm:$0xf]
  %v223 = vld [vmem:[%s2 + $0x18] sm:$0xf]
  %v224 = vld [vmem:[%s2 + $0x1c] sm:$0xf]
  %v233 = vunpack.c.l.b16 %v217
  %v234 = vunpack.c.l.b16 %v218
  %v235 = vunpack.c.l.b16 %v219
  %v236 = vunpack.c.l.b16 %v220
  %v237 = vunpack.c.l.b16 %v221
  %v238 = vunpack.c.l.b16 %v222
  %v239 = vunpack.c.l.b16 %v223
  %v240 = vunpack.c.l.b16 %v224
  %v241 = vpack.c.b16 %v234, %v233
  %v242 = vpack.c.b16 %v236, %v235
  %v243 = vpack.c.b16 %v238, %v237
  %v244 = vpack.c.b16 %v240, %v239
  %vm249 = vcmask 523264
  %v251 = vsel %vm249, %v215, 0
  %v254 = vsel %vm249, %v216, 0
  %256 = vmatprep.subr.bf16.mxu0 0
  %257 = vmatpush1.bf16.msra.mxu0 %v241
  %258 = vmatprep.subr.bf16.mxu0 0
  %259 = vmatpush1.bf16.msra.mxu0 %v242
  %260 = vmatprep.subr.bf16.mxu0 0
  %261 = vmatpush1.bf16.msra.mxu0 %v243
  %262 = vmatprep.subr.bf16.mxu0 0
  %263 = vmatpush1.bf16.msra.mxu0 %v244
  %264 = vmatprep.subr.bf16.mxu0 0
  %265 = vmatpush1.bf16.msra.mxu0 0
  %266 = vmatprep.subr.bf16.mxu0 0
  %267 = vmatpush1.bf16.msra.mxu0 0
  %268 = vmatprep.subr.bf16.mxu0 0
  %269 = vmatpush1.bf16.msra.mxu0 0
  %270 = vmatprep.subr.bf16.mxu0 0
  %271 = vmatpush1.bf16.msra.mxu0 0
  %272 = vmatprep.subr.bf16.mxu0 0
  %273 = vmatpush1.bf16.msra.mxu0 0
  %274 = vmatprep.subr.bf16.mxu0 0
  %275 = vmatpush1.bf16.msra.mxu0 0
  %276 = vmatprep.subr.bf16.mxu0 0
  %277 = vmatpush1.bf16.msra.mxu0 0
  %278 = vmatprep.subr.bf16.mxu0 0
  %279 = vmatpush1.bf16.msra.mxu0 0
  %280 = vmatprep.subr.bf16.mxu0 0
  %281 = vmatpush1.bf16.msra.mxu0 0
  %282 = vmatprep.subr.bf16.mxu0 0
  %283 = vmatpush1.bf16.msra.mxu0 0
  %284 = vmatprep.subr.bf16.mxu0 0
  %285 = vmatpush1.bf16.msra.mxu0 0
  %286 = vmatprep.subr.bf16.mxu0 0
  %287 = vmatpush1.bf16.msra.mxu0 0
  %288 = vmatprep.mubr.bf16.mxu0 0
  %289 = vmatmul.mubr.bf16.gmra.mrb[0].mxu0 %v251
  %v290 = vpop.f32.mrb[0].mxu0
  %v291 = vadd.f32 0.0, %v290
  %v292 = vpop.f32.mrb[0].mxu0
  %v293 = vpop.f32.mrb[0].mxu0
  %v294 = vadd.f32 0.0, %v293
  %v295 = vpop.f32.mrb[0].mxu0
  %296 = vmatprep.mubr.bf16.mxu0 0
  %297 = vmatmul.mubr.bf16.gmra.mrb[0].mxu0 %v254
  %v298 = vpop.f32.mrb[0].mxu0
  %v299 = vadd.f32 0.0, %v298
  %v300 = vpop.f32.mrb[0].mxu0
  %v301 = vpop.f32.mrb[0].mxu0
  %v302 = vadd.f32 0.0, %v301
  %v303 = vpop.f32.mrb[0].mxu0
  %304 = vdwg.mxu0
  %v305 = vunpack.c.l.bf16 %v21
  %v306 = vunpack.c.l.bf16 %v22
  %v307 = vunpack.c.l.bf16 %v23
  %v308 = vunpack.c.l.bf16 %v24
  %v309 = vadd.f32 %v305, %v291
  %v310 = vadd.f32 %v306, %v294
  %v311 = vadd.f32 %v307, %v299
  %v312 = vadd.f32 %v308, %v302
  %v313 = vld [vmem:[%s3] sm:$0x1]
  %v314 = vld [vmem:[%s4] sm:$0x1]
  %v315 = vsel %vm51, %v309, 0.0
  %316 = vadd.xlane.f32.xlu0 %v315
  %v317 = vpop.xlane.xlu0 %316
  %v318 = vsel %vm51, %v310, 0.0
  %319 = vadd.xlane.f32.xlu0 %v318
  %v320 = vpop.xlane.xlu0 %319
  %v321 = vsel %vm51, %v311, 0.0
  %322 = vadd.xlane.f32.xlu0 %v321
  %v323 = vpop.xlane.xlu0 %322
  %v324 = vsel %vm51, %v312, 0.0
  %325 = vadd.xlane.f32.xlu0 %v324
  %v326 = vpop.xlane.xlu0 %325
  %v327 = vrcp.pop 32.0
  %v328 = vmul.f32 %v317, %v327
  %v329 = vmul.f32 %v320, %v327
  %v330 = vmul.f32 %v323, %v327
  %v331 = vmul.f32 %v326, %v327
  %v332 = vsub.f32 %v309, %v328
  %v333 = vsub.f32 %v310, %v329
  %v334 = vsub.f32 %v311, %v330
  %v335 = vsub.f32 %v312, %v331
  %v336 = vmul.f32 %v332, %v332
  %v337 = vmul.f32 %v333, %v333
  %v338 = vmul.f32 %v334, %v334
  %v339 = vmul.f32 %v335, %v335
  %v340 = vsel %vm51, %v336, 0.0
  %341 = vadd.xlane.f32.xlu0 %v340
  %v342 = vpop.xlane.xlu0 %341
  %v343 = vsel %vm51, %v337, 0.0
  %344 = vadd.xlane.f32.xlu0 %v343
  %v345 = vpop.xlane.xlu0 %344
  %v346 = vsel %vm51, %v338, 0.0
  %347 = vadd.xlane.f32.xlu0 %v346
  %v348 = vpop.xlane.xlu0 %347
  %v349 = vsel %vm51, %v339, 0.0
  %350 = vadd.xlane.f32.xlu0 %v349
  %v351 = vpop.xlane.xlu0 %350
  %v352 = vmul.f32 %v342, %v327
  %v353 = vmul.f32 %v345, %v327
  %v354 = vmul.f32 %v348, %v327
  %v355 = vmul.f32 %v351, %v327
  %v356 = vadd.f32 %v352, 1e-05
  %v357 = vadd.f32 %v353, 1e-05
  %v358 = vadd.f32 %v354, 1e-05
  %v359 = vadd.f32 %v355, 1e-05
  %v360 = vrsqrt.pop %v356
  %v361 = vrsqrt.pop %v357
  %v362 = vrsqrt.pop %v358
  %v363 = vrsqrt.pop %v359
  %v364 = vmul.f32 %v332, %v360
  %v365 = vmul.f32 %v333, %v361
  %v366 = vmul.f32 %v334, %v362
  %v367 = vmul.f32 %v335, %v363
  %v369 = vlaneseq
  %v370 = vshrl.u32 %v369, 7
  %v371 = vsub.s32 0, %v370
  %v372 = vrot.slane %v313, %v371
  %v374 = vmul.f32 %v364, %v372
  %v375 = vmul.f32 %v365, %v372
  %v376 = vmul.f32 %v366, %v372
  %v377 = vmul.f32 %v367, %v372
  %v379 = vlaneseq
  %v380 = vshrl.u32 %v379, 7
  %v381 = vsub.s32 0, %v380
  %v382 = vrot.slane %v314, %v381
  %v384 = vadd.f32 %v374, %v382
  %v385 = vadd.f32 %v375, %v382
  %v386 = vadd.f32 %v376, %v382
  %v387 = vadd.f32 %v377, %v382
  %v388 = vpack.c.bf16 %v385, %v384
  %v389 = vpack.c.bf16 %v387, %v386
  %v392 = vunpack.c.l.b16 %v388
  %v393 = vunpack.c.h.b16 %v388
  %v394 = vunpack.c.l.b16 %v389
  %v395 = vunpack.c.h.b16 %v389
  %v396 = vpack.c.b16 %v392, %v392
  %v397 = vpack.c.b16 %v393, %v393
  %v398 = vpack.c.b16 %v394, %v394
  %v399 = vpack.c.b16 %v395, %v395
  %vm404 = vcmask 257024
  %405 = vst.msk [vmem:[%s5] sm:$0xf] %vm404, %v396
  %406 = vst.msk [vmem:[%s5 + $0x4] sm:$0xf] %vm404, %v397
  %407 = vst.msk [vmem:[%s5 + $0x8] sm:$0xf] %vm404, %v398
  %408 = vst.msk [vmem:[%s5 + $0xc] sm:$0xf] %vm404, %v399
  // Predicated region
  $region22: #{informer_forward.13} parent=0 // pred_check
    _
  $region23: #{informer_forward.13} parent=0 // pred_check_branch
    %410 = sbr.rel (0) target = $region25
  $region24: #{informer_forward.13} parent=0 // pred_region
    _
  $region25: #{informer_forward.13} parent=0 // pred_fallthru
    _
  // Predicated region
  $region26: #{informer_forward.13} parent=0 // pred_check
    _
  $region27: #{informer_forward.13} parent=0 // pred_check_branch
    %412 = sbr.rel (0) target = $region29
  $region28: #{informer_forward.13} parent=0 // pred_region
    _
  $region29: #{informer_forward.13} parent=0 // pred_fallthru
    _

// kernel: informer_forward.21
$region0: #{informer_forward.21}
  #allocation0 [shape = 'u32[]', space=smem, size = 0x4, offset = 0x4, fixed_abs, tag = 'smem constant byte address 0x4 - core index']
  #allocation1 [shape = 'u32[144,128]{1,0:T(1,128)}', space=vmem, size = 0x12000, scoped, tag = 'internal scratch']
  %s0 = inlined_call_operand.vmem [shape: bf16[32,32], index: 0, kind: input, shape index: {}]
  %s1 = inlined_call_operand.vmem [shape: f32[1,32], index: 1, kind: input, shape index: {}]
  %s2 = inlined_call_operand.vmem [shape: f32[1,32], index: 2, kind: input, shape index: {}]
  %s3 = inlined_call_operand.vmem [shape: bf16[32,32], index: 3, kind: output, shape index: {}]
  %s4 = sld [smem:[#allocation0]]
  $region22: #{informer_forward.21} parent=0
    _
  %s6 = ssub.s32 1, %s4
  %s7 = scalar_select 0, %s6, %s4
  // Predicated region
  $region2: #{informer_forward.21} parent=0 // pred_check
    _
  $region3: #{informer_forward.21} parent=0 // pred_check_branch
    %9 = sbr.rel (0) target = $region5
  $region4: #{informer_forward.21} parent=0 // pred_region
    _
  $region5: #{informer_forward.21} parent=0 // pred_fallthru
    _
  // Predicated region
  $region6: #{informer_forward.21} parent=0 // pred_check
    _
  $region7: #{informer_forward.21} parent=0 // pred_check_branch
    %11 = sbr.rel (0) target = $region9
  $region8: #{informer_forward.21} parent=0 // pred_region
    _
  $region9: #{informer_forward.21} parent=0 // pred_fallthru
    _
  // Predicated region
  $region10: #{informer_forward.21} parent=0 // pred_check
    _
  $region11: #{informer_forward.21} parent=0 // pred_check_branch
    %13 = sbr.rel (0) target = $region13
  $region12: #{informer_forward.21} parent=0 // pred_region
    _
  $region13: #{informer_forward.21} parent=0 // pred_fallthru
    _
  %v14 = vld [vmem:[%s0] sm:$0xf]
  %v15 = vld [vmem:[%s0 + $0x4] sm:$0xf]
  %v16 = vld [vmem:[%s0 + $0x8] sm:$0xf]
  %v17 = vld [vmem:[%s0 + $0xc] sm:$0xf]
  %v18 = vunpack.c.l.bf16 %v14
  %v19 = vunpack.c.l.bf16 %v15
  %v20 = vunpack.c.l.bf16 %v16
  %v21 = vunpack.c.l.bf16 %v17
  %v22 = vld [vmem:[%s1] sm:$0x1]
  %v23 = vld [vmem:[%s2] sm:$0x1]
  %vm24 = vcmask 261120
  %v25 = vsel %vm24, %v18, 0.0
  %26 = vadd.xlane.f32.xlu0 %v25
  %v27 = vpop.xlane.xlu0 %26
  %v28 = vsel %vm24, %v19, 0.0
  %29 = vadd.xlane.f32.xlu0 %v28
  %v30 = vpop.xlane.xlu0 %29
  %v31 = vsel %vm24, %v20, 0.0
  %32 = vadd.xlane.f32.xlu0 %v31
  %v33 = vpop.xlane.xlu0 %32
  %v34 = vsel %vm24, %v21, 0.0
  %35 = vadd.xlane.f32.xlu0 %v34
  %v36 = vpop.xlane.xlu0 %35
  %v37 = vrcp.pop 32.0
  %v38 = vmul.f32 %v27, %v37
  %v39 = vmul.f32 %v30, %v37
  %v40 = vmul.f32 %v33, %v37
  %v41 = vmul.f32 %v36, %v37
  %v42 = vsub.f32 %v18, %v38
  %v43 = vsub.f32 %v19, %v39
  %v44 = vsub.f32 %v20, %v40
  %v45 = vsub.f32 %v21, %v41
  %v46 = vmul.f32 %v42, %v42
  %v47 = vmul.f32 %v43, %v43
  %v48 = vmul.f32 %v44, %v44
  %v49 = vmul.f32 %v45, %v45
  %v50 = vsel %vm24, %v46, 0.0
  %51 = vadd.xlane.f32.xlu0 %v50
  %v52 = vpop.xlane.xlu0 %51
  %v53 = vsel %vm24, %v47, 0.0
  %54 = vadd.xlane.f32.xlu0 %v53
  %v55 = vpop.xlane.xlu0 %54
  %v56 = vsel %vm24, %v48, 0.0
  %57 = vadd.xlane.f32.xlu0 %v56
  %v58 = vpop.xlane.xlu0 %57
  %v59 = vsel %vm24, %v49, 0.0
  %60 = vadd.xlane.f32.xlu0 %v59
  %v61 = vpop.xlane.xlu0 %60
  %v62 = vmul.f32 %v52, %v37
  %v63 = vmul.f32 %v55, %v37
  %v64 = vmul.f32 %v58, %v37
  %v65 = vmul.f32 %v61, %v37
  %v66 = vadd.f32 %v62, 1e-05
  %v67 = vadd.f32 %v63, 1e-05
  %v68 = vadd.f32 %v64, 1e-05
  %v69 = vadd.f32 %v65, 1e-05
  %v70 = vrsqrt.pop %v66
  %v71 = vrsqrt.pop %v67
  %v72 = vrsqrt.pop %v68
  %v73 = vrsqrt.pop %v69
  %v74 = vmul.f32 %v42, %v70
  %v75 = vmul.f32 %v43, %v71
  %v76 = vmul.f32 %v44, %v72
  %v77 = vmul.f32 %v45, %v73
  %v79 = vlaneseq
  %v80 = vshrl.u32 %v79, 7
  %v81 = vsub.s32 0, %v80
  %v82 = vrot.slane %v22, %v81
  %v84 = vmul.f32 %v74, %v82
  %v85 = vmul.f32 %v75, %v82
  %v86 = vmul.f32 %v76, %v82
  %v87 = vmul.f32 %v77, %v82
  %v89 = vlaneseq
  %v90 = vshrl.u32 %v89, 7
  %v91 = vsub.s32 0, %v90
  %v92 = vrot.slane %v23, %v91
  %v94 = vadd.f32 %v84, %v92
  %v95 = vadd.f32 %v85, %v92
  %v96 = vadd.f32 %v86, %v92
  %v97 = vadd.f32 %v87, %v92
  %v98 = vpack.c.bf16 %v95, %v94
  %v99 = vpack.c.bf16 %v97, %v96
  %100 = vst.msk [vmem:[%s3] sm:$0xff] %vm24, %v98
  %101 = vst.msk [vmem:[%s3 + $0x8] sm:$0xff] %vm24, %v99
  // Predicated region
  $region14: #{informer_forward.21} parent=0 // pred_check
    _
  $region15: #{informer_forward.21} parent=0 // pred_check_branch
    %103 = sbr.rel (0) target = $region17
  $region16: #{informer_forward.21} parent=0 // pred_region
    _
  $region17: #{informer_forward.21} parent=0 // pred_fallthru
    _
  // Predicated region
  $region18: #{informer_forward.21} parent=0 // pred_check
    _
  $region19: #{informer_forward.21} parent=0 // pred_check_branch
    %105 = sbr.rel (0) target = $region21
  $region20: #{informer_forward.21} parent=0 // pred_region
    _
  $region21: #{informer_forward.21} parent=0 // pred_fallthru
    _

// kernel: informer_forward.18
$region0: #{informer_forward.18}
  #allocation0 [shape = 'u32[]', space=smem, size = 0x4, offset = 0x4, fixed_abs, tag = 'smem constant byte address 0x4 - core index']
  #allocation1 [shape = 'u32[144,128]{1,0:T(1,128)}', space=vmem, size = 0x12000, scoped, tag = 'internal scratch']
  %s0 = inlined_call_operand.vmem [shape: bf16[2,16,32], index: 0, kind: input, shape index: {}, may-alias: {0,1}]
  %s1 = inlined_call_operand.vmem [shape: bf16[2,16,32], index: 1, kind: input, shape index: {}, may-alias: {0,1}]
  %s2 = inlined_call_operand.vmem [shape: bf16[32,32], index: 2, kind: input, shape index: {}]
  %s3 = inlined_call_operand.vmem [shape: f32[1,32], index: 3, kind: input, shape index: {}]
  %s4 = inlined_call_operand.vmem [shape: bf16[32,64], index: 4, kind: input, shape index: {}]
  %s5 = inlined_call_operand.vmem [shape: f32[1,64], index: 5, kind: input, shape index: {}]
  %s6 = inlined_call_operand.vmem [shape: bf16[32,32], index: 6, kind: input, shape index: {}]
  %s7 = inlined_call_operand.vmem [shape: f32[1,32], index: 7, kind: input, shape index: {}]
  %s8 = inlined_call_operand.vmem [shape: f32[1,32], index: 8, kind: input, shape index: {}]
  %s9 = inlined_call_operand.vmem [shape: f32[1,32], index: 9, kind: input, shape index: {}]
  %s10 = inlined_call_operand.vmem [shape: bf16[2,16,32], index: 10, kind: output, shape index: {}]
  %s11 = sld [smem:[#allocation0]]
  $region73: #{informer_forward.18} parent=0
    _
  %s13 = ssub.s32 1, %s11
  %s14 = scalar_select 0, %s13, %s11
  loop: start=0, step=1, limit=4
  $region2: #{informer_forward.18} parent=0 // loop_pre_header
    _
  $region3: #{informer_forward.18} parent=0 // loop_header
    %s16 = sphi 0, %s20
    %p17 = scmp.ge.s32.totalorder %s16, 4
    %s26 = sphi 0, %s28
    %s29 = sphi 0, %s26
    %s30 = sphi 0, %s29
    %s46 = sphi 0, %s30
    %s52 = sphi 0, %s54
    %s55 = sphi 0, %s52
    %s56 = sphi 0, %s55
    %s72 = sphi 0, %s56
    %s76 = sphi 0, %s76
    %s78 = sphi 0, %s76
    %s79 = sphi 0, %s78
    %s93 = sphi 0, %s79
    %s97 = sphi 0, %s97
    %s99 = sphi 0, %s97
    %s100 = sphi 0, %s99
    %s114 = sphi 0, %s100
    %s118 = sphi 0, %s118
    %s120 = sphi 0, %s118
    %s121 = sphi 0, %s120
    %s135 = sphi 0, %s121
    %s139 = sphi 0, %s139
    %s141 = sphi 0, %s139
    %s142 = sphi 0, %s141
    %s156 = sphi 0, %s142
    %s160 = sphi 0, %s160
    %s162 = sphi 0, %s160
    %s163 = sphi 0, %s162
    %s177 = sphi 0, %s163
    %s181 = sphi 0, %s181
    %s183 = sphi 0, %s181
    %s184 = sphi 0, %s183
    %s198 = sphi 0, %s184
    %s202 = sphi 0, %s202
    %s204 = sphi 0, %s202
    %s205 = sphi 0, %s204
    %s219 = sphi 0, %s205
    %s223 = sphi 0, %s223
    %s225 = sphi 0, %s223
    %s226 = sphi 0, %s225
    %s240 = sphi 0, %s226
    %s246 = sphi 0, %s248
    %s249 = sphi 0, %s246
    %s250 = sphi 0, %s249
    %s266 = sphi 0, %s250
  $region4: #{informer_forward.18} parent=0 // loop_header_branch
    %19 = sbr.rel (%p17) target = $region8
  $region5: #{informer_forward.18} parent=0 // loop_body
    %s21 = ssub.s32 %s16, 1
    %s22 = ssub.s32 %s16, 2
    %s23 = sadd.s32 %s16, 1
    %s24 = ssub.s32 %s16, %s23
    %p25 = scmp.eq.s32.totalorder %s24, 0
    %s27 = sadd.s32 %s26, 1
    %s28 = scalar_select %p25, %s26, %s27
    %p31 = pneg %p25
    %p32 = scmp.eq.s32.totalorder %s16, 1
    %p33 = por %p31, %p32
    %p34 = scmp.ne.s32.totalorder %s26, %s29
    %p35 = scmp.eq.s32.totalorder %s16, 0
    %p36 = por %p34, %p35
    %p37 = scmp.ne.s32.totalorder %s26, %s29
    %p38 = scmp.eq.s32.totalorder %s21, 1
    %p39 = por %p37, %p38
    %p40 = scmp.ne.s32.totalorder %s29, %s30
    %p41 = scmp.eq.s32.totalorder %s21, 0
    %p42 = por %p40, %p41
    %p43 = scmp.ne.s32.totalorder %s29, %s30
    %p44 = scmp.eq.s32.totalorder %s22, 1
    %p45 = por %p43, %p44
    %p47 = scmp.ne.s32.totalorder %s30, %s46
    %p48 = scmp.eq.s32.totalorder %s22, 0
    %p49 = por %p47, %p48
    %s50 = ssub.s32 %s16, %s23
    %p51 = scmp.eq.s32.totalorder %s50, 0
    %s53 = sadd.s32 %s52, 1
    %s54 = scalar_select %p51, %s52, %s53
    %p57 = pneg %p51
    %p58 = scmp.eq.s32.totalorder %s16, 1
    %p59 = por %p57, %p58
    %p60 = scmp.ne.s32.totalorder %s52, %s55
    %p61 = scmp.eq.s32.totalorder %s16, 0
    %p62 = por %p60, %p61
    %p63 = scmp.ne.s32.totalorder %s52, %s55
    %p64 = scmp.eq.s32.totalorder %s21, 1
    %p65 = por %p63, %p64
    %p66 = scmp.ne.s32.totalorder %s55, %s56
    %p67 = scmp.eq.s32.totalorder %s21, 0
    %p68 = por %p66, %p67
    %p69 = scmp.ne.s32.totalorder %s55, %s56
    %p70 = scmp.eq.s32.totalorder %s22, 1
    %p71 = por %p69, %p70
    %p73 = scmp.ne.s32.totalorder %s56, %s72
    %p74 = scmp.eq.s32.totalorder %s22, 0
    %p75 = por %p73, %p74
    %s77 = sadd.s32 %s76, 1
    %p80 = scmp.eq.s32.totalorder %s16, 1
    %p81 = scmp.ne.s32.totalorder %s76, %s78
    %p82 = scmp.eq.s32.totalorder %s16, 0
    %p83 = por %p81, %p82
    %p84 = scmp.ne.s32.totalorder %s76, %s78
    %p85 = scmp.eq.s32.totalorder %s21, 1
    %p86 = por %p84, %p85
    %p87 = scmp.ne.s32.totalorder %s78, %s79
    %p88 = scmp.eq.s32.totalorder %s21, 0
    %p89 = por %p87, %p88
    %p90 = scmp.ne.s32.totalorder %s78, %s79
    %p91 = scmp.eq.s32.totalorder %s22, 1
    %p92 = por %p90, %p91
    %p94 = scmp.ne.s32.totalorder %s79, %s93
    %p95 = scmp.eq.s32.totalorder %s22, 0
    %p96 = por %p94, %p95
    %s98 = sadd.s32 %s97, 1
    %p101 = scmp.eq.s32.totalorder %s16, 1
    %p102 = scmp.ne.s32.totalorder %s97, %s99
    %p103 = scmp.eq.s32.totalorder %s16, 0
    %p104 = por %p102, %p103
    %p105 = scmp.ne.s32.totalorder %s97, %s99
    %p106 = scmp.eq.s32.totalorder %s21, 1
    %p107 = por %p105, %p106
    %p108 = scmp.ne.s32.totalorder %s99, %s100
    %p109 = scmp.eq.s32.totalorder %s21, 0
    %p110 = por %p108, %p109
    %p111 = scmp.ne.s32.totalorder %s99, %s100
    %p112 = scmp.eq.s32.totalorder %s22, 1
    %p113 = por %p111, %p112
    %p115 = scmp.ne.s32.totalorder %s100, %s114
    %p116 = scmp.eq.s32.totalorder %s22, 0
    %p117 = por %p115, %p116
    %s119 = sadd.s32 %s118, 1
    %p122 = scmp.eq.s32.totalorder %s16, 1
    %p123 = scmp.ne.s32.totalorder %s118, %s120
    %p124 = scmp.eq.s32.totalorder %s16, 0
    %p125 = por %p123, %p124
    %p126 = scmp.ne.s32.totalorder %s118, %s120
    %p127 = scmp.eq.s32.totalorder %s21, 1
    %p128 = por %p126, %p127
    %p129 = scmp.ne.s32.totalorder %s120, %s121
    %p130 = scmp.eq.s32.totalorder %s21, 0
    %p131 = por %p129, %p130
    %p132 = scmp.ne.s32.totalorder %s120, %s121
    %p133 = scmp.eq.s32.totalorder %s22, 1
    %p134 = por %p132, %p133
    %p136 = scmp.ne.s32.totalorder %s121, %s135
    %p137 = scmp.eq.s32.totalorder %s22, 0
    %p138 = por %p136, %p137
    %s140 = sadd.s32 %s139, 1
    %p143 = scmp.eq.s32.totalorder %s16, 1
    %p144 = scmp.ne.s32.totalorder %s139, %s141
    %p145 = scmp.eq.s32.totalorder %s16, 0
    %p146 = por %p144, %p145
    %p147 = scmp.ne.s32.totalorder %s139, %s141
    %p148 = scmp.eq.s32.totalorder %s21, 1
    %p149 = por %p147, %p148
    %p150 = scmp.ne.s32.totalorder %s141, %s142
    %p151 = scmp.eq.s32.totalorder %s21, 0
    %p152 = por %p150, %p151
    %p153 = scmp.ne.s32.totalorder %s141, %s142
    %p154 = scmp.eq.s32.totalorder %s22, 1
    %p155 = por %p153, %p154
    %p157 = scmp.ne.s32.totalorder %s142, %s156
    %p158 = scmp.eq.s32.totalorder %s22, 0
    %p159 = por %p157, %p158
    %s161 = sadd.s32 %s160, 1
    %p164 = scmp.eq.s32.totalorder %s16, 1
    %p165 = scmp.ne.s32.totalorder %s160, %s162
    %p166 = scmp.eq.s32.totalorder %s16, 0
    %p167 = por %p165, %p166
    %p168 = scmp.ne.s32.totalorder %s160, %s162
    %p169 = scmp.eq.s32.totalorder %s21, 1
    %p170 = por %p168, %p169
    %p171 = scmp.ne.s32.totalorder %s162, %s163
    %p172 = scmp.eq.s32.totalorder %s21, 0
    %p173 = por %p171, %p172
    %p174 = scmp.ne.s32.totalorder %s162, %s163
    %p175 = scmp.eq.s32.totalorder %s22, 1
    %p176 = por %p174, %p175
    %p178 = scmp.ne.s32.totalorder %s163, %s177
    %p179 = scmp.eq.s32.totalorder %s22, 0
    %p180 = por %p178, %p179
    %s182 = sadd.s32 %s181, 1
    %p185 = scmp.eq.s32.totalorder %s16, 1
    %p186 = scmp.ne.s32.totalorder %s181, %s183
    %p187 = scmp.eq.s32.totalorder %s16, 0
    %p188 = por %p186, %p187
    %p189 = scmp.ne.s32.totalorder %s181, %s183
    %p190 = scmp.eq.s32.totalorder %s21, 1
    %p191 = por %p189, %p190
    %p192 = scmp.ne.s32.totalorder %s183, %s184
    %p193 = scmp.eq.s32.totalorder %s21, 0
    %p194 = por %p192, %p193
    %p195 = scmp.ne.s32.totalorder %s183, %s184
    %p196 = scmp.eq.s32.totalorder %s22, 1
    %p197 = por %p195, %p196
    %p199 = scmp.ne.s32.totalorder %s184, %s198
    %p200 = scmp.eq.s32.totalorder %s22, 0
    %p201 = por %p199, %p200
    %s203 = sadd.s32 %s202, 1
    %p206 = scmp.eq.s32.totalorder %s16, 1
    %p207 = scmp.ne.s32.totalorder %s202, %s204
    %p208 = scmp.eq.s32.totalorder %s16, 0
    %p209 = por %p207, %p208
    %p210 = scmp.ne.s32.totalorder %s202, %s204
    %p211 = scmp.eq.s32.totalorder %s21, 1
    %p212 = por %p210, %p211
    %p213 = scmp.ne.s32.totalorder %s204, %s205
    %p214 = scmp.eq.s32.totalorder %s21, 0
    %p215 = por %p213, %p214
    %p216 = scmp.ne.s32.totalorder %s204, %s205
    %p217 = scmp.eq.s32.totalorder %s22, 1
    %p218 = por %p216, %p217
    %p220 = scmp.ne.s32.totalorder %s205, %s219
    %p221 = scmp.eq.s32.totalorder %s22, 0
    %p222 = por %p220, %p221
    %s224 = sadd.s32 %s223, 1
    %p227 = scmp.eq.s32.totalorder %s16, 1
    %p228 = scmp.ne.s32.totalorder %s223, %s225
    %p229 = scmp.eq.s32.totalorder %s16, 0
    %p230 = por %p228, %p229
    %p231 = scmp.ne.s32.totalorder %s223, %s225
    %p232 = scmp.eq.s32.totalorder %s21, 1
    %p233 = por %p231, %p232
    %p234 = scmp.ne.s32.totalorder %s225, %s226
    %p235 = scmp.eq.s32.totalorder %s21, 0
    %p236 = por %p234, %p235
    %p237 = scmp.ne.s32.totalorder %s225, %s226
    %p238 = scmp.eq.s32.totalorder %s22, 1
    %p239 = por %p237, %p238
    %p241 = scmp.ne.s32.totalorder %s226, %s240
    %p242 = scmp.eq.s32.totalorder %s22, 0
    %p243 = por %p241, %p242
    %s244 = ssub.s32 %s16, %s23
    %p245 = scmp.eq.s32.totalorder %s244, 0
    %s247 = sadd.s32 %s246, 1
    %s248 = scalar_select %p245, %s246, %s247
    %p251 = pneg %p245
    %p252 = scmp.eq.s32.totalorder %s16, 1
    %p253 = por %p251, %p252
    %p254 = scmp.ne.s32.totalorder %s246, %s249
    %p255 = scmp.eq.s32.totalorder %s16, 0
    %p256 = por %p254, %p255
    %p257 = scmp.ne.s32.totalorder %s246, %s249
    %p258 = scmp.eq.s32.totalorder %s21, 1
    %p259 = por %p257, %p258
    %p260 = scmp.ne.s32.totalorder %s249, %s250
    %p261 = scmp.eq.s32.totalorder %s21, 0
    %p262 = por %p260, %p261
    %p263 = scmp.ne.s32.totalorder %s249, %s250
    %p264 = scmp.eq.s32.totalorder %s22, 1
    %p265 = por %p263, %p264
    %p267 = scmp.ne.s32.totalorder %s250, %s266
    %p268 = scmp.eq.s32.totalorder %s22, 0
    %p269 = por %p267, %p268
    %p270 = scmp.le.s32.totalorder 1, %s16
    %p271 = scmp.lt.s32.totalorder %s16, 3
    %p272 = pnand %p270, %p271
    %p273 = pneg %p272
    // Predicated region
    $region9: #{informer_forward.18} parent=5 // pred_check
      _
    $region10: #{informer_forward.18} parent=5 // pred_check_branch
      %275 = sbr.rel (%p272) target = $region12
    $region11: #{informer_forward.18} parent=5 // pred_region
      %s276 = ssub.s32 %s16, 1
      // Predicated region
      $region13: #{informer_forward.18} parent=11 // pred_check
        %p277 = pneg %p89
      $region14: #{informer_forward.18} parent=11 // pred_check_branch
        %279 = sbr.rel (%p277) target = $region16
      $region15: #{informer_forward.18} parent=11 // pred_region
        _
      $region16: #{informer_forward.18} parent=11 // pred_fallthru
        _
      // Predicated region
      $region17: #{informer_forward.18} parent=11 // pred_check
        %p280 = pneg %p110
      $region18: #{informer_forward.18} parent=11 // pred_check_branch
        %282 = sbr.rel (%p280) target = $region20
      $region19: #{informer_forward.18} parent=11 // pred_region
        _
      $region20: #{informer_forward.18} parent=11 // pred_fallthru
        _
      // Predicated region
      $region21: #{informer_forward.18} parent=11 // pred_check
        %p283 = pneg %p131
      $region22: #{informer_forward.18} parent=11 // pred_check_branch
        %285 = sbr.rel (%p283) target = $region24
      $region23: #{informer_forward.18} parent=11 // pred_region
        _
      $region24: #{informer_forward.18} parent=11 // pred_fallthru
        _
      // Predicated region
      $region25: #{informer_forward.18} parent=11 // pred_check
        %p286 = pneg %p152
      $region26: #{informer_forward.18} parent=11 // pred_check_branch
        %288 = sbr.rel (%p286) target = $region28
      $region27: #{informer_forward.18} parent=11 // pred_region
        _
      $region28: #{informer_forward.18} parent=11 // pred_fallthru
        _
      // Predicated region
      $region29: #{informer_forward.18} parent=11 // pred_check
        %p289 = pneg %p173
      $region30: #{informer_forward.18} parent=11 // pred_check_branch
        %291 = sbr.rel (%p289) target = $region32
      $region31: #{informer_forward.18} parent=11 // pred_region
        _
      $region32: #{informer_forward.18} parent=11 // pred_fallthru
        _
      // Predicated region
      $region33: #{informer_forward.18} parent=11 // pred_check
        %p292 = pneg %p194
      $region34: #{informer_forward.18} parent=11 // pred_check_branch
        %294 = sbr.rel (%p292) target = $region36
      $region35: #{informer_forward.18} parent=11 // pred_region
        _
      $region36: #{informer_forward.18} parent=11 // pred_fallthru
        _
      // Predicated region
      $region37: #{informer_forward.18} parent=11 // pred_check
        %p295 = pneg %p215
      $region38: #{informer_forward.18} parent=11 // pred_check_branch
        %297 = sbr.rel (%p295) target = $region40
      $region39: #{informer_forward.18} parent=11 // pred_region
        _
      $region40: #{informer_forward.18} parent=11 // pred_fallthru
        _
      // Predicated region
      $region41: #{informer_forward.18} parent=11 // pred_check
        %p298 = pneg %p236
      $region42: #{informer_forward.18} parent=11 // pred_check_branch
        %300 = sbr.rel (%p298) target = $region44
      $region43: #{informer_forward.18} parent=11 // pred_region
        _
      $region44: #{informer_forward.18} parent=11 // pred_fallthru
        _
    $region12: #{informer_forward.18} parent=5 // pred_fallthru
      _
    %p301 = scmp.lt.s32.totalorder %s16, 2
    // Predicated region
    $region45: #{informer_forward.18} parent=5 // pred_check
      %p302 = pneg %p301
    $region46: #{informer_forward.18} parent=5 // pred_check_branch
      %304 = sbr.rel (%p302) target = $region48
    $region47: #{informer_forward.18} parent=5 // pred_region
      // Predicated region
      $region49: #{informer_forward.18} parent=47 // pred_check
        %p305 = pneg %p36
      $region50: #{informer_forward.18} parent=47 // pred_check_branch
        %307 = sbr.rel (%p305) target = $region52
      $region51: #{informer_forward.18} parent=47 // pred_region
        %p308 = scmp.lt.s32.totalorder %s16, 1
        %s309 = scalar_select %p308, %s16, 1
        %s310 = smul.addr %s309, 2
        %s311 = smul.addr %s310, 4
        %s312 = scalar_lea.vmem %s0, %s311
      $region52: #{informer_forward.18} parent=47 // pred_fallthru
        _
      // Predicated region
      $region53: #{informer_forward.18} parent=47 // pred_check
        %p313 = pneg %p62
      $region54: #{informer_forward.18} parent=47 // pred_check_branch
        %315 = sbr.rel (%p313) target = $region56
      $region55: #{informer_forward.18} parent=47 // pred_region
        %p316 = scmp.lt.s32.totalorder %s16, 1
        %s317 = scalar_select %p316, %s16, 1
        %s318 = smul.addr %s317, 2
        %s319 = smul.addr %s318, 4
        %s320 = scalar_lea.vmem %s1, %s319
      $region56: #{informer_forward.18} parent=47 // pred_fallthru
        _
    $region48: #{informer_forward.18} parent=5 // pred_fallthru
      _
    %p321 = scmp.le.s32.totalorder 1, %s16
    %p322 = scmp.lt.s32.totalorder %s16, 3
    %p323 = pnand %p321, %p322
    %p324 = pneg %p323
    // Predicated region
    $region57: #{informer_forward.18} parent=5 // pred_check
      _
    $region58: #{informer_forward.18} parent=5 // pred_check_branch
      %326 = sbr.rel (%p323) target = $region60
    $region59: #{informer_forward.18} parent=5 // pred_region
      %s327 = ssub.s32 %s16, 1
      %p328 = scmp.lt.s32.totalorder %s21, 1
      %s329 = scalar_select %p328, %s21, 1
      %s330 = smul.addr %s329, 2
      %s331 = smul.addr %s330, 4
      %s332 = scalar_lea.vmem %s0, %s331
      %p333 = pneg %p42
      %p334 = pneg %p39
      %p335 = scmp.lt.s32.totalorder %s21, 1
      %s336 = scalar_select %p335, %s21, 1
      %s337 = smul.addr %s336, 2
      %s338 = smul.addr %s337, 4
      %s339 = scalar_lea.vmem %s1, %s338
      %p340 = pneg %p68
      %p341 = pneg %p65
      %p342 = pneg %p89
      %p343 = pneg %p86
      %p344 = pneg %p110
      %p345 = pneg %p107
      %p346 = pneg %p131
      %p347 = pneg %p128
      %p348 = pneg %p152
      %p349 = pneg %p149
      %p350 = pneg %p173
      %p351 = pneg %p170
      %p352 = pneg %p194
      %p353 = pneg %p191
      %p354 = pneg %p215
      %p355 = pneg %p212
      %p356 = pneg %p236
      %p357 = pneg %p233
      %p358 = pneg %p262
      %p359 = pneg %p259
      %p360 = scmp.lt.s32.totalorder %s21, 1
      %s361 = scalar_select %p360, %s21, 1
      %s362 = smul.addr %s361, 2
      %s363 = smul.addr %s362, 4
      %s364 = scalar_lea.vmem %s10, %s363
      %p365 = scmp.lt.s32.totalorder %s21, 1
      %s366 = scalar_select %p365, %s21, 1
      %s367 = smul.addr %s366, 2
      %s368 = smul.addr %s367, 4
      %s369 = scalar_lea.vmem %s0, %s368
      %p370 = scmp.lt.s32.totalorder %s21, 1
      %s371 = scalar_select %p370, %s21, 1
      %s372 = smul.addr %s371, 2
      %s373 = smul.addr %s372, 4
      %s374 = scalar_lea.vmem %s1, %s373
      %p375 = scmp.lt.s32.totalorder %s21, 1
      %s376 = scalar_select %p375, %s21, 1
      %s377 = smul.addr %s376, 2
      %s378 = smul.addr %s377, 4
      %s379 = scalar_lea.vmem %s10, %s378
      %v381 = vld [vmem:[%s369] sm:$0xf]
      %v382 = vld [vmem:[%s369 + $0x4] sm:$0xf]
      %v383 = vld [vmem:[%s374] sm:$0xf]
      %v384 = vld [vmem:[%s374 + $0x4] sm:$0xf]
      %v385 = vld [vmem:[%s2] sm:$0xf]
      %v386 = vld [vmem:[%s2 + $0x4] sm:$0xf]
      %v387 = vld [vmem:[%s2 + $0x8] sm:$0xf]
      %v388 = vld [vmem:[%s2 + $0xc] sm:$0xf]
      %v389 = vld [vmem:[%s3] sm:$0x1]
      %v391 = vlaneseq
      %v392 = vshrl.u32 %v391, 7
      %v393 = vsub.s32 0, %v392
      %v394 = vrot.slane %v389, %v393
      %v398 = vunpack.c.l.b16 %v381
      %v399 = vunpack.c.l.b16 %v382
      %v400 = vpack.c.b16 %v399, %v398
      %v405 = vunpack.c.l.b16 %v385
      %v406 = vunpack.c.l.b16 %v386
      %v407 = vunpack.c.l.b16 %v387
      %v408 = vunpack.c.l.b16 %v388
      %v409 = vpack.c.b16 %v406, %v405
      %v410 = vpack.c.b16 %v408, %v407
      %vm413 = vcmask 261120
      %v415 = vsel %vm413, %v400, 0
      %417 = vmatprep.subr.bf16.mxu0 0
      %418 = vmatpush1.bf16.msra.mxu0 %v409
      %419 = vmatprep.subr.bf16.mxu0 0
      %420 = vmatpush1.bf16.msra.mxu0 %v410
      %421 = vmatprep.subr.bf16.mxu0 0
      %422 = vmatpush1.bf16.msra.mxu0 0
      %423 = vmatprep.subr.bf16.mxu0 0
      %424 = vmatpush1.bf16.msra.mxu0 0
      %425 = vmatprep.subr.bf16.mxu0 0
      %426 = vmatpush1.bf16.msra.mxu0 0
      %427 = vmatprep.subr.bf16.mxu0 0
      %428 = vmatpush1.bf16.msra.mxu0 0
      %429 = vmatprep.subr.bf16.mxu0 0
      %430 = vmatpush1.bf16.msra.mxu0 0
      %431 = vmatprep.subr.bf16.mxu0 0
      %432 = vmatpush1.bf16.msra.mxu0 0
      %433 = vmatprep.subr.bf16.mxu0 0
      %434 = vmatpush1.bf16.msra.mxu0 0
      %435 = vmatprep.subr.bf16.mxu0 0
      %436 = vmatpush1.bf16.msra.mxu0 0
      %437 = vmatprep.subr.bf16.mxu0 0
      %438 = vmatpush1.bf16.msra.mxu0 0
      %439 = vmatprep.subr.bf16.mxu0 0
      %440 = vmatpush1.bf16.msra.mxu0 0
      %441 = vmatprep.subr.bf16.mxu0 0
      %442 = vmatpush1.bf16.msra.mxu0 0
      %443 = vmatprep.subr.bf16.mxu0 0
      %444 = vmatpush1.bf16.msra.mxu0 0
      %445 = vmatprep.subr.bf16.mxu0 0
      %446 = vmatpush1.bf16.msra.mxu0 0
      %447 = vmatprep.subr.bf16.mxu0 0
      %448 = vmatpush1.bf16.msra.mxu0 0
      %449 = vmatprep.mubr.bf16.mxu0 0
      %450 = vmatmul.mubr.bf16.gmra.mrb[0].mxu0 %v415
      %v451 = vpop.f32.mrb[0].mxu0
      %v452 = vadd.f32 %v394, %v451
      %v453 = vpop.f32.mrb[0].mxu0
      %v454 = vpop.f32.mrb[0].mxu0
      %v455 = vadd.f32 %v394, %v454
      %v456 = vpop.f32.mrb[0].mxu0
      %457 = vdwg.mxu0
      %v458 = vpack.c.bf16 %v455, %v452
      %v459 = vld [vmem:[%s4] sm:$0xf]
      %v460 = vld [vmem:[%s4 + $0x4] sm:$0xf]
      %v461 = vld [vmem:[%s4 + $0x8] sm:$0xf]
      %v462 = vld [vmem:[%s4 + $0xc] sm:$0xf]
      %v463 = vld [vmem:[%s5] sm:$0x1]
      %v465 = vlaneseq
      %v466 = vshrl.u32 %v465, 7
      %v467 = vsub.s32 0, %v466
      %v468 = vrot.slane %v463, %v467
      %v472 = vunpack.c.l.b16 %v383
      %v473 = vunpack.c.l.b16 %v384
      %v474 = vpack.c.b16 %v473, %v472
      %v479 = vunpack.c.l.b16 %v459
      %v480 = vunpack.c.l.b16 %v460
      %v481 = vunpack.c.l.b16 %v461
      %v482 = vunpack.c.l.b16 %v462
      %v483 = vpack.c.b16 %v480, %v479
      %v484 = vpack.c.b16 %v482, %v481
      %v488 = vsel %vm413, %v474, 0
      %490 = vmatprep.subr.bf16.mxu0 0
      %491 = vmatpush1.bf16.msra.mxu0 %v483
      %492 = vmatprep.subr.bf16.mxu0 0
      %493 = vmatpush1.bf16.msra.mxu0 %v484
      %494 = vmatprep.subr.bf16.mxu0 0
      %495 = vmatpush1.bf16.msra.mxu0 0
      %496 = vmatprep.subr.bf16.mxu0 0
      %497 = vmatpush1.bf16.msra.mxu0 0
      %498 = vmatprep.subr.bf16.mxu0 0
      %499 = vmatpush1.bf16.msra.mxu0 0
      %500 = vmatprep.subr.bf16.mxu0 0
      %501 = vmatpush1.bf16.msra.mxu0 0
      %502 = vmatprep.subr.bf16.mxu0 0
      %503 = vmatpush1.bf16.msra.mxu0 0
      %504 = vmatprep.subr.bf16.mxu0 0
      %505 = vmatpush1.bf16.msra.mxu0 0
      %506 = vmatprep.subr.bf16.mxu0 0
      %507 = vmatpush1.bf16.msra.mxu0 0
      %508 = vmatprep.subr.bf16.mxu0 0
      %509 = vmatpush1.bf16.msra.mxu0 0
      %510 = vmatprep.subr.bf16.mxu0 0
      %511 = vmatpush1.bf16.msra.mxu0 0
      %512 = vmatprep.subr.bf16.mxu0 0
      %513 = vmatpush1.bf16.msra.mxu0 0
      %514 = vmatprep.subr.bf16.mxu0 0
      %515 = vmatpush1.bf16.msra.mxu0 0
      %516 = vmatprep.subr.bf16.mxu0 0
      %517 = vmatpush1.bf16.msra.mxu0 0
      %518 = vmatprep.subr.bf16.mxu0 0
      %519 = vmatpush1.bf16.msra.mxu0 0
      %520 = vmatprep.subr.bf16.mxu0 0
      %521 = vmatpush1.bf16.msra.mxu0 0
      %522 = vmatprep.mubr.bf16.mxu0 0
      %523 = vmatmul.mubr.bf16.gmra.mrb[0].mxu0 %v488
      %v524 = vpop.f32.mrb[0].mxu0
      %v525 = vadd.f32 %v468, %v524
      %v526 = vpop.f32.mrb[0].mxu0
      %v527 = vpop.f32.mrb[0].mxu0
      %v528 = vadd.f32 %v468, %v527
      %v529 = vpop.f32.mrb[0].mxu0
      %530 = vdwg.mxu0
      %v531 = vpack.c.bf16 %v528, %v525
      %v532 = vlaneseq
      %v533 = vshrl.u32 %v532, 7
      %v534 = vadd.s32 %v533, 8
      %v535 = vlaneseq
      %v536 = vand.u32 %v535, 127
      %vm537 = vcmp.gt.s32.totalorder %v536, %v533
      %vm538 = vcmp.gt.s32.totalorder %v536, %v534
      %vm539 = vcmask 64512
      %v541 = vsel %vm539, %v458, 0
      %v544 = vsel %vm539, %v531, 0
      %546 = vmatprep.subr.bf16.mxu0 0
      %547 = vmatpush1.bf16.xpose.msra.mxu0 %v544
      %548 = vmatprep.subr.bf16.mxu0 0
      %549 = vmatpush1.bf16.xpose.msra.mxu0 0
      %550 = vmatprep.subr.bf16.mxu0 0
      %551 = vmatpush1.bf16.xpose.msra.mxu0 0
      %552 = vmatprep.subr.bf16.mxu0 0
      %553 = vmatpush1.bf16.xpose.msra.mxu0 0
      %554 = vmatprep.subr.bf16.mxu0 0
      %555 = vmatpush1.bf16.xpose.msra.mxu0 0
      %556 = vmatprep.subr.bf16.mxu0 0
      %557 = vmatpush1.bf16.xpose.msra.mxu0 0
      %558 = vmatprep.subr.bf16.mxu0 0
      %559 = vmatpush1.bf16.xpose.msra.mxu0 0
      %560 = vmatprep.subr.bf16.mxu0 0
      %561 = vmatpush1.bf16.xpose.msra.mxu0 0
      %562 = vmatprep.subr.bf16.mxu0 0
      %563 = vmatpush1.bf16.xpose.msra.mxu0 0
      %564 = vmatprep.subr.bf16.mxu0 0
      %565 = vmatpush1.bf16.xpose.msra.mxu0 0
      %566 = vmatprep.subr.bf16.mxu0 0
      %567 = vmatpush1.bf16.xpose.msra.mxu0 0
      %568 = vmatprep.subr.bf16.mxu0 0
      %569 = vmatpush1.bf16.xpose.msra.mxu0 0
      %570 = vmatprep.subr.bf16.mxu0 0
      %571 = vmatpush1.bf16.xpose.msra.mxu0 0
      %572 = vmatprep.subr.bf16.mxu0 0
      %573 = vmatpush1.bf16.xpose.msra.mxu0 0
      %574 = vmatprep.subr.bf16.mxu0 0
      %575 = vmatpush1.bf16.xpose.msra.mxu0 0
      %576 = vmatprep.subr.bf16.mxu0 0
      %577 = vmatpush1.bf16.xpose.msra.mxu0 0
      %578 = vmatprep.mubr.bf16.mxu0 0
      %579 = vmatmul.mubr.bf16.gmra.mrb[0].mxu0 %v541
      %v580 = vpop.f32.mrb[0].mxu0
      %v581 = vadd.f32 0.0, %v580
      %v582 = vpop.f32.mrb[0].mxu0
      %v583 = vpop.f32.mrb[0].mxu0
      %v584 = vadd.f32 0.0, %v583
      %v585 = vpop.f32.mrb[0].mxu0
      %586 = vdwg.mxu0
      %v587 = vmul.f32 %v581, 0.35355338
      %v588 = vmul.f32 %v584, 0.35355338
      %v589 = vsel %vm537, -1e+30, %v587
      %v590 = vsel %vm538, -1e+30, %v588
      %vm591 = vcmask 130048
      %v592 = vsel %vm591, %v589, -inf
      %593 = vmax.xlane.f32.xlu0 %v592
      %v594 = vpop.xlane.xlu0 %593
      %v595 = vsel %vm591, %v590, -inf
      %596 = vmax.xlane.f32.xlu0 %v595
      %v597 = vpop.xlane.xlu0 %596
      %v598 = vsub.f32 %v589, %v594
      %v599 = vsub.f32 %v590, %v597
      %v600 = vmul.f32 %v598, 1.442695
      %v601 = vpow.pop %v600
      %v602 = vmul.f32 %v599, 1.442695
      %v603 = vpow.pop %v602
      %v604 = vsel %vm591, %v601, 0.0
      %605 = vadd.xlane.f32.xlu0 %v604
      %v606 = vpop.xlane.xlu0 %605
      %v607 = vsel %vm591, %v603, 0.0
      %608 = vadd.xlane.f32.xlu0 %v607
      %v609 = vpop.xlane.xlu0 %608
      %v610 = vrcp.pop %v606
      %v611 = vrcp.pop %v609
      %v612 = vpack.c.bf16 %v603, %v601
      %614 = vrot.lane.b32.xlu0 %v531, 96
      %v615 = vpop.permute.xlu0 %614
      %v618 = vsel %vm591, %v612, 0
      %620 = vmatprep.subr.bf16.mxu0 0
      %621 = vmatpush1.bf16.msra.mxu0 %v615
      %622 = vmatprep.subr.bf16.mxu0 0
      %623 = vmatpush1.bf16.msra.mxu0 0
      %624 = vmatprep.subr.bf16.mxu0 0
      %625 = vmatpush1.bf16.msra.mxu0 0
      %626 = vmatprep.subr.bf16.mxu0 0
      %627 = vmatpush1.bf16.msra.mxu0 0
      %628 = vmatprep.subr.bf16.mxu0 0
      %629 = vmatpush1.bf16.msra.mxu0 0
      %630 = vmatprep.subr.bf16.mxu0 0
      %631 = vmatpush1.bf16.msra.mxu0 0
      %632 = vmatprep.subr.bf16.mxu0 0
      %633 = vmatpush1.bf16.msra.mxu0 0
      %634 = vmatprep.subr.bf16.mxu0 0
      %635 = vmatpush1.bf16.msra.mxu0 0
      %636 = vmatprep.subr.bf16.mxu0 0
      %637 = vmatpush1.bf16.msra.mxu0 0
      %638 = vmatprep.subr.bf16.mxu0 0
      %639 = vmatpush1.bf16.msra.mxu0 0
      %640 = vmatprep.subr.bf16.mxu0 0
      %641 = vmatpush1.bf16.msra.mxu0 0
      %642 = vmatprep.subr.bf16.mxu0 0
      %643 = vmatpush1.bf16.msra.mxu0 0
      %644 = vmatprep.subr.bf16.mxu0 0
      %645 = vmatpush1.bf16.msra.mxu0 0
      %646 = vmatprep.subr.bf16.mxu0 0
      %647 = vmatpush1.bf16.msra.mxu0 0
      %648 = vmatprep.subr.bf16.mxu0 0
      %649 = vmatpush1.bf16.msra.mxu0 0
      %650 = vmatprep.subr.bf16.mxu0 0
      %651 = vmatpush1.bf16.msra.mxu0 0
      %652 = vmatprep.mubr.bf16.mxu0 0
      %653 = vmatmul.mubr.bf16.gmra.mrb[0].mxu0 %v618
      %v654 = vpop.f32.mrb[0].mxu0
      %v655 = vadd.f32 0.0, %v654
      %v656 = vpop.f32.mrb[0].mxu0
      %v657 = vpop.f32.mrb[0].mxu0
      %v658 = vadd.f32 0.0, %v657
      %v659 = vpop.f32.mrb[0].mxu0
      %660 = vdwg.mxu0
      %v661 = vmul.f32 %v655, %v610
      %v662 = vmul.f32 %v658, %v611
      %664 = vrot.lane.b32.xlu0 %v458, 120
      %v665 = vpop.permute.xlu0 %664
      %666 = vrot.lane.b32.xlu0 %v531, 120
      %v667 = vpop.permute.xlu0 %666
      %v669 = vsel %vm539, %v665, 0
      %v672 = vsel %vm539, %v667, 0
      %674 = vmatprep.subr.bf16.mxu0 0
      %675 = vmatpush1.bf16.xpose.msra.mxu0 %v672
      %676 = vmatprep.subr.bf16.mxu0 0
      %677 = vmatpush1.bf16.xpose.msra.mxu0 0
      %678 = vmatprep.subr.bf16.mxu0 0
      %679 = vmatpush1.bf16.xpose.msra.mxu0 0
      %680 = vmatprep.subr.bf16.mxu0 0
      %681 = vmatpush1.bf16.xpose.msra.mxu0 0
      %682 = vmatprep.subr.bf16.mxu0 0
      %683 = vmatpush1.bf16.xpose.msra.mxu0 0
      %684 = vmatprep.subr.bf16.mxu0 0
      %685 = vmatpush1.bf16.xpose.msra.mxu0 0
      %686 = vmatprep.subr.bf16.mxu0 0
      %687 = vmatpush1.bf16.xpose.msra.mxu0 0
      %688 = vmatprep.subr.bf16.mxu0 0
      %689 = vmatpush1.bf16.xpose.msra.mxu0 0
      %690 = vmatprep.subr.bf16.mxu0 0
      %691 = vmatpush1.bf16.xpose.msra.mxu0 0
      %692 = vmatprep.subr.bf16.mxu0 0
      %693 = vmatpush1.bf16.xpose.msra.mxu0 0
      %694 = vmatprep.subr.bf16.mxu0 0
      %695 = vmatpush1.bf16.xpose.msra.mxu0 0
      %696 = vmatprep.subr.bf16.mxu0 0
      %697 = vmatpush1.bf16.xpose.msra.mxu0 0
      %698 = vmatprep.subr.bf16.mxu0 0
      %699 = vmatpush1.bf16.xpose.msra.mxu0 0
      %700 = vmatprep.subr.bf16.mxu0 0
      %701 = vmatpush1.bf16.xpose.msra.mxu0 0
      %702 = vmatprep.subr.bf16.mxu0 0
      %703 = vmatpush1.bf16.xpose.msra.mxu0 0
      %704 = vmatprep.subr.bf16.mxu0 0
      %705 = vmatpush1.bf16.xpose.msra.mxu0 0
      %706 = vmatprep.mubr.bf16.mxu0 0
      %707 = vmatmul.mubr.bf16.gmra.mrb[0].mxu0 %v669
      %v708 = vpop.f32.mrb[0].mxu0
      %v709 = vadd.f32 0.0, %v708
      %v710 = vpop.f32.mrb[0].mxu0
      %v711 = vpop.f32.mrb[0].mxu0
      %v712 = vadd.f32 0.0, %v711
      %v713 = vpop.f32.mrb[0].mxu0
      %714 = vdwg.mxu0
      %v715 = vmul.f32 %v709, 0.35355338
      %v716 = vmul.f32 %v712, 0.35355338
      %v717 = vsel %vm537, -1e+30, %v715
      %v718 = vsel %vm538, -1e+30, %v716
      %v719 = vsel %vm591, %v717, -inf
      %720 = vmax.xlane.f32.xlu0 %v719
      %v721 = vpop.xlane.xlu0 %720
      %v722 = vsel %vm591, %v718, -inf
      %723 = vmax.xlane.f32.xlu0 %v722
      %v724 = vpop.xlane.xlu0 %723
      %v725 = vsub.f32 %v717, %v721
      %v726 = vsub.f32 %v718, %v724
      %v727 = vmul.f32 %v725, 1.442695
      %v728 = vpow.pop %v727
      %v729 = vmul.f32 %v726, 1.442695
      %v730 = vpow.pop %v729
      %v731 = vsel %vm591, %v728, 0.0
      %732 = vadd.xlane.f32.xlu0 %v731
      %v733 = vpop.xlane.xlu0 %732
      %v734 = vsel %vm591, %v730, 0.0
      %735 = vadd.xlane.f32.xlu0 %v734
      %v736 = vpop.xlane.xlu0 %735
      %v737 = vrcp.pop %v733
      %v738 = vrcp.pop %v736
      %v739 = vpack.c.bf16 %v730, %v728
      %740 = vrot.lane.b32.xlu0 %v531, 88
      %v741 = vpop.permute.xlu0 %740
      %v744 = vsel %vm591, %v739, 0
      %746 = vmatprep.subr.bf16.mxu0 0
      %747 = vmatpush1.bf16.msra.mxu0 %v741
      %748 = vmatprep.subr.bf16.mxu0 0
      %749 = vmatpush1.bf16.msra.mxu0 0
      %750 = vmatprep.subr.bf16.mxu0 0
      %751 = vmatpush1.bf16.msra.mxu0 0
      %752 = vmatprep.subr.bf16.mxu0 0
      %753 = vmatpush1.bf16.msra.mxu0 0
      %754 = vmatprep.subr.bf16.mxu0 0
      %755 = vmatpush1.bf16.msra.mxu0 0
      %756 = vmatprep.subr.bf16.mxu0 0
      %757 = vmatpush1.bf16.msra.mxu0 0
      %758 = vmatprep.subr.bf16.mxu0 0
      %759 = vmatpush1.bf16.msra.mxu0 0
      %760 = vmatprep.subr.bf16.mxu0 0
      %761 = vmatpush1.bf16.msra.mxu0 0
      %762 = vmatprep.subr.bf16.mxu0 0
      %763 = vmatpush1.bf16.msra.mxu0 0
      %764 = vmatprep.subr.bf16.mxu0 0
      %765 = vmatpush1.bf16.msra.mxu0 0
      %766 = vmatprep.subr.bf16.mxu0 0
      %767 = vmatpush1.bf16.msra.mxu0 0
      %768 = vmatprep.subr.bf16.mxu0 0
      %769 = vmatpush1.bf16.msra.mxu0 0
      %770 = vmatprep.subr.bf16.mxu0 0
      %771 = vmatpush1.bf16.msra.mxu0 0
      %772 = vmatprep.subr.bf16.mxu0 0
      %773 = vmatpush1.bf16.msra.mxu0 0
      %774 = vmatprep.subr.bf16.mxu0 0
      %775 = vmatpush1.bf16.msra.mxu0 0
      %776 = vmatprep.subr.bf16.mxu0 0
      %777 = vmatpush1.bf16.msra.mxu0 0
      %778 = vmatprep.mubr.bf16.mxu0 0
      %779 = vmatmul.mubr.bf16.gmra.mrb[0].mxu0 %v744
      %v780 = vpop.f32.mrb[0].mxu0
      %v781 = vadd.f32 0.0, %v780
      %v782 = vpop.f32.mrb[0].mxu0
      %v783 = vpop.f32.mrb[0].mxu0
      %v784 = vadd.f32 0.0, %v783
      %v785 = vpop.f32.mrb[0].mxu0
      %786 = vdwg.mxu0
      %v787 = vmul.f32 %v781, %v737
      %v788 = vmul.f32 %v784, %v738
      %789 = vrot.lane.b32.xlu0 %v458, 112
      %v790 = vpop.permute.xlu0 %789
      %791 = vrot.lane.b32.xlu0 %v531, 112
      %v792 = vpop.permute.xlu0 %791
      %v794 = vsel %vm539, %v790, 0
      %v797 = vsel %vm539, %v792, 0
      %799 = vmatprep.subr.bf16.mxu0 0
      %800 = vmatpush1.bf16.xpose.msra.mxu0 %v797
      %801 = vmatprep.subr.bf16.mxu0 0
      %802 = vmatpush1.bf16.xpose.msra.mxu0 0
      %803 = vmatprep.subr.bf16.mxu0 0
      %804 = vmatpush1.bf16.xpose.msra.mxu0 0
      %805 = vmatprep.subr.bf16.mxu0 0
      %806 = vmatpush1.bf16.xpose.msra.mxu0 0
      %807 = vmatprep.subr.bf16.mxu0 0
      %808 = vmatpush1.bf16.xpose.msra.mxu0 0
      %809 = vmatprep.subr.bf16.mxu0 0
      %810 = vmatpush1.bf16.xpose.msra.mxu0 0
      %811 = vmatprep.subr.bf16.mxu0 0
      %812 = vmatpush1.bf16.xpose.msra.mxu0 0
      %813 = vmatprep.subr.bf16.mxu0 0
      %814 = vmatpush1.bf16.xpose.msra.mxu0 0
      %815 = vmatprep.subr.bf16.mxu0 0
      %816 = vmatpush1.bf16.xpose.msra.mxu0 0
      %817 = vmatprep.subr.bf16.mxu0 0
      %818 = vmatpush1.bf16.xpose.msra.mxu0 0
      %819 = vmatprep.subr.bf16.mxu0 0
      %820 = vmatpush1.bf16.xpose.msra.mxu0 0
      %821 = vmatprep.subr.bf16.mxu0 0
      %822 = vmatpush1.bf16.xpose.msra.mxu0 0
      %823 = vmatprep.subr.bf16.mxu0 0
      %824 = vmatpush1.bf16.xpose.msra.mxu0 0
      %825 = vmatprep.subr.bf16.mxu0 0
      %826 = vmatpush1.bf16.xpose.msra.mxu0 0
      %827 = vmatprep.subr.bf16.mxu0 0
      %828 = vmatpush1.bf16.xpose.msra.mxu0 0
      %829 = vmatprep.subr.bf16.mxu0 0
      %830 = vmatpush1.bf16.xpose.msra.mxu0 0
      %831 = vmatprep.mubr.bf16.mxu0 0
      %832 = vmatmul.mubr.bf16.gmra.mrb[0].mxu0 %v794
      %v833 = vpop.f32.mrb[0].mxu0
      %v834 = vadd.f32 0.0, %v833
      %v835 = vpop.f32.mrb[0].mxu0
      %v836 = vpop.f32.mrb[0].mxu0
      %v837 = vadd.f32 0.0, %v836
      %v838 = vpop.f32.mrb[0].mxu0
      %839 = vdwg.mxu0
      %v840 = vmul.f32 %v834, 0.35355338
      %v841 = vmul.f32 %v837, 0.35355338
      %v842 = vsel %vm537, -1e+30, %v840
      %v843 = vsel %vm538, -1e+30, %v841
      %v844 = vsel %vm591, %v842, -inf
      %845 = vmax.xlane.f32.xlu0 %v844
      %v846 = vpop.xlane.xlu0 %845
      %v847 = vsel %vm591, %v843, -inf
      %848 = vmax.xlane.f32.xlu0 %v847
      %v849 = vpop.xlane.xlu0 %848
      %v850 = vsub.f32 %v842, %v846
      %v851 = vsub.f32 %v843, %v849
      %v852 = vmul.f32 %v850, 1.442695
      %v853 = vpow.pop %v852
      %v854 = vmul.f32 %v851, 1.442695
      %v855 = vpow.pop %v854
      %v856 = vsel %vm591, %v853, 0.0
      %857 = vadd.xlane.f32.xlu0 %v856
      %v858 = vpop.xlane.xlu0 %857
      %v859 = vsel %vm591, %v855, 0.0
      %860 = vadd.xlane.f32.xlu0 %v859
      %v861 = vpop.xlane.xlu0 %860
      %v862 = vrcp.pop %v858
      %v863 = vrcp.pop %v861
      %v864 = vpack.c.bf16 %v855, %v853
      %865 = vrot.lane.b32.xlu0 %v531, 80
      %v866 = vpop.permute.xlu0 %865
      %v869 = vsel %vm591, %v864, 0
      %871 = vmatprep.subr.bf16.mxu0 0
      %872 = vmatpush1.bf16.msra.mxu0 %v866
      %873 = vmatprep.subr.bf16.mxu0 0
      %874 = vmatpush1.bf16.msra.mxu0 0
      %875 = vmatprep.subr.bf16.mxu0 0
      %876 = vmatpush1.bf16.msra.mxu0 0
      %877 = vmatprep.subr.bf16.mxu0 0
      %878 = vmatpush1.bf16.msra.mxu0 0
      %879 = vmatprep.subr.bf16.mxu0 0
      %880 = vmatpush1.bf16.msra.mxu0 0
      %881 = vmatprep.subr.bf16.mxu0 0
      %882 = vmatpush1.bf16.msra.mxu0 0
      %883 = vmatprep.subr.bf16.mxu0 0
      %884 = vmatpush1.bf16.msra.mxu0 0
      %885 = vmatprep.subr.bf16.mxu0 0
      %886 = vmatpush1.bf16.msra.mxu0 0
      %887 = vmatprep.subr.bf16.mxu0 0
      %888 = vmatpush1.bf16.msra.mxu0 0
      %889 = vmatprep.subr.bf16.mxu0 0
      %890 = vmatpush1.bf16.msra.mxu0 0
      %891 = vmatprep.subr.bf16.mxu0 0
      %892 = vmatpush1.bf16.msra.mxu0 0
      %893 = vmatprep.subr.bf16.mxu0 0
      %894 = vmatpush1.bf16.msra.mxu0 0
      %895 = vmatprep.subr.bf16.mxu0 0
      %896 = vmatpush1.bf16.msra.mxu0 0
      %897 = vmatprep.subr.bf16.mxu0 0
      %898 = vmatpush1.bf16.msra.mxu0 0
      %899 = vmatprep.subr.bf16.mxu0 0
      %900 = vmatpush1.bf16.msra.mxu0 0
      %901 = vmatprep.subr.bf16.mxu0 0
      %902 = vmatpush1.bf16.msra.mxu0 0
      %903 = vmatprep.mubr.bf16.mxu0 0
      %904 = vmatmul.mubr.bf16.gmra.mrb[0].mxu0 %v869
      %v905 = vpop.f32.mrb[0].mxu0
      %v906 = vadd.f32 0.0, %v905
      %v907 = vpop.f32.mrb[0].mxu0
      %v908 = vpop.f32.mrb[0].mxu0
      %v909 = vadd.f32 0.0, %v908
      %v910 = vpop.f32.mrb[0].mxu0
      %911 = vdwg.mxu0
      %v912 = vmul.f32 %v906, %v862
      %v913 = vmul.f32 %v909, %v863
      %914 = vrot.lane.b32.xlu0 %v458, 104
      %v915 = vpop.permute.xlu0 %914
      %916 = vrot.lane.b32.xlu0 %v531, 104
      %v917 = vpop.permute.xlu0 %916
      %v919 = vsel %vm539, %v915, 0
      %v922 = vsel %vm539, %v917, 0
      %924 = vmatprep.subr.bf16.mxu0 0
      %925 = vmatpush1.bf16.xpose.msra.mxu0 %v922
      %926 = vmatprep.subr.bf16.mxu0 0
      %927 = vmatpush1.bf16.xpose.msra.mxu0 0
      %928 = vmatprep.subr.bf16.mxu0 0
      %929 = vmatpush1.bf16.xpose.msra.mxu0 0
      %930 = vmatprep.subr.bf16.mxu0 0
      %931 = vmatpush1.bf16.xpose.msra.mxu0 0
      %932 = vmatprep.subr.bf16.mxu0 0
      %933 = vmatpush1.bf16.xpose.msra.mxu0 0
      %934 = vmatprep.subr.bf16.mxu0 0
      %935 = vmatpush1.bf16.xpose.msra.mxu0 0
      %936 = vmatprep.subr.bf16.mxu0 0
      %937 = vmatpush1.bf16.xpose.msra.mxu0 0
      %938 = vmatprep.subr.bf16.mxu0 0
      %939 = vmatpush1.bf16.xpose.msra.mxu0 0
      %940 = vmatprep.subr.bf16.mxu0 0
      %941 = vmatpush1.bf16.xpose.msra.mxu0 0
      %942 = vmatprep.subr.bf16.mxu0 0
      %943 = vmatpush1.bf16.xpose.msra.mxu0 0
      %944 = vmatprep.subr.bf16.mxu0 0
      %945 = vmatpush1.bf16.xpose.msra.mxu0 0
      %946 = vmatprep.subr.bf16.mxu0 0
      %947 = vmatpush1.bf16.xpose.msra.mxu0 0
      %948 = vmatprep.subr.bf16.mxu0 0
      %949 = vmatpush1.bf16.xpose.msra.mxu0 0
      %950 = vmatprep.subr.bf16.mxu0 0
      %951 = vmatpush1.bf16.xpose.msra.mxu0 0
      %952 = vmatprep.subr.bf16.mxu0 0
      %953 = vmatpush1.bf16.xpose.msra.mxu0 0
      %954 = vmatprep.subr.bf16.mxu0 0
      %955 = vmatpush1.bf16.xpose.msra.mxu0 0
      %956 = vmatprep.mubr.bf16.mxu0 0
      %957 = vmatmul.mubr.bf16.gmra.mrb[0].mxu0 %v919
      %v958 = vpop.f32.mrb[0].mxu0
      %v959 = vadd.f32 0.0, %v958
      %v960 = vpop.f32.mrb[0].mxu0
      %v961 = vpop.f32.mrb[0].mxu0
      %v962 = vadd.f32 0.0, %v961
      %v963 = vpop.f32.mrb[0].mxu0
      %964 = vdwg.mxu0
      %v965 = vmul.f32 %v959, 0.35355338
      %v966 = vmul.f32 %v962, 0.35355338
      %v967 = vsel %vm537, -1e+30, %v965
      %v968 = vsel %vm538, -1e+30, %v966
      %v969 = vsel %vm591, %v967, -inf
      %970 = vmax.xlane.f32.xlu0 %v969
      %v971 = vpop.xlane.xlu0 %970
      %v972 = vsel %vm591, %v968, -inf
      %973 = vmax.xlane.f32.xlu0 %v972
      %v974 = vpop.xlane.xlu0 %973
      %v975 = vsub.f32 %v967, %v971
      %v976 = vsub.f32 %v968, %v974
      %v977 = vmul.f32 %v975, 1.442695
      %v978 = vpow.pop %v977
      %v979 = vmul.f32 %v976, 1.442695
      %v980 = vpow.pop %v979
      %v981 = vsel %vm591, %v978, 0.0
      %982 = vadd.xlane.f32.xlu0 %v981
      %v983 = vpop.xlane.xlu0 %982
      %v984 = vsel %vm591, %v980, 0.0
      %985 = vadd.xlane.f32.xlu0 %v984
      %v986 = vpop.xlane.xlu0 %985
      %v987 = vrcp.pop %v983
      %v988 = vrcp.pop %v986
      %v989 = vpack.c.bf16 %v980, %v978
      %990 = vrot.lane.b32.xlu0 %v531, 72
      %v991 = vpop.permute.xlu0 %990
      %v994 = vsel %vm591, %v989, 0
      %996 = vmatprep.subr.bf16.mxu0 0
      %997 = vmatpush1.bf16.msra.mxu0 %v991
      %998 = vmatprep.subr.bf16.mxu0 0
      %999 = vmatpush1.bf16.msra.mxu0 0
      %1000 = vmatprep.subr.bf16.mxu0 0
      %1001 = vmatpush1.bf16.msra.mxu0 0
      %1002 = vmatprep.subr.bf16.mxu0 0
      %1003 = vmatpush1.bf16.msra.mxu0 0
      %1004 = vmatprep.subr.bf16.mxu0 0
      %1005 = vmatpush1.bf16.msra.mxu0 0
      %1006 = vmatprep.subr.bf16.mxu0 0
      %1007 = vmatpush1.bf16.msra.mxu0 0
      %1008 = vmatprep.subr.bf16.mxu0 0
      %1009 = vmatpush1.bf16.msra.mxu0 0
      %1010 = vmatprep.subr.bf16.mxu0 0
      %1011 = vmatpush1.bf16.msra.mxu0 0
      %1012 = vmatprep.subr.bf16.mxu0 0
      %1013 = vmatpush1.bf16.msra.mxu0 0
      %1014 = vmatprep.subr.bf16.mxu0 0
      %1015 = vmatpush1.bf16.msra.mxu0 0
      %1016 = vmatprep.subr.bf16.mxu0 0
      %1017 = vmatpush1.bf16.msra.mxu0 0
      %1018 = vmatprep.subr.bf16.mxu0 0
      %1019 = vmatpush1.bf16.msra.mxu0 0
      %1020 = vmatprep.subr.bf16.mxu0 0
      %1021 = vmatpush1.bf16.msra.mxu0 0
      %1022 = vmatprep.subr.bf16.mxu0 0
      %1023 = vmatpush1.bf16.msra.mxu0 0
      %1024 = vmatprep.subr.bf16.mxu0 0
      %1025 = vmatpush1.bf16.msra.mxu0 0
      %1026 = vmatprep.subr.bf16.mxu0 0
      %1027 = vmatpush1.bf16.msra.mxu0 0
      %1028 = vmatprep.mubr.bf16.mxu0 0
      %1029 = vmatmul.mubr.bf16.gmra.mrb[0].mxu0 %v994
      %v1030 = vpop.f32.mrb[0].mxu0
      %v1031 = vadd.f32 0.0, %v1030
      %v1032 = vpop.f32.mrb[0].mxu0
      %v1033 = vpop.f32.mrb[0].mxu0
      %v1034 = vadd.f32 0.0, %v1033
      %v1035 = vpop.f32.mrb[0].mxu0
      %1036 = vdwg.mxu0
      %v1037 = vmul.f32 %v1031, %v987
      %v1038 = vmul.f32 %v1034, %v988
      %1041 = vrot.lane.b32.xlu0 %v787, 8
      %v1042 = vpop.permute.xlu0 %1041
      %1043 = vrot.lane.b32.xlu0 %v788, 8
      %v1044 = vpop.permute.xlu0 %1043
      %1049 = vrot.lane.b32.xlu0 %v912, 16
      %v1050 = vpop.permute.xlu0 %1049
      %1051 = vrot.lane.b32.xlu0 %v913, 16
      %v1052 = vpop.permute.xlu0 %1051
      %1057 = vrot.lane.b32.xlu0 %v1037, 24
      %v1058 = vpop.permute.xlu0 %1057
      %1059 = vrot.lane.b32.xlu0 %v1038, 24
      %v1060 = vpop.permute.xlu0 %1059
      %v1063 = vsel %vm539, %v661, %v1042
      %v1064 = vsel %vm539, %v662, %v1044
      %v1065 = vsel %vm591, %v1063, %v1050
      %v1066 = vsel %vm591, %v1064, %v1052
      %vm1067 = vcmask 195584
      %v1068 = vsel %vm1067, %v1065, %v1058
      %v1069 = vsel %vm1067, %v1066, %v1060
      %v1070 = vpack.c.bf16 %v1069, %v1068
      %v1071 = vld [vmem:[%s6] sm:$0xf]
      %v1072 = vld [vmem:[%s6 + $0x4] sm:$0xf]
      %v1073 = vld [vmem:[%s6 + $0x8] sm:$0xf]
      %v1074 = vld [vmem:[%s6 + $0xc] sm:$0xf]
      %v1075 = vld [vmem:[%s7] sm:$0x1]
      %v1077 = vlaneseq
      %v1078 = vshrl.u32 %v1077, 7
      %v1079 = vsub.s32 0, %v1078
      %v1080 = vrot.slane %v1075, %v1079
      %v1086 = vunpack.c.l.b16 %v1071
      %v1087 = vunpack.c.l.b16 %v1072
      %v1088 = vunpack.c.l.b16 %v1073
      %v1089 = vunpack.c.l.b16 %v1074
      %v1090 = vpack.c.b16 %v1087, %v1086
      %v1091 = vpack.c.b16 %v1089, %v1088
      %v1095 = vsel %vm413, %v1070, 0
      %1097 = vmatprep.subr.bf16.mxu0 0
      %1098 = vmatpush1.bf16.msra.mxu0 %v1090
      %1099 = vmatprep.subr.bf16.mxu0 0
      %1100 = vmatpush1.bf16.msra.mxu0 %v1091
      %1101 = vmatprep.subr.bf16.mxu0 0
      %1102 = vmatpush1.bf16.msra.mxu0 0
      %1103 = vmatprep.subr.bf16.mxu0 0
      %1104 = vmatpush1.bf16.msra.mxu0 0
      %1105 = vmatprep.subr.bf16.mxu0 0
      %1106 = vmatpush1.bf16.msra.mxu0 0
      %1107 = vmatprep.subr.bf16.mxu0 0
      %1108 = vmatpush1.bf16.msra.mxu0 0
      %1109 = vmatprep.subr.bf16.mxu0 0
      %1110 = vmatpush1.bf16.msra.mxu0 0
      %1111 = vmatprep.subr.bf16.mxu0 0
      %1112 = vmatpush1.bf16.msra.mxu0 0
      %1113 = vmatprep.subr.bf16.mxu0 0
      %1114 = vmatpush1.bf16.msra.mxu0 0
      %1115 = vmatprep.subr.bf16.mxu0 0
      %1116 = vmatpush1.bf16.msra.mxu0 0
      %1117 = vmatprep.subr.bf16.mxu0 0
      %1118 = vmatpush1.bf16.msra.mxu0 0
      %1119 = vmatprep.subr.bf16.mxu0 0
      %1120 = vmatpush1.bf16.msra.mxu0 0
      %1121 = vmatprep.subr.bf16.mxu0 0
      %1122 = vmatpush1.bf16.msra.mxu0 0
      %1123 = vmatprep.subr.bf16.mxu0 0
      %1124 = vmatpush1.bf16.msra.mxu0 0
      %1125 = vmatprep.subr.bf16.mxu0 0
      %1126 = vmatpush1.bf16.msra.mxu0 0
      %1127 = vmatprep.subr.bf16.mxu0 0
      %1128 = vmatpush1.bf16.msra.mxu0 0
      %1129 = vmatprep.mubr.bf16.mxu0 0
      %1130 = vmatmul.mubr.bf16.gmra.mrb[0].mxu0 %v1095
      %v1131 = vpop.f32.mrb[0].mxu0
      %v1132 = vadd.f32 %v1080, %v1131
      %v1133 = vpop.f32.mrb[0].mxu0
      %v1134 = vpop.f32.mrb[0].mxu0
      %v1135 = vadd.f32 %v1080, %v1134
      %v1136 = vpop.f32.mrb[0].mxu0
      %1137 = vdwg.mxu0
      %v1138 = vunpack.c.l.bf16 %v381
      %v1139 = vunpack.c.l.bf16 %v382
      %v1140 = vadd.f32 %v1138, %v1132
      %v1141 = vadd.f32 %v1139, %v1135
      %v1142 = vld [vmem:[%s8] sm:$0x1]
      %v1143 = vld [vmem:[%s9] sm:$0x1]
      %v1144 = vsel %vm413, %v1140, 0.0
      %1145 = vadd.xlane.f32.xlu0 %v1144
      %v1146 = vpop.xlane.xlu0 %1145
      %v1147 = vsel %vm413, %v1141, 0.0
      %1148 = vadd.xlane.f32.xlu0 %v1147
      %v1149 = vpop.xlane.xlu0 %1148
      %v1150 = vrcp.pop 32.0
      %v1151 = vmul.f32 %v1146, %v1150
      %v1152 = vmul.f32 %v1149, %v1150
      %v1153 = vsub.f32 %v1140, %v1151
      %v1154 = vsub.f32 %v1141, %v1152
      %v1155 = vmul.f32 %v1153, %v1153
      %v1156 = vmul.f32 %v1154, %v1154
      %v1157 = vsel %vm413, %v1155, 0.0
      %1158 = vadd.xlane.f32.xlu0 %v1157
      %v1159 = vpop.xlane.xlu0 %1158
      %v1160 = vsel %vm413, %v1156, 0.0
      %1161 = vadd.xlane.f32.xlu0 %v1160
      %v1162 = vpop.xlane.xlu0 %1161
      %v1163 = vmul.f32 %v1159, %v1150
      %v1164 = vmul.f32 %v1162, %v1150
      %v1165 = vadd.f32 %v1163, 1e-05
      %v1166 = vadd.f32 %v1164, 1e-05
      %v1167 = vrsqrt.pop %v1165
      %v1168 = vrsqrt.pop %v1166
      %v1169 = vmul.f32 %v1153, %v1167
      %v1170 = vmul.f32 %v1154, %v1168
      %v1172 = vlaneseq
      %v1173 = vshrl.u32 %v1172, 7
      %v1174 = vsub.s32 0, %v1173
      %v1175 = vrot.slane %v1142, %v1174
      %v1177 = vmul.f32 %v1169, %v1175
      %v1178 = vmul.f32 %v1170, %v1175
      %v1180 = vlaneseq
      %v1181 = vshrl.u32 %v1180, 7
      %v1182 = vsub.s32 0, %v1181
      %v1183 = vrot.slane %v1143, %v1182
      %v1185 = vadd.f32 %v1177, %v1183
      %v1186 = vadd.f32 %v1178, %v1183
      %v1187 = vpack.c.bf16 %v1186, %v1185
      %v1189 = vunpack.c.l.b16 %v1187
      %v1190 = vunpack.c.h.b16 %v1187
      %v1191 = vpack.c.b16 %v1189, %v1189
      %v1192 = vpack.c.b16 %v1190, %v1190
      %vm1195 = vcmask 257024
      %1196 = vst.msk [vmem:[%s379] sm:$0xf] %vm1195, %v1191
      %1197 = vst.msk [vmem:[%s379 + $0x4] sm:$0xf] %vm1195, %v1192
      %p1198 = scmp.lt.s32.totalorder %s21, 1
      %s1199 = scalar_select %p1198, %s21, 1
      %s1200 = smul.addr %s1199, 2
      %s1201 = smul.addr %s1200, 4
      %s1202 = scalar_lea.vmem %s10, %s1201
      // Predicated region
      $region61: #{informer_forward.18} parent=59 // pred_check
        %p1203 = pneg %p259
      $region62: #{informer_forward.18} parent=59 // pred_check_branch
        %1205 = sbr.rel (%p1203) target = $region64
      $region63: #{informer_forward.18} parent=59 // pred_region
        _
      $region64: #{informer_forward.18} parent=59 // pred_fallthru
        _
    $region60: #{informer_forward.18} parent=5 // pred_fallthru
      _
    %p1206 = scmp.le.s32.totalorder 2, %s16
    // Predicated region
    $region65: #{informer_forward.18} parent=5 // pred_check
      %p1207 = pneg %p1206
    $region66: #{informer_forward.18} parent=5 // pred_check_branch
      %1209 = sbr.rel (%p1207) target = $region68
    $region67: #{informer_forward.18} parent=5 // pred_region
      %s1210 = ssub.s32 %s16, 2
      // Predicated region
      $region69: #{informer_forward.18} parent=67 // pred_check
        %p1211 = pneg %p265
      $region70: #{informer_forward.18} parent=67 // pred_check_branch
        %1213 = sbr.rel (%p1211) target = $region72
      $region71: #{informer_forward.18} parent=67 // pred_region
        %p1214 = scmp.lt.s32.totalorder %s22, 1
        %s1215 = scalar_select %p1214, %s22, 1
        %s1216 = smul.addr %s1215, 2
        %s1217 = smul.addr %s1216, 4
        %s1218 = scalar_lea.vmem %s10, %s1217
      $region72: #{informer_forward.18} parent=67 // pred_fallthru
        _
    $region68: #{informer_forward.18} parent=5 // pred_fallthru
      _
  $region6: #{informer_forward.18} parent=0 // loop_footer
    %s20 = sadd.s32 1, %s16
  $region7: #{informer_forward.18} parent=0 // loop_footer_branch
    %15 = sbr.rel target = $region3
  $region8: #{informer_forward.18} parent=0 // loop_exit
    _

</llo_original>
